<compile_context>
chip_gen: v7x
topology: tpu7x:2x2x1
jax: 0.10.0
libtpu: 0.0.40
codegen_flags: <defaults>
</compile_context>

<pallas_src>
import jax
import jax.numpy as jnp
from jax.experimental import pallas as pl
from jax.experimental.pallas import tpu as pltpu

EPS = 1e-5
_VMEM_LIMIT = 48 * 1024 * 1024   # leave headroom vs. v7x's 64 MiB per-TC VMEM


# ----------------------------------------------------------------------------
# Fused Pallas kernel: (im2col-matmul conv) + BatchNorm(batch stats) + ReLU
# ----------------------------------------------------------------------------
def _conv_bn_relu_kernel(x_ref, w_ref, g_ref, b_ref, o_ref):
    # x_ref: (M, K)   bf16 im2col patches, M = N*H*W, K = 9*Cin
    # w_ref: (K, Tco) bf16 conv weights (output-channel tile)
    # g_ref, b_ref: (1, Tco) f32 BN affine params
    # o_ref: (M, Tco) f32 fused conv+BN+ReLU output
    y = jnp.dot(x_ref[...], w_ref[...], preferred_element_type=jnp.float32)
    mean = jnp.mean(y, axis=0, keepdims=True)                    # (1, Tco)
    var = jnp.mean(jnp.square(y - mean), axis=0, keepdims=True)  # biased var
    y = (y - mean) * jax.lax.rsqrt(var + EPS) * g_ref[...] + b_ref[...]
    o_ref[...] = jnp.maximum(y, 0.0)


# ----------------------------------------------------------------------------
# Glue + wrapper
# ----------------------------------------------------------------------------
def _im2col_3x3(x):
    # x: (N, H, W, Cin) -> (N*H*W, 9*Cin); 3x3 window, padding=1, stride=1.
    N, H, W, Cin = x.shape
    xp = jnp.pad(x, ((0, 0), (1, 1), (1, 1), (0, 0)))
    cols = [xp[:, dy:dy + H, dx:dx + W, :]
            for dy in range(3) for dx in range(3)]
    return jnp.concatenate(cols, axis=-1).reshape(N * H * W, 9 * Cin)


def conv3x3_bn_relu(x, w, gamma, beta):
    # x: (N, H, W, Cin) f32; w: (3, 3, Cin, Cout) f32 (HWIO layout);
    # gamma/beta: (1, Cout) f32.  Conv: padding=1, no bias (as in the module);
    # BN uses training-mode batch statistics; ReLU fused.
    N, H, W, Cin = x.shape
    Cout = w.shape[-1]
    M, K = N * H * W, 9 * Cin

    patches = _im2col_3x3(x).astype(jnp.bfloat16)            # (M, K)
    wmat = w.reshape(K, Cout).astype(jnp.bfloat16)           # (K, Cout)

    tco = Cout if Cout <= 256 else 256                       # 128-multiple tile
    assert Cout % tco == 0, "Cout must be divisible by the channel tile"

    out = pl.pallas_call(
        _conv_bn_relu_kernel,
        out_shape=jax.ShapeDtypeStruct((M, Cout), jnp.float32),
        grid=(Cout // tco,),
        in_specs=[
            pl.BlockSpec((M, K), lambda c: (0, 0)),          # shared patches
            pl.BlockSpec((K, tco), lambda c: (0, c)),
            pl.BlockSpec((1, tco), lambda c: (0, c)),
            pl.BlockSpec((1, tco), lambda c: (0, c)),
        ],
        out_specs=pl.BlockSpec((M, tco), lambda c: (0, c)),
        compiler_params=pltpu.CompilerParams(
            dimension_semantics=("parallel",),
            vmem_limit_bytes=_VMEM_LIMIT),
    )(patches, wmat, gamma, beta)
    return out.reshape(N, H, W, Cout)


def double_conv(x_nhwc, p):
    y = conv3x3_bn_relu(x_nhwc, p['w1'], p['g1'], p['b1'])
    return conv3x3_bn_relu(y, p['w2'], p['g2'], p['b2'])


def double_conv_forward(x_nchw, params):
    # PyTorch-style NCHW in/out; kernels run in NHWC (channels on lanes).
    x = jnp.transpose(x_nchw, (0, 2, 3, 1))
    y = double_conv(x, params)
    return jnp.transpose(y, (0, 3, 1, 2))


# ----------------------------------------------------------------------------
# Pure-JAX f32 reference (for a sanity check)
# ----------------------------------------------------------------------------
def _ref_double_conv_forward(x_nchw, p):
    def stage(x, w, g, b):
        y = jax.lax.conv_general_dilated(
            x, w, window_strides=(1, 1), padding=((1, 1), (1, 1)),
            dimension_numbers=('NHWC', 'HWIO', 'NHWC'))
        mean = jnp.mean(y, axis=(0, 1, 2), keepdims=True)
        var = jnp.var(y, axis=(0, 1, 2), keepdims=True)
        y = ((y - mean) * jax.lax.rsqrt(var + EPS) * g.reshape(1, 1, 1, -1)
             + b.reshape(1, 1, 1, -1))
        return jnp.maximum(y, 0.0)

    x = jnp.transpose(x_nchw, (0, 2, 3, 1))
    y = stage(x, p['w1'], p['g1'], p['b1'])
    y = stage(y, p['w2'], p['g2'], p['b2'])
    return jnp.transpose(y, (0, 3, 1, 2))


# ----------------------------------------------------------------------------
# Deterministic synthetic parameters (shapes follow DoubleConv.__init__)
# ----------------------------------------------------------------------------
def init_params(key, in_dim, out_dim, mid_dim=None):
    mid_dim = mid_dim or out_dim
    ks = jax.random.split(key, 6)

    def conv_w(k, cin, cout):
        return (jax.random.normal(k, (3, 3, cin, cout), jnp.float32)
                * (2.0 / (9 * cin)) ** 0.5)

    return {
        'w1': conv_w(ks[0], in_dim, mid_dim),
        'g1': 1.0 + 0.1 * jax.random.normal(ks[1], (1, mid_dim), jnp.float32),
        'b1': 0.1 * jax.random.normal(ks[2], (1, mid_dim), jnp.float32),
        'w2': conv_w(ks[3], mid_dim, out_dim),
        'g2': 1.0 + 0.1 * jax.random.normal(ks[4], (1, out_dim), jnp.float32),
        'b2': 0.1 * jax.random.normal(ks[5], (1, out_dim), jnp.float32),
    }


if __name__ == "__main__":
    key = jax.random.PRNGKey(0)
    kx, kp = jax.random.split(key)

    # Small shapes consistent with the module: N=2, in_dim=4, 16x16 spatial,
    # DoubleConv(4, 64, mid_dim=32).
    x = jax.random.normal(kx, (2, 4, 16, 16), jnp.float32)      # NCHW
    params = init_params(kp, in_dim=4, out_dim=64, mid_dim=32)

    fwd = jax.jit(double_conv_forward)
    out = fwd(x, params)
    jax.block_until_ready(out)

    assert out.shape == (2, 64, 16, 16), out.shape
    assert out.dtype == jnp.float32
    assert bool(jnp.all(jnp.isfinite(out)))
    assert bool(jnp.all(out >= 0.0))          # ReLU output is non-negative

    # Loose tolerance: kernel matmuls run in bf16 (f32 accumulation); BN
    # renormalization keeps outputs O(1), so bf16 error stays ~1e-2.
    ref = _ref_double_conv_forward(x, params)
    err = float(jnp.max(jnp.abs(out - ref)))
    assert err < 0.2, f"max |pallas - ref| = {err}"

    print("KERNEL_OK")
</pallas_src>

<mosaic_0001>
module attributes {stable_mosaic.version = 11 : i64} {
  func.func @_conv_bn_relu_kernel(%arg0: i32, %arg1: memref<512x36xbf16, #tpu.memory_space<vmem>>, %arg2: memref<36x32xbf16, #tpu.memory_space<vmem>>, %arg3: memref<1x32xf32, #tpu.memory_space<vmem>>, %arg4: memref<1x32xf32, #tpu.memory_space<vmem>>, %arg5: memref<512x32xf32, #tpu.memory_space<vmem>>) attributes {dimension_semantics = [#tpu.dimension_semantics<parallel>], iteration_bounds = array<i64: 1>, scalar_prefetch = 0 : i64, scratch_operands = 0 : i64, tpu.core_type = #tpu.core_type<tc>, window_params = [{pipeline_mode = #tpu.pipeline_mode<synchronous>, transform_indices = @transform_0, window_bounds = array<i64: 512, 36>}, {transform_indices = @transform_1, window_bounds = array<i64: 36, 32>}, {transform_indices = @transform_2, window_bounds = array<i64: 1, 32>}, {transform_indices = @transform_3, window_bounds = array<i64: 1, 32>}, {transform_indices = @transform_4, window_bounds = array<i64: 512, 32>}]} {
    %c0 = arith.constant 0 : index
    %c0_0 = arith.constant 0 : index
    %0 = vector.load %arg1[%c0, %c0_0] : memref<512x36xbf16, #tpu.memory_space<vmem>>, vector<512x36xbf16>
    %c0_1 = arith.constant 0 : index
    %c0_2 = arith.constant 0 : index
    %1 = vector.load %arg2[%c0_1, %c0_2] : memref<36x32xbf16, #tpu.memory_space<vmem>>, vector<36x32xbf16>
    %cst = arith.constant dense<0.000000e+00> : vector<512x32xf32>
    %2 = tpu.matmul %0, %1, %cst {dimension_numbers = #tpu.dot_dimension_numbers<[1], [0], [0], [1], [0, 0, 1, 1], [], []>} : vector<512x36xbf16>, vector<36x32xbf16>, vector<512x32xf32> -> vector<512x32xf32>
    %cst_3 = arith.constant dense<0.000000e+00> : vector<32xf32>
    %3 = vector.multi_reduction <add>, %2, %cst_3 [0] : vector<512x32xf32> to vector<32xf32>
    %4 = vector.shape_cast %3 : vector<32xf32> to vector<1x32xf32>
    %cst_4 = arith.constant 5.120000e+02 : f32
    %5 = vector.broadcast %cst_4 : f32 to vector<1x32xf32>
    %6 = arith.divf %4, %5 : vector<1x32xf32>
    %7 = vector.broadcast %6 : vector<1x32xf32> to vector<512x32xf32>
    %8 = arith.subf %2, %7 : vector<512x32xf32>
    %9 = arith.mulf %8, %8 : vector<512x32xf32>
    %cst_5 = arith.constant dense<0.000000e+00> : vector<32xf32>
    %10 = vector.multi_reduction <add>, %9, %cst_5 [0] : vector<512x32xf32> to vector<32xf32>
    %11 = vector.shape_cast %10 : vector<32xf32> to vector<1x32xf32>
    %cst_6 = arith.constant 5.120000e+02 : f32
    %12 = vector.broadcast %cst_6 : f32 to vector<1x32xf32>
    %13 = arith.divf %11, %12 : vector<1x32xf32>
    %14 = vector.broadcast %6 : vector<1x32xf32> to vector<512x32xf32>
    %15 = arith.subf %2, %14 : vector<512x32xf32>
    %cst_7 = arith.constant 9.99999974E-6 : f32
    %16 = vector.broadcast %cst_7 : f32 to vector<1x32xf32>
    %17 = arith.addf %13, %16 : vector<1x32xf32>
    %18 = math.rsqrt %17 : vector<1x32xf32>
    %19 = vector.broadcast %18 : vector<1x32xf32> to vector<512x32xf32>
    %20 = arith.mulf %15, %19 : vector<512x32xf32>
    %c0_8 = arith.constant 0 : index
    %c0_9 = arith.constant 0 : index
    %21 = vector.load %arg3[%c0_8, %c0_9] : memref<1x32xf32, #tpu.memory_space<vmem>>, vector<1x32xf32>
    %22 = vector.broadcast %21 : vector<1x32xf32> to vector<512x32xf32>
    %23 = arith.mulf %20, %22 : vector<512x32xf32>
    %c0_10 = arith.constant 0 : index
    %c0_11 = arith.constant 0 : index
    %24 = vector.load %arg4[%c0_10, %c0_11] : memref<1x32xf32, #tpu.memory_space<vmem>>, vector<1x32xf32>
    %25 = vector.broadcast %24 : vector<1x32xf32> to vector<512x32xf32>
    %26 = arith.addf %23, %25 : vector<512x32xf32>
    %cst_12 = arith.constant 0.000000e+00 : f32
    %27 = vector.broadcast %cst_12 : f32 to vector<512x32xf32>
    %28 = arith.maximumf %26, %27 : vector<512x32xf32>
    %c0_13 = arith.constant 0 : index
    %c0_14 = arith.constant 0 : index
    %29 = vector.load %arg5[%c0_13, %c0_14] : memref<512x32xf32, #tpu.memory_space<vmem>>, vector<512x32xf32>
    tpu.vector_store %arg5[%c0_13, %c0_14], %28 {strides = array<i32>} : memref<512x32xf32, #tpu.memory_space<vmem>>, vector<512x32xf32>,
    return
  }
  func.func @transform_0(%arg0: i32) -> (i32, i32) {
    %c0_i32 = arith.constant 0 : i32
    %c0_i32_0 = arith.constant 0 : i32
    %c0_i32_1 = arith.constant 0 : i32
    return %c0_i32, %c0_i32_0 : i32, i32
  }
  func.func @transform_1(%arg0: i32) -> (i32, i32) {
    %c0_i32 = arith.constant 0 : i32
    %c0_i32_0 = arith.constant 0 : i32
    return %c0_i32, %arg0 : i32, i32
  }
  func.func @transform_2(%arg0: i32) -> (i32, i32) {
    %c0_i32 = arith.constant 0 : i32
    %c0_i32_0 = arith.constant 0 : i32
    return %c0_i32, %arg0 : i32, i32
  }
  func.func @transform_3(%arg0: i32) -> (i32, i32) {
    %c0_i32 = arith.constant 0 : i32
    %c0_i32_0 = arith.constant 0 : i32
    return %c0_i32, %arg0 : i32, i32
  }
  func.func @transform_4(%arg0: i32) -> (i32, i32) {
    %c0_i32 = arith.constant 0 : i32
    %c0_i32_0 = arith.constant 0 : i32
    return %c0_i32, %arg0 : i32, i32
  }
}

module attributes {stable_mosaic.version = 11 : i64} {
  func.func @_conv_bn_relu_kernel(%arg0: i32, %arg1: memref<512x288xbf16, #tpu.memory_space<vmem>>, %arg2: memref<288x64xbf16, #tpu.memory_space<vmem>>, %arg3: memref<1x64xf32, #tpu.memory_space<vmem>>, %arg4: memref<1x64xf32, #tpu.memory_space<vmem>>, %arg5: memref<512x64xf32, #tpu.memory_space<vmem>>) attributes {dimension_semantics = [#tpu.dimension_semantics<parallel>], iteration_bounds = array<i64: 1>, scalar_prefetch = 0 : i64, scratch_operands = 0 : i64, tpu.core_type = #tpu.core_type<tc>, window_params = [{pipeline_mode = #tpu.pipeline_mode<synchronous>, transform_indices = @transform_0, window_bounds = array<i64: 512, 288>}, {transform_indices = @transform_1, window_bounds = array<i64: 288, 64>}, {transform_indices = @transform_2, window_bounds = array<i64: 1, 64>}, {transform_indices = @transform_3, window_bounds = array<i64: 1, 64>}, {transform_indices = @transform_4, window_bounds = array<i64: 512, 64>}]} {
    %c0 = arith.constant 0 : index
    %c0_0 = arith.constant 0 : index
    %0 = vector.load %arg1[%c0, %c0_0] : memref<512x288xbf16, #tpu.memory_space<vmem>>, vector<512x288xbf16>
    %c0_1 = arith.constant 0 : index
    %c0_2 = arith.constant 0 : index
    %1 = vector.load %arg2[%c0_1, %c0_2] : memref<288x64xbf16, #tpu.memory_space<vmem>>, vector<288x64xbf16>
    %cst = arith.constant dense<0.000000e+00> : vector<512x64xf32>
    %2 = tpu.matmul %0, %1, %cst {dimension_numbers = #tpu.dot_dimension_numbers<[1], [0], [0], [1], [0, 0, 1, 1], [], []>} : vector<512x288xbf16>, vector<288x64xbf16>, vector<512x64xf32> -> vector<512x64xf32>
    %cst_3 = arith.constant dense<0.000000e+00> : vector<64xf32>
    %3 = vector.multi_reduction <add>, %2, %cst_3 [0] : vector<512x64xf32> to vector<64xf32>
    %4 = vector.shape_cast %3 : vector<64xf32> to vector<1x64xf32>
    %cst_4 = arith.constant 5.120000e+02 : f32
    %5 = vector.broadcast %cst_4 : f32 to vector<1x64xf32>
    %6 = arith.divf %4, %5 : vector<1x64xf32>
    %7 = vector.broadcast %6 : vector<1x64xf32> to vector<512x64xf32>
    %8 = arith.subf %2, %7 : vector<512x64xf32>
    %9 = arith.mulf %8, %8 : vector<512x64xf32>
    %cst_5 = arith.constant dense<0.000000e+00> : vector<64xf32>
    %10 = vector.multi_reduction <add>, %9, %cst_5 [0] : vector<512x64xf32> to vector<64xf32>
    %11 = vector.shape_cast %10 : vector<64xf32> to vector<1x64xf32>
    %cst_6 = arith.constant 5.120000e+02 : f32
    %12 = vector.broadcast %cst_6 : f32 to vector<1x64xf32>
    %13 = arith.divf %11, %12 : vector<1x64xf32>
    %14 = vector.broadcast %6 : vector<1x64xf32> to vector<512x64xf32>
    %15 = arith.subf %2, %14 : vector<512x64xf32>
    %cst_7 = arith.constant 9.99999974E-6 : f32
    %16 = vector.broadcast %cst_7 : f32 to vector<1x64xf32>
    %17 = arith.addf %13, %16 : vector<1x64xf32>
    %18 = math.rsqrt %17 : vector<1x64xf32>
    %19 = vector.broadcast %18 : vector<1x64xf32> to vector<512x64xf32>
    %20 = arith.mulf %15, %19 : vector<512x64xf32>
    %c0_8 = arith.constant 0 : index
    %c0_9 = arith.constant 0 : index
    %21 = vector.load %arg3[%c0_8, %c0_9] : memref<1x64xf32, #tpu.memory_space<vmem>>, vector<1x64xf32>
    %22 = vector.broadcast %21 : vector<1x64xf32> to vector<512x64xf32>
    %23 = arith.mulf %20, %22 : vector<512x64xf32>
    %c0_10 = arith.constant 0 : index
    %c0_11 = arith.constant 0 : index
    %24 = vector.load %arg4[%c0_10, %c0_11] : memref<1x64xf32, #tpu.memory_space<vmem>>, vector<1x64xf32>
    %25 = vector.broadcast %24 : vector<1x64xf32> to vector<512x64xf32>
    %26 = arith.addf %23, %25 : vector<512x64xf32>
    %cst_12 = arith.constant 0.000000e+00 : f32
    %27 = vector.broadcast %cst_12 : f32 to vector<512x64xf32>
    %28 = arith.maximumf %26, %27 : vector<512x64xf32>
    %c0_13 = arith.constant 0 : index
    %c0_14 = arith.constant 0 : index
    %29 = vector.load %arg5[%c0_13, %c0_14] : memref<512x64xf32, #tpu.memory_space<vmem>>, vector<512x64xf32>
    tpu.vector_store %arg5[%c0_13, %c0_14], %28 {strides = array<i32>} : memref<512x64xf32, #tpu.memory_space<vmem>>, vector<512x64xf32>,
    return
  }
  func.func @transform_0(%arg0: i32) -> (i32, i32) {
    %c0_i32 = arith.constant 0 : i32
    %c0_i32_0 = arith.constant 0 : i32
    %c0_i32_1 = arith.constant 0 : i32
    return %c0_i32, %c0_i32_0 : i32, i32
  }
  func.func @transform_1(%arg0: i32) -> (i32, i32) {
    %c0_i32 = arith.constant 0 : i32
    %c0_i32_0 = arith.constant 0 : i32
    return %c0_i32, %arg0 : i32, i32
  }
  func.func @transform_2(%arg0: i32) -> (i32, i32) {
    %c0_i32 = arith.constant 0 : i32
    %c0_i32_0 = arith.constant 0 : i32
    return %c0_i32, %arg0 : i32, i32
  }
  func.func @transform_3(%arg0: i32) -> (i32, i32) {
    %c0_i32 = arith.constant 0 : i32
    %c0_i32_0 = arith.constant 0 : i32
    return %c0_i32, %arg0 : i32, i32
  }
  func.func @transform_4(%arg0: i32) -> (i32, i32) {
    %c0_i32 = arith.constant 0 : i32
    %c0_i32_0 = arith.constant 0 : i32
    return %c0_i32, %arg0 : i32, i32
  }
}

</mosaic_0001>

<llo_original>
// kernel: double_conv_forward.2
$region0: #{double_conv_forward.2}
  #allocation0 [shape = 'u32[]', space=smem, size = 0x4, offset = 0x4, fixed_abs, tag = 'smem constant byte address 0x4 - core index']
  #allocation1 [shape = 'u32[144,128]{1,0:T(1,128)}', space=vmem, size = 0x12000, scoped, tag = 'internal scratch']
  %s0 = inlined_call_operand.vmem [shape: bf16[512,36], index: 0, kind: input, shape index: {}]
  %s1 = inlined_call_operand.vmem [shape: bf16[36,32], index: 1, kind: input, shape index: {}]
  %s2 = inlined_call_operand.vmem [shape: f32[1,32], index: 2, kind: input, shape index: {}]
  %s3 = inlined_call_operand.vmem [shape: f32[1,32], index: 3, kind: input, shape index: {}]
  %s4 = inlined_call_operand.vmem [shape: f32[512,32], index: 4, kind: output, shape index: {}]
  %s5 = sld [smem:[#allocation0]]
  $region26: #{double_conv_forward.2} parent=0
    _
  %s7 = ssub.s32 1, %s5
  %s8 = scalar_select 0, %s7, %s5
  // Predicated region
  $region2: #{double_conv_forward.2} parent=0 // pred_check
    _
  $region3: #{double_conv_forward.2} parent=0 // pred_check_branch
    %10 = sbr.rel (0) target = $region5
  $region4: #{double_conv_forward.2} parent=0 // pred_region
    _
  $region5: #{double_conv_forward.2} parent=0 // pred_fallthru
    _
  // Predicated region
  $region6: #{double_conv_forward.2} parent=0 // pred_check
    _
  $region7: #{double_conv_forward.2} parent=0 // pred_check_branch
    %12 = sbr.rel (0) target = $region9
  $region8: #{double_conv_forward.2} parent=0 // pred_region
    _
  $region9: #{double_conv_forward.2} parent=0 // pred_fallthru
    _
  // Predicated region
  $region10: #{double_conv_forward.2} parent=0 // pred_check
    _
  $region11: #{double_conv_forward.2} parent=0 // pred_check_branch
    %14 = sbr.rel (0) target = $region13
  $region12: #{double_conv_forward.2} parent=0 // pred_region
    _
  $region13: #{double_conv_forward.2} parent=0 // pred_fallthru
    _
  // Predicated region
  $region14: #{double_conv_forward.2} parent=0 // pred_check
    _
  $region15: #{double_conv_forward.2} parent=0 // pred_check_branch
    %16 = sbr.rel (0) target = $region17
  $region16: #{double_conv_forward.2} parent=0 // pred_region
    _
  $region17: #{double_conv_forward.2} parent=0 // pred_fallthru
    _
  %v18 = vld [vmem:[%s0] sm:$0xf]
  %v19 = vld [vmem:[%s0 + $0x4] sm:$0xf]
  %v20 = vld [vmem:[%s0 + $0x8] sm:$0xf]
  %v21 = vld [vmem:[%s0 + $0xc] sm:$0xf]
  %v22 = vld [vmem:[%s0 + $0x10] sm:$0xf]
  %v23 = vld [vmem:[%s0 + $0x14] sm:$0xf]
  %v24 = vld [vmem:[%s0 + $0x18] sm:$0xf]
  %v25 = vld [vmem:[%s0 + $0x1c] sm:$0xf]
  %v26 = vld [vmem:[%s0 + $0x20] sm:$0xf]
  %v27 = vld [vmem:[%s0 + $0x24] sm:$0xf]
  %v28 = vld [vmem:[%s0 + $0x28] sm:$0xf]
  %v29 = vld [vmem:[%s0 + $0x2c] sm:$0xf]
  %v30 = vld [vmem:[%s0 + $0x30] sm:$0xf]
  %v31 = vld [vmem:[%s0 + $0x34] sm:$0xf]
  %v32 = vld [vmem:[%s0 + $0x38] sm:$0xf]
  %v33 = vld [vmem:[%s0 + $0x3c] sm:$0xf]
  %v34 = vld [vmem:[%s0 + $0x40] sm:$0xf]
  %v35 = vld [vmem:[%s0 + $0x44] sm:$0xf]
  %v36 = vld [vmem:[%s0 + $0x48] sm:$0xf]
  %v37 = vld [vmem:[%s0 + $0x4c] sm:$0xf]
  %v38 = vld [vmem:[%s0 + $0x50] sm:$0xf]
  %v39 = vld [vmem:[%s0 + $0x54] sm:$0xf]
  %v40 = vld [vmem:[%s0 + $0x58] sm:$0xf]
  %v41 = vld [vmem:[%s0 + $0x5c] sm:$0xf]
  %v42 = vld [vmem:[%s0 + $0x60] sm:$0xf]
  %v43 = vld [vmem:[%s0 + $0x64] sm:$0xf]
  %v44 = vld [vmem:[%s0 + $0x68] sm:$0xf]
  %v45 = vld [vmem:[%s0 + $0x6c] sm:$0xf]
  %v46 = vld [vmem:[%s0 + $0x70] sm:$0xf]
  %v47 = vld [vmem:[%s0 + $0x74] sm:$0xf]
  %v48 = vld [vmem:[%s0 + $0x78] sm:$0xf]
  %v49 = vld [vmem:[%s0 + $0x7c] sm:$0xf]
  %v50 = vld [vmem:[%s0 + $0x80] sm:$0xf]
  %v51 = vld [vmem:[%s0 + $0x84] sm:$0xf]
  %v52 = vld [vmem:[%s0 + $0x88] sm:$0xf]
  %v53 = vld [vmem:[%s0 + $0x8c] sm:$0xf]
  %v54 = vld [vmem:[%s0 + $0x90] sm:$0xf]
  %v55 = vld [vmem:[%s0 + $0x94] sm:$0xf]
  %v56 = vld [vmem:[%s0 + $0x98] sm:$0xf]
  %v57 = vld [vmem:[%s0 + $0x9c] sm:$0xf]
  %v58 = vld [vmem:[%s0 + $0xa0] sm:$0xf]
  %v59 = vld [vmem:[%s0 + $0xa4] sm:$0xf]
  %v60 = vld [vmem:[%s0 + $0xa8] sm:$0xf]
  %v61 = vld [vmem:[%s0 + $0xac] sm:$0xf]
  %v62 = vld [vmem:[%s0 + $0xb0] sm:$0xf]
  %v63 = vld [vmem:[%s0 + $0xb4] sm:$0xf]
  %v64 = vld [vmem:[%s0 + $0xb8] sm:$0xf]
  %v65 = vld [vmem:[%s0 + $0xbc] sm:$0xf]
  %v66 = vld [vmem:[%s0 + $0xc0] sm:$0xf]
  %v67 = vld [vmem:[%s0 + $0xc4] sm:$0xf]
  %v68 = vld [vmem:[%s0 + $0xc8] sm:$0xf]
  %v69 = vld [vmem:[%s0 + $0xcc] sm:$0xf]
  %v70 = vld [vmem:[%s0 + $0xd0] sm:$0xf]
  %v71 = vld [vmem:[%s0 + $0xd4] sm:$0xf]
  %v72 = vld [vmem:[%s0 + $0xd8] sm:$0xf]
  %v73 = vld [vmem:[%s0 + $0xdc] sm:$0xf]
  %v74 = vld [vmem:[%s0 + $0xe0] sm:$0xf]
  %v75 = vld [vmem:[%s0 + $0xe4] sm:$0xf]
  %v76 = vld [vmem:[%s0 + $0xe8] sm:$0xf]
  %v77 = vld [vmem:[%s0 + $0xec] sm:$0xf]
  %v78 = vld [vmem:[%s0 + $0xf0] sm:$0xf]
  %v79 = vld [vmem:[%s0 + $0xf4] sm:$0xf]
  %v80 = vld [vmem:[%s0 + $0xf8] sm:$0xf]
  %v81 = vld [vmem:[%s0 + $0xfc] sm:$0xf]
  %v82 = vld [vmem:[%s1] sm:$0xf]
  %v83 = vld [vmem:[%s1 + $0x4] sm:$0xf]
  %v84 = vld [vmem:[%s1 + $0x8] sm:$0xf]
  %v85 = vld [vmem:[%s1 + $0xc] sm:$0xf]
  %v86 = vld [vmem:[%s1 + $0x10] sm:$0x3]
  %v151 = vunpack.c.l.b16 %v18
  %v152 = vunpack.c.l.b16 %v19
  %v153 = vunpack.c.l.b16 %v20
  %v154 = vunpack.c.l.b16 %v21
  %v155 = vunpack.c.l.b16 %v22
  %v156 = vunpack.c.l.b16 %v23
  %v157 = vunpack.c.l.b16 %v24
  %v158 = vunpack.c.l.b16 %v25
  %v159 = vunpack.c.l.b16 %v26
  %v160 = vunpack.c.l.b16 %v27
  %v161 = vunpack.c.l.b16 %v28
  %v162 = vunpack.c.l.b16 %v29
  %v163 = vunpack.c.l.b16 %v30
  %v164 = vunpack.c.l.b16 %v31
  %v165 = vunpack.c.l.b16 %v32
  %v166 = vunpack.c.l.b16 %v33
  %v167 = vunpack.c.l.b16 %v34
  %v168 = vunpack.c.l.b16 %v35
  %v169 = vunpack.c.l.b16 %v36
  %v170 = vunpack.c.l.b16 %v37
  %v171 = vunpack.c.l.b16 %v38
  %v172 = vunpack.c.l.b16 %v39
  %v173 = vunpack.c.l.b16 %v40
  %v174 = vunpack.c.l.b16 %v41
  %v175 = vunpack.c.l.b16 %v42
  %v176 = vunpack.c.l.b16 %v43
  %v177 = vunpack.c.l.b16 %v44
  %v178 = vunpack.c.l.b16 %v45
  %v179 = vunpack.c.l.b16 %v46
  %v180 = vunpack.c.l.b16 %v47
  %v181 = vunpack.c.l.b16 %v48
  %v182 = vunpack.c.l.b16 %v49
  %v183 = vunpack.c.l.b16 %v50
  %v184 = vunpack.c.l.b16 %v51
  %v185 = vunpack.c.l.b16 %v52
  %v186 = vunpack.c.l.b16 %v53
  %v187 = vunpack.c.l.b16 %v54
  %v188 = vunpack.c.l.b16 %v55
  %v189 = vunpack.c.l.b16 %v56
  %v190 = vunpack.c.l.b16 %v57
  %v191 = vunpack.c.l.b16 %v58
  %v192 = vunpack.c.l.b16 %v59
  %v193 = vunpack.c.l.b16 %v60
  %v194 = vunpack.c.l.b16 %v61
  %v195 = vunpack.c.l.b16 %v62
  %v196 = vunpack.c.l.b16 %v63
  %v197 = vunpack.c.l.b16 %v64
  %v198 = vunpack.c.l.b16 %v65
  %v199 = vunpack.c.l.b16 %v66
  %v200 = vunpack.c.l.b16 %v67
  %v201 = vunpack.c.l.b16 %v68
  %v202 = vunpack.c.l.b16 %v69
  %v203 = vunpack.c.l.b16 %v70
  %v204 = vunpack.c.l.b16 %v71
  %v205 = vunpack.c.l.b16 %v72
  %v206 = vunpack.c.l.b16 %v73
  %v207 = vunpack.c.l.b16 %v74
  %v208 = vunpack.c.l.b16 %v75
  %v209 = vunpack.c.l.b16 %v76
  %v210 = vunpack.c.l.b16 %v77
  %v211 = vunpack.c.l.b16 %v78
  %v212 = vunpack.c.l.b16 %v79
  %v213 = vunpack.c.l.b16 %v80
  %v214 = vunpack.c.l.b16 %v81
  %v215 = vpack.c.b16 %v152, %v151
  %v216 = vpack.c.b16 %v154, %v153
  %v217 = vpack.c.b16 %v156, %v155
  %v218 = vpack.c.b16 %v158, %v157
  %v219 = vpack.c.b16 %v160, %v159
  %v220 = vpack.c.b16 %v162, %v161
  %v221 = vpack.c.b16 %v164, %v163
  %v222 = vpack.c.b16 %v166, %v165
  %v223 = vpack.c.b16 %v168, %v167
  %v224 = vpack.c.b16 %v170, %v169
  %v225 = vpack.c.b16 %v172, %v171
  %v226 = vpack.c.b16 %v174, %v173
  %v227 = vpack.c.b16 %v176, %v175
  %v228 = vpack.c.b16 %v178, %v177
  %v229 = vpack.c.b16 %v180, %v179
  %v230 = vpack.c.b16 %v182, %v181
  %v231 = vpack.c.b16 %v184, %v183
  %v232 = vpack.c.b16 %v186, %v185
  %v233 = vpack.c.b16 %v188, %v187
  %v234 = vpack.c.b16 %v190, %v189
  %v235 = vpack.c.b16 %v192, %v191
  %v236 = vpack.c.b16 %v194, %v193
  %v237 = vpack.c.b16 %v196, %v195
  %v238 = vpack.c.b16 %v198, %v197
  %v239 = vpack.c.b16 %v200, %v199
  %v240 = vpack.c.b16 %v202, %v201
  %v241 = vpack.c.b16 %v204, %v203
  %v242 = vpack.c.b16 %v206, %v205
  %v243 = vpack.c.b16 %v208, %v207
  %v244 = vpack.c.b16 %v210, %v209
  %v245 = vpack.c.b16 %v212, %v211
  %v246 = vpack.c.b16 %v214, %v213
  %v252 = vunpack.c.l.b16 %v82
  %v253 = vunpack.c.l.b16 %v83
  %v254 = vunpack.c.l.b16 %v84
  %v255 = vunpack.c.l.b16 %v85
  %v256 = vunpack.c.l.b16 %v86
  %v257 = vpack.c.b16 %v253, %v252
  %v258 = vpack.c.b16 %v255, %v254
  %v259 = vpack.c.b16 %v256, %v256
  %vm262 = vcmask 293888
  %v264 = vsel %vm262, %v215, 0
  %v267 = vsel %vm262, %v216, 0
  %v270 = vsel %vm262, %v217, 0
  %v273 = vsel %vm262, %v218, 0
  %v276 = vsel %vm262, %v219, 0
  %v279 = vsel %vm262, %v220, 0
  %v282 = vsel %vm262, %v221, 0
  %v285 = vsel %vm262, %v222, 0
  %v288 = vsel %vm262, %v223, 0
  %v291 = vsel %vm262, %v224, 0
  %v294 = vsel %vm262, %v225, 0
  %v297 = vsel %vm262, %v226, 0
  %v300 = vsel %vm262, %v227, 0
  %v303 = vsel %vm262, %v228, 0
  %v306 = vsel %vm262, %v229, 0
  %v309 = vsel %vm262, %v230, 0
  %v312 = vsel %vm262, %v231, 0
  %v315 = vsel %vm262, %v232, 0
  %v318 = vsel %vm262, %v233, 0
  %v321 = vsel %vm262, %v234, 0
  %v324 = vsel %vm262, %v235, 0
  %v327 = vsel %vm262, %v236, 0
  %v330 = vsel %vm262, %v237, 0
  %v333 = vsel %vm262, %v238, 0
  %v336 = vsel %vm262, %v239, 0
  %v339 = vsel %vm262, %v240, 0
  %v342 = vsel %vm262, %v241, 0
  %v345 = vsel %vm262, %v242, 0
  %v348 = vsel %vm262, %v243, 0
  %v351 = vsel %vm262, %v244, 0
  %v354 = vsel %vm262, %v245, 0
  %v357 = vsel %vm262, %v246, 0
  %vm359 = vcmask 1041408
  %v361 = vsel %vm359, %v259, 0
  %363 = vmatprep.subr.bf16.mxu0 0
  %364 = vmatpush1.bf16.msra.mxu0 %v257
  %365 = vmatprep.subr.bf16.mxu0 0
  %366 = vmatpush1.bf16.msra.mxu0 %v258
  %367 = vmatprep.subr.bf16.mxu0 0
  %368 = vmatpush1.bf16.msra.mxu0 %v361
  %369 = vmatprep.subr.bf16.mxu0 0
  %370 = vmatpush1.bf16.msra.mxu0 0
  %371 = vmatprep.subr.bf16.mxu0 0
  %372 = vmatpush1.bf16.msra.mxu0 0
  %373 = vmatprep.subr.bf16.mxu0 0
  %374 = vmatpush1.bf16.msra.mxu0 0
  %375 = vmatprep.subr.bf16.mxu0 0
  %376 = vmatpush1.bf16.msra.mxu0 0
  %377 = vmatprep.subr.bf16.mxu0 0
  %378 = vmatpush1.bf16.msra.mxu0 0
  %379 = vmatprep.subr.bf16.mxu0 0
  %380 = vmatpush1.bf16.msra.mxu0 0
  %381 = vmatprep.subr.bf16.mxu0 0
  %382 = vmatpush1.bf16.msra.mxu0 0
  %383 = vmatprep.subr.bf16.mxu0 0
  %384 = vmatpush1.bf16.msra.mxu0 0
  %385 = vmatprep.subr.bf16.mxu0 0
  %386 = vmatpush1.bf16.msra.mxu0 0
  %387 = vmatprep.subr.bf16.mxu0 0
  %388 = vmatpush1.bf16.msra.mxu0 0
  %389 = vmatprep.subr.bf16.mxu0 0
  %390 = vmatpush1.bf16.msra.mxu0 0
  %391 = vmatprep.subr.bf16.mxu0 0
  %392 = vmatpush1.bf16.msra.mxu0 0
  %393 = vmatprep.subr.bf16.mxu0 0
  %394 = vmatpush1.bf16.msra.mxu0 0
  %395 = vmatprep.mubr.bf16.mxu0 0
  %396 = vmatmul.mubr.bf16.gmra.mrb[0].mxu0 %v264
  %v397 = vpop.f32.mrb[0].mxu0
  %v398 = vadd.f32 0.0, %v397
  %v399 = vpop.f32.mrb[0].mxu0
  %v400 = vpop.f32.mrb[0].mxu0
  %v401 = vadd.f32 0.0, %v400
  %v402 = vpop.f32.mrb[0].mxu0
  %403 = vmatprep.mubr.bf16.mxu0 0
  %404 = vmatmul.mubr.bf16.gmra.mrb[0].mxu0 %v267
  %v405 = vpop.f32.mrb[0].mxu0
  %v406 = vadd.f32 0.0, %v405
  %v407 = vpop.f32.mrb[0].mxu0
  %v408 = vpop.f32.mrb[0].mxu0
  %v409 = vadd.f32 0.0, %v408
  %v410 = vpop.f32.mrb[0].mxu0
  %411 = vmatprep.mubr.bf16.mxu0 0
  %412 = vmatmul.mubr.bf16.gmra.mrb[0].mxu0 %v270
  %v413 = vpop.f32.mrb[0].mxu0
  %v414 = vadd.f32 0.0, %v413
  %v415 = vpop.f32.mrb[0].mxu0
  %v416 = vpop.f32.mrb[0].mxu0
  %v417 = vadd.f32 0.0, %v416
  %v418 = vpop.f32.mrb[0].mxu0
  %419 = vmatprep.mubr.bf16.mxu0 0
  %420 = vmatmul.mubr.bf16.gmra.mrb[0].mxu0 %v273
  %v421 = vpop.f32.mrb[0].mxu0
  %v422 = vadd.f32 0.0, %v421
  %v423 = vpop.f32.mrb[0].mxu0
  %v424 = vpop.f32.mrb[0].mxu0
  %v425 = vadd.f32 0.0, %v424
  %v426 = vpop.f32.mrb[0].mxu0
  %427 = vmatprep.mubr.bf16.mxu0 0
  %428 = vmatmul.mubr.bf16.gmra.mrb[0].mxu0 %v276
  %v429 = vpop.f32.mrb[0].mxu0
  %v430 = vadd.f32 0.0, %v429
  %v431 = vpop.f32.mrb[0].mxu0
  %v432 = vpop.f32.mrb[0].mxu0
  %v433 = vadd.f32 0.0, %v432
  %v434 = vpop.f32.mrb[0].mxu0
  %435 = vmatprep.mubr.bf16.mxu0 0
  %436 = vmatmul.mubr.bf16.gmra.mrb[0].mxu0 %v279
  %v437 = vpop.f32.mrb[0].mxu0
  %v438 = vadd.f32 0.0, %v437
  %v439 = vpop.f32.mrb[0].mxu0
  %v440 = vpop.f32.mrb[0].mxu0
  %v441 = vadd.f32 0.0, %v440
  %v442 = vpop.f32.mrb[0].mxu0
  %443 = vmatprep.mubr.bf16.mxu0 0
  %444 = vmatmul.mubr.bf16.gmra.mrb[0].mxu0 %v282
  %v445 = vpop.f32.mrb[0].mxu0
  %v446 = vadd.f32 0.0, %v445
  %v447 = vpop.f32.mrb[0].mxu0
  %v448 = vpop.f32.mrb[0].mxu0
  %v449 = vadd.f32 0.0, %v448
  %v450 = vpop.f32.mrb[0].mxu0
  %451 = vmatprep.mubr.bf16.mxu0 0
  %452 = vmatmul.mubr.bf16.gmra.mrb[0].mxu0 %v285
  %v453 = vpop.f32.mrb[0].mxu0
  %v454 = vadd.f32 0.0, %v453
  %v455 = vpop.f32.mrb[0].mxu0
  %v456 = vpop.f32.mrb[0].mxu0
  %v457 = vadd.f32 0.0, %v456
  %v458 = vpop.f32.mrb[0].mxu0
  %459 = vmatprep.mubr.bf16.mxu0 0
  %460 = vmatmul.mubr.bf16.gmra.mrb[0].mxu0 %v288
  %v461 = vpop.f32.mrb[0].mxu0
  %v462 = vadd.f32 0.0, %v461
  %v463 = vpop.f32.mrb[0].mxu0
  %v464 = vpop.f32.mrb[0].mxu0
  %v465 = vadd.f32 0.0, %v464
  %v466 = vpop.f32.mrb[0].mxu0
  %467 = vmatprep.mubr.bf16.mxu0 0
  %468 = vmatmul.mubr.bf16.gmra.mrb[0].mxu0 %v291
  %v469 = vpop.f32.mrb[0].mxu0
  %v470 = vadd.f32 0.0, %v469
  %v471 = vpop.f32.mrb[0].mxu0
  %v472 = vpop.f32.mrb[0].mxu0
  %v473 = vadd.f32 0.0, %v472
  %v474 = vpop.f32.mrb[0].mxu0
  %475 = vmatprep.mubr.bf16.mxu0 0
  %476 = vmatmul.mubr.bf16.gmra.mrb[0].mxu0 %v294
  %v477 = vpop.f32.mrb[0].mxu0
  %v478 = vadd.f32 0.0, %v477
  %v479 = vpop.f32.mrb[0].mxu0
  %v480 = vpop.f32.mrb[0].mxu0
  %v481 = vadd.f32 0.0, %v480
  %v482 = vpop.f32.mrb[0].mxu0
  %483 = vmatprep.mubr.bf16.mxu0 0
  %484 = vmatmul.mubr.bf16.gmra.mrb[0].mxu0 %v297
  %v485 = vpop.f32.mrb[0].mxu0
  %v486 = vadd.f32 0.0, %v485
  %v487 = vpop.f32.mrb[0].mxu0
  %v488 = vpop.f32.mrb[0].mxu0
  %v489 = vadd.f32 0.0, %v488
  %v490 = vpop.f32.mrb[0].mxu0
  %491 = vmatprep.mubr.bf16.mxu0 0
  %492 = vmatmul.mubr.bf16.gmra.mrb[0].mxu0 %v300
  %v493 = vpop.f32.mrb[0].mxu0
  %v494 = vadd.f32 0.0, %v493
  %v495 = vpop.f32.mrb[0].mxu0
  %v496 = vpop.f32.mrb[0].mxu0
  %v497 = vadd.f32 0.0, %v496
  %v498 = vpop.f32.mrb[0].mxu0
  %499 = vmatprep.mubr.bf16.mxu0 0
  %500 = vmatmul.mubr.bf16.gmra.mrb[0].mxu0 %v303
  %v501 = vpop.f32.mrb[0].mxu0
  %v502 = vadd.f32 0.0, %v501
  %v503 = vpop.f32.mrb[0].mxu0
  %v504 = vpop.f32.mrb[0].mxu0
  %v505 = vadd.f32 0.0, %v504
  %v506 = vpop.f32.mrb[0].mxu0
  %507 = vmatprep.mubr.bf16.mxu0 0
  %508 = vmatmul.mubr.bf16.gmra.mrb[0].mxu0 %v306
  %v509 = vpop.f32.mrb[0].mxu0
  %v510 = vadd.f32 0.0, %v509
  %v511 = vpop.f32.mrb[0].mxu0
  %v512 = vpop.f32.mrb[0].mxu0
  %v513 = vadd.f32 0.0, %v512
  %v514 = vpop.f32.mrb[0].mxu0
  %515 = vmatprep.mubr.bf16.mxu0 0
  %516 = vmatmul.mubr.bf16.gmra.mrb[0].mxu0 %v309
  %v517 = vpop.f32.mrb[0].mxu0
  %v518 = vadd.f32 0.0, %v517
  %v519 = vpop.f32.mrb[0].mxu0
  %v520 = vpop.f32.mrb[0].mxu0
  %v521 = vadd.f32 0.0, %v520
  %v522 = vpop.f32.mrb[0].mxu0
  %523 = vmatprep.mubr.bf16.mxu0 0
  %524 = vmatmul.mubr.bf16.gmra.mrb[0].mxu0 %v312
  %v525 = vpop.f32.mrb[0].mxu0
  %v526 = vadd.f32 0.0, %v525
  %v527 = vpop.f32.mrb[0].mxu0
  %v528 = vpop.f32.mrb[0].mxu0
  %v529 = vadd.f32 0.0, %v528
  %v530 = vpop.f32.mrb[0].mxu0
  %531 = vmatprep.mubr.bf16.mxu0 0
  %532 = vmatmul.mubr.bf16.gmra.mrb[0].mxu0 %v315
  %v533 = vpop.f32.mrb[0].mxu0
  %v534 = vadd.f32 0.0, %v533
  %v535 = vpop.f32.mrb[0].mxu0
  %v536 = vpop.f32.mrb[0].mxu0
  %v537 = vadd.f32 0.0, %v536
  %v538 = vpop.f32.mrb[0].mxu0
  %539 = vmatprep.mubr.bf16.mxu0 0
  %540 = vmatmul.mubr.bf16.gmra.mrb[0].mxu0 %v318
  %v541 = vpop.f32.mrb[0].mxu0
  %v542 = vadd.f32 0.0, %v541
  %v543 = vpop.f32.mrb[0].mxu0
  %v544 = vpop.f32.mrb[0].mxu0
  %v545 = vadd.f32 0.0, %v544
  %v546 = vpop.f32.mrb[0].mxu0
  %547 = vmatprep.mubr.bf16.mxu0 0
  %548 = vmatmul.mubr.bf16.gmra.mrb[0].mxu0 %v321
  %v549 = vpop.f32.mrb[0].mxu0
  %v550 = vadd.f32 0.0, %v549
  %v551 = vpop.f32.mrb[0].mxu0
  %v552 = vpop.f32.mrb[0].mxu0
  %v553 = vadd.f32 0.0, %v552
  %v554 = vpop.f32.mrb[0].mxu0
  %555 = vmatprep.mubr.bf16.mxu0 0
  %556 = vmatmul.mubr.bf16.gmra.mrb[0].mxu0 %v324
  %v557 = vpop.f32.mrb[0].mxu0
  %v558 = vadd.f32 0.0, %v557
  %v559 = vpop.f32.mrb[0].mxu0
  %v560 = vpop.f32.mrb[0].mxu0
  %v561 = vadd.f32 0.0, %v560
  %v562 = vpop.f32.mrb[0].mxu0
  %563 = vmatprep.mubr.bf16.mxu0 0
  %564 = vmatmul.mubr.bf16.gmra.mrb[0].mxu0 %v327
  %v565 = vpop.f32.mrb[0].mxu0
  %v566 = vadd.f32 0.0, %v565
  %v567 = vpop.f32.mrb[0].mxu0
  %v568 = vpop.f32.mrb[0].mxu0
  %v569 = vadd.f32 0.0, %v568
  %v570 = vpop.f32.mrb[0].mxu0
  %571 = vmatprep.mubr.bf16.mxu0 0
  %572 = vmatmul.mubr.bf16.gmra.mrb[0].mxu0 %v330
  %v573 = vpop.f32.mrb[0].mxu0
  %v574 = vadd.f32 0.0, %v573
  %v575 = vpop.f32.mrb[0].mxu0
  %v576 = vpop.f32.mrb[0].mxu0
  %v577 = vadd.f32 0.0, %v576
  %v578 = vpop.f32.mrb[0].mxu0
  %579 = vmatprep.mubr.bf16.mxu0 0
  %580 = vmatmul.mubr.bf16.gmra.mrb[0].mxu0 %v333
  %v581 = vpop.f32.mrb[0].mxu0
  %v582 = vadd.f32 0.0, %v581
  %v583 = vpop.f32.mrb[0].mxu0
  %v584 = vpop.f32.mrb[0].mxu0
  %v585 = vadd.f32 0.0, %v584
  %v586 = vpop.f32.mrb[0].mxu0
  %587 = vmatprep.mubr.bf16.mxu0 0
  %588 = vmatmul.mubr.bf16.gmra.mrb[0].mxu0 %v336
  %v589 = vpop.f32.mrb[0].mxu0
  %v590 = vadd.f32 0.0, %v589
  %v591 = vpop.f32.mrb[0].mxu0
  %v592 = vpop.f32.mrb[0].mxu0
  %v593 = vadd.f32 0.0, %v592
  %v594 = vpop.f32.mrb[0].mxu0
  %595 = vmatprep.mubr.bf16.mxu0 0
  %596 = vmatmul.mubr.bf16.gmra.mrb[0].mxu0 %v339
  %v597 = vpop.f32.mrb[0].mxu0
  %v598 = vadd.f32 0.0, %v597
  %v599 = vpop.f32.mrb[0].mxu0
  %v600 = vpop.f32.mrb[0].mxu0
  %v601 = vadd.f32 0.0, %v600
  %v602 = vpop.f32.mrb[0].mxu0
  %603 = vmatprep.mubr.bf16.mxu0 0
  %604 = vmatmul.mubr.bf16.gmra.mrb[0].mxu0 %v342
  %v605 = vpop.f32.mrb[0].mxu0
  %v606 = vadd.f32 0.0, %v605
  %v607 = vpop.f32.mrb[0].mxu0
  %v608 = vpop.f32.mrb[0].mxu0
  %v609 = vadd.f32 0.0, %v608
  %v610 = vpop.f32.mrb[0].mxu0
  %611 = vmatprep.mubr.bf16.mxu0 0
  %612 = vmatmul.mubr.bf16.gmra.mrb[0].mxu0 %v345
  %v613 = vpop.f32.mrb[0].mxu0
  %v614 = vadd.f32 0.0, %v613
  %v615 = vpop.f32.mrb[0].mxu0
  %v616 = vpop.f32.mrb[0].mxu0
  %v617 = vadd.f32 0.0, %v616
  %v618 = vpop.f32.mrb[0].mxu0
  %619 = vmatprep.mubr.bf16.mxu0 0
  %620 = vmatmul.mubr.bf16.gmra.mrb[0].mxu0 %v348
  %v621 = vpop.f32.mrb[0].mxu0
  %v622 = vadd.f32 0.0, %v621
  %v623 = vpop.f32.mrb[0].mxu0
  %v624 = vpop.f32.mrb[0].mxu0
  %v625 = vadd.f32 0.0, %v624
  %v626 = vpop.f32.mrb[0].mxu0
  %627 = vmatprep.mubr.bf16.mxu0 0
  %628 = vmatmul.mubr.bf16.gmra.mrb[0].mxu0 %v351
  %v629 = vpop.f32.mrb[0].mxu0
  %v630 = vadd.f32 0.0, %v629
  %v631 = vpop.f32.mrb[0].mxu0
  %v632 = vpop.f32.mrb[0].mxu0
  %v633 = vadd.f32 0.0, %v632
  %v634 = vpop.f32.mrb[0].mxu0
  %635 = vmatprep.mubr.bf16.mxu0 0
  %636 = vmatmul.mubr.bf16.gmra.mrb[0].mxu0 %v354
  %v637 = vpop.f32.mrb[0].mxu0
  %v638 = vadd.f32 0.0, %v637
  %v639 = vpop.f32.mrb[0].mxu0
  %v640 = vpop.f32.mrb[0].mxu0
  %v641 = vadd.f32 0.0, %v640
  %v642 = vpop.f32.mrb[0].mxu0
  %643 = vmatprep.mubr.bf16.mxu0 0
  %644 = vmatmul.mubr.bf16.gmra.mrb[0].mxu0 %v357
  %v645 = vpop.f32.mrb[0].mxu0
  %v646 = vadd.f32 0.0, %v645
  %v647 = vpop.f32.mrb[0].mxu0
  %v648 = vpop.f32.mrb[0].mxu0
  %v649 = vadd.f32 0.0, %v648
  %v650 = vpop.f32.mrb[0].mxu0
  %651 = vdwg.mxu0
  %vm652 = vcmask 261120
  %v653 = vsel %vm652, %v398, 0.0
  %v654 = vsel %vm652, %v401, 0.0
  %v655 = vadd.f32 %v653, %v654
  %v656 = vsel %vm652, %v406, 0.0
  %v657 = vadd.f32 %v655, %v656
  %v658 = vsel %vm652, %v409, 0.0
  %v659 = vadd.f32 %v657, %v658
  %v660 = vsel %vm652, %v414, 0.0
  %v661 = vadd.f32 %v659, %v660
  %v662 = vsel %vm652, %v417, 0.0
  %v663 = vadd.f32 %v661, %v662
  %v664 = vsel %vm652, %v422, 0.0
  %v665 = vadd.f32 %v663, %v664
  %v666 = vsel %vm652, %v425, 0.0
  %v667 = vadd.f32 %v665, %v666
  %v668 = vsel %vm652, %v430, 0.0
  %v669 = vadd.f32 %v667, %v668
  %v670 = vsel %vm652, %v433, 0.0
  %v671 = vadd.f32 %v669, %v670
  %v672 = vsel %vm652, %v438, 0.0
  %v673 = vadd.f32 %v671, %v672
  %v674 = vsel %vm652, %v441, 0.0
  %v675 = vadd.f32 %v673, %v674
  %v676 = vsel %vm652, %v446, 0.0
  %v677 = vadd.f32 %v675, %v676
  %v678 = vsel %vm652, %v449, 0.0
  %v679 = vadd.f32 %v677, %v678
  %v680 = vsel %vm652, %v454, 0.0
  %v681 = vadd.f32 %v679, %v680
  %v682 = vsel %vm652, %v457, 0.0
  %v683 = vadd.f32 %v681, %v682
  %v684 = vsel %vm652, %v462, 0.0
  %v685 = vadd.f32 %v683, %v684
  %v686 = vsel %vm652, %v465, 0.0
  %v687 = vadd.f32 %v685, %v686
  %v688 = vsel %vm652, %v470, 0.0
  %v689 = vadd.f32 %v687, %v688
  %v690 = vsel %vm652, %v473, 0.0
  %v691 = vadd.f32 %v689, %v690
  %v692 = vsel %vm652, %v478, 0.0
  %v693 = vadd.f32 %v691, %v692
  %v694 = vsel %vm652, %v481, 0.0
  %v695 = vadd.f32 %v693, %v694
  %v696 = vsel %vm652, %v486, 0.0
  %v697 = vadd.f32 %v695, %v696
  %v698 = vsel %vm652, %v489, 0.0
  %v699 = vadd.f32 %v697, %v698
  %v700 = vsel %vm652, %v494, 0.0
  %v701 = vadd.f32 %v699, %v700
  %v702 = vsel %vm652, %v497, 0.0
  %v703 = vadd.f32 %v701, %v702
  %v704 = vsel %vm652, %v502, 0.0
  %v705 = vadd.f32 %v703, %v704
  %v706 = vsel %vm652, %v505, 0.0
  %v707 = vadd.f32 %v705, %v706
  %v708 = vsel %vm652, %v510, 0.0
  %v709 = vadd.f32 %v707, %v708
  %v710 = vsel %vm652, %v513, 0.0
  %v711 = vadd.f32 %v709, %v710
  %v712 = vsel %vm652, %v518, 0.0
  %v713 = vadd.f32 %v711, %v712
  %v714 = vsel %vm652, %v521, 0.0
  %v715 = vadd.f32 %v713, %v714
  %v716 = vsel %vm652, %v526, 0.0
  %v717 = vadd.f32 %v715, %v716
  %v718 = vsel %vm652, %v529, 0.0
  %v719 = vadd.f32 %v717, %v718
  %v720 = vsel %vm652, %v534, 0.0
  %v721 = vadd.f32 %v719, %v720
  %v722 = vsel %vm652, %v537, 0.0
  %v723 = vadd.f32 %v721, %v722
  %v724 = vsel %vm652, %v542, 0.0
  %v725 = vadd.f32 %v723, %v724
  %v726 = vsel %vm652, %v545, 0.0
  %v727 = vadd.f32 %v725, %v726
  %v728 = vsel %vm652, %v550, 0.0
  %v729 = vadd.f32 %v727, %v728
  %v730 = vsel %vm652, %v553, 0.0
  %v731 = vadd.f32 %v729, %v730
  %v732 = vsel %vm652, %v558, 0.0
  %v733 = vadd.f32 %v731, %v732
  %v734 = vsel %vm652, %v561, 0.0
  %v735 = vadd.f32 %v733, %v734
  %v736 = vsel %vm652, %v566, 0.0
  %v737 = vadd.f32 %v735, %v736
  %v738 = vsel %vm652, %v569, 0.0
  %v739 = vadd.f32 %v737, %v738
  %v740 = vsel %vm652, %v574, 0.0
  %v741 = vadd.f32 %v739, %v740
  %v742 = vsel %vm652, %v577, 0.0
  %v743 = vadd.f32 %v741, %v742
  %v744 = vsel %vm652, %v582, 0.0
  %v745 = vadd.f32 %v743, %v744
  %v746 = vsel %vm652, %v585, 0.0
  %v747 = vadd.f32 %v745, %v746
  %v748 = vsel %vm652, %v590, 0.0
  %v749 = vadd.f32 %v747, %v748
  %v750 = vsel %vm652, %v593, 0.0
  %v751 = vadd.f32 %v749, %v750
  %v752 = vsel %vm652, %v598, 0.0
  %v753 = vadd.f32 %v751, %v752
  %v754 = vsel %vm652, %v601, 0.0
  %v755 = vadd.f32 %v753, %v754
  %v756 = vsel %vm652, %v606, 0.0
  %v757 = vadd.f32 %v755, %v756
  %v758 = vsel %vm652, %v609, 0.0
  %v759 = vadd.f32 %v757, %v758
  %v760 = vsel %vm652, %v614, 0.0
  %v761 = vadd.f32 %v759, %v760
  %v762 = vsel %vm652, %v617, 0.0
  %v763 = vadd.f32 %v761, %v762
  %v764 = vsel %vm652, %v622, 0.0
  %v765 = vadd.f32 %v763, %v764
  %v766 = vsel %vm652, %v625, 0.0
  %v767 = vadd.f32 %v765, %v766
  %v768 = vsel %vm652, %v630, 0.0
  %v769 = vadd.f32 %v767, %v768
  %v770 = vsel %vm652, %v633, 0.0
  %v771 = vadd.f32 %v769, %v770
  %v772 = vsel %vm652, %v638, 0.0
  %v773 = vadd.f32 %v771, %v772
  %v774 = vsel %vm652, %v641, 0.0
  %v775 = vadd.f32 %v773, %v774
  %v776 = vsel %vm652, %v646, 0.0
  %v777 = vadd.f32 %v775, %v776
  %v778 = vsel %vm652, %v649, 0.0
  %v779 = vadd.f32 %v777, %v778
  %v780 = vrot.slane %v779, 4
  %v781 = vadd.f32 %v779, %v780
  %v782 = vrot.slane %v781, 2
  %v783 = vadd.f32 %v781, %v782
  %v784 = vrot.slane %v783, 1
  %v785 = vadd.f32 %v783, %v784
  %v786 = vrcp.pop 512.0
  %v787 = vmul.f32 %v785, %v786
  %v788 = vsub.f32 %v398, %v787
  %v789 = vsub.f32 %v401, %v787
  %v790 = vsub.f32 %v406, %v787
  %v791 = vsub.f32 %v409, %v787
  %v792 = vsub.f32 %v414, %v787
  %v793 = vsub.f32 %v417, %v787
  %v794 = vsub.f32 %v422, %v787
  %v795 = vsub.f32 %v425, %v787
  %v796 = vsub.f32 %v430, %v787
  %v797 = vsub.f32 %v433, %v787
  %v798 = vsub.f32 %v438, %v787
  %v799 = vsub.f32 %v441, %v787
  %v800 = vsub.f32 %v446, %v787
  %v801 = vsub.f32 %v449, %v787
  %v802 = vsub.f32 %v454, %v787
  %v803 = vsub.f32 %v457, %v787
  %v804 = vsub.f32 %v462, %v787
  %v805 = vsub.f32 %v465, %v787
  %v806 = vsub.f32 %v470, %v787
  %v807 = vsub.f32 %v473, %v787
  %v808 = vsub.f32 %v478, %v787
  %v809 = vsub.f32 %v481, %v787
  %v810 = vsub.f32 %v486, %v787
  %v811 = vsub.f32 %v489, %v787
  %v812 = vsub.f32 %v494, %v787
  %v813 = vsub.f32 %v497, %v787
  %v814 = vsub.f32 %v502, %v787
  %v815 = vsub.f32 %v505, %v787
  %v816 = vsub.f32 %v510, %v787
  %v817 = vsub.f32 %v513, %v787
  %v818 = vsub.f32 %v518, %v787
  %v819 = vsub.f32 %v521, %v787
  %v820 = vsub.f32 %v526, %v787
  %v821 = vsub.f32 %v529, %v787
  %v822 = vsub.f32 %v534, %v787
  %v823 = vsub.f32 %v537, %v787
  %v824 = vsub.f32 %v542, %v787
  %v825 = vsub.f32 %v545, %v787
  %v826 = vsub.f32 %v550, %v787
  %v827 = vsub.f32 %v553, %v787
  %v828 = vsub.f32 %v558, %v787
  %v829 = vsub.f32 %v561, %v787
  %v830 = vsub.f32 %v566, %v787
  %v831 = vsub.f32 %v569, %v787
  %v832 = vsub.f32 %v574, %v787
  %v833 = vsub.f32 %v577, %v787
  %v834 = vsub.f32 %v582, %v787
  %v835 = vsub.f32 %v585, %v787
  %v836 = vsub.f32 %v590, %v787
  %v837 = vsub.f32 %v593, %v787
  %v838 = vsub.f32 %v598, %v787
  %v839 = vsub.f32 %v601, %v787
  %v840 = vsub.f32 %v606, %v787
  %v841 = vsub.f32 %v609, %v787
  %v842 = vsub.f32 %v614, %v787
  %v843 = vsub.f32 %v617, %v787
  %v844 = vsub.f32 %v622, %v787
  %v845 = vsub.f32 %v625, %v787
  %v846 = vsub.f32 %v630, %v787
  %v847 = vsub.f32 %v633, %v787
  %v848 = vsub.f32 %v638, %v787
  %v849 = vsub.f32 %v641, %v787
  %v850 = vsub.f32 %v646, %v787
  %v851 = vsub.f32 %v649, %v787
  %v852 = vmul.f32 %v788, %v788
  %v853 = vmul.f32 %v789, %v789
  %v854 = vmul.f32 %v790, %v790
  %v855 = vmul.f32 %v791, %v791
  %v856 = vmul.f32 %v792, %v792
  %v857 = vmul.f32 %v793, %v793
  %v858 = vmul.f32 %v794, %v794
  %v859 = vmul.f32 %v795, %v795
  %v860 = vmul.f32 %v796, %v796
  %v861 = vmul.f32 %v797, %v797
  %v862 = vmul.f32 %v798, %v798
  %v863 = vmul.f32 %v799, %v799
  %v864 = vmul.f32 %v800, %v800
  %v865 = vmul.f32 %v801, %v801
  %v866 = vmul.f32 %v802, %v802
  %v867 = vmul.f32 %v803, %v803
  %v868 = vmul.f32 %v804, %v804
  %v869 = vmul.f32 %v805, %v805
  %v870 = vmul.f32 %v806, %v806
  %v871 = vmul.f32 %v807, %v807
  %v872 = vmul.f32 %v808, %v808
  %v873 = vmul.f32 %v809, %v809
  %v874 = vmul.f32 %v810, %v810
  %v875 = vmul.f32 %v811, %v811
  %v876 = vmul.f32 %v812, %v812
  %v877 = vmul.f32 %v813, %v813
  %v878 = vmul.f32 %v814, %v814
  %v879 = vmul.f32 %v815, %v815
  %v880 = vmul.f32 %v816, %v816
  %v881 = vmul.f32 %v817, %v817
  %v882 = vmul.f32 %v818, %v818
  %v883 = vmul.f32 %v819, %v819
  %v884 = vmul.f32 %v820, %v820
  %v885 = vmul.f32 %v821, %v821
  %v886 = vmul.f32 %v822, %v822
  %v887 = vmul.f32 %v823, %v823
  %v888 = vmul.f32 %v824, %v824
  %v889 = vmul.f32 %v825, %v825
  %v890 = vmul.f32 %v826, %v826
  %v891 = vmul.f32 %v827, %v827
  %v892 = vmul.f32 %v828, %v828
  %v893 = vmul.f32 %v829, %v829
  %v894 = vmul.f32 %v830, %v830
  %v895 = vmul.f32 %v831, %v831
  %v896 = vmul.f32 %v832, %v832
  %v897 = vmul.f32 %v833, %v833
  %v898 = vmul.f32 %v834, %v834
  %v899 = vmul.f32 %v835, %v835
  %v900 = vmul.f32 %v836, %v836
  %v901 = vmul.f32 %v837, %v837
  %v902 = vmul.f32 %v838, %v838
  %v903 = vmul.f32 %v839, %v839
  %v904 = vmul.f32 %v840, %v840
  %v905 = vmul.f32 %v841, %v841
  %v906 = vmul.f32 %v842, %v842
  %v907 = vmul.f32 %v843, %v843
  %v908 = vmul.f32 %v844, %v844
  %v909 = vmul.f32 %v845, %v845
  %v910 = vmul.f32 %v846, %v846
  %v911 = vmul.f32 %v847, %v847
  %v912 = vmul.f32 %v848, %v848
  %v913 = vmul.f32 %v849, %v849
  %v914 = vmul.f32 %v850, %v850
  %v915 = vmul.f32 %v851, %v851
  %v916 = vsel %vm652, %v852, 0.0
  %v917 = vsel %vm652, %v853, 0.0
  %v918 = vadd.f32 %v916, %v917
  %v919 = vsel %vm652, %v854, 0.0
  %v920 = vadd.f32 %v918, %v919
  %v921 = vsel %vm652, %v855, 0.0
  %v922 = vadd.f32 %v920, %v921
  %v923 = vsel %vm652, %v856, 0.0
  %v924 = vadd.f32 %v922, %v923
  %v925 = vsel %vm652, %v857, 0.0
  %v926 = vadd.f32 %v924, %v925
  %v927 = vsel %vm652, %v858, 0.0
  %v928 = vadd.f32 %v926, %v927
  %v929 = vsel %vm652, %v859, 0.0
  %v930 = vadd.f32 %v928, %v929
  %v931 = vsel %vm652, %v860, 0.0
  %v932 = vadd.f32 %v930, %v931
  %v933 = vsel %vm652, %v861, 0.0
  %v934 = vadd.f32 %v932, %v933
  %v935 = vsel %vm652, %v862, 0.0
  %v936 = vadd.f32 %v934, %v935
  %v937 = vsel %vm652, %v863, 0.0
  %v938 = vadd.f32 %v936, %v937
  %v939 = vsel %vm652, %v864, 0.0
  %v940 = vadd.f32 %v938, %v939
  %v941 = vsel %vm652, %v865, 0.0
  %v942 = vadd.f32 %v940, %v941
  %v943 = vsel %vm652, %v866, 0.0
  %v944 = vadd.f32 %v942, %v943
  %v945 = vsel %vm652, %v867, 0.0
  %v946 = vadd.f32 %v944, %v945
  %v947 = vsel %vm652, %v868, 0.0
  %v948 = vadd.f32 %v946, %v947
  %v949 = vsel %vm652, %v869, 0.0
  %v950 = vadd.f32 %v948, %v949
  %v951 = vsel %vm652, %v870, 0.0
  %v952 = vadd.f32 %v950, %v951
  %v953 = vsel %vm652, %v871, 0.0
  %v954 = vadd.f32 %v952, %v953
  %v955 = vsel %vm652, %v872, 0.0
  %v956 = vadd.f32 %v954, %v955
  %v957 = vsel %vm652, %v873, 0.0
  %v958 = vadd.f32 %v956, %v957
  %v959 = vsel %vm652, %v874, 0.0
  %v960 = vadd.f32 %v958, %v959
  %v961 = vsel %vm652, %v875, 0.0
  %v962 = vadd.f32 %v960, %v961
  %v963 = vsel %vm652, %v876, 0.0
  %v964 = vadd.f32 %v962, %v963
  %v965 = vsel %vm652, %v877, 0.0
  %v966 = vadd.f32 %v964, %v965
  %v967 = vsel %vm652, %v878, 0.0
  %v968 = vadd.f32 %v966, %v967
  %v969 = vsel %vm652, %v879, 0.0
  %v970 = vadd.f32 %v968, %v969
  %v971 = vsel %vm652, %v880, 0.0
  %v972 = vadd.f32 %v970, %v971
  %v973 = vsel %vm652, %v881, 0.0
  %v974 = vadd.f32 %v972, %v973
  %v975 = vsel %vm652, %v882, 0.0
  %v976 = vadd.f32 %v974, %v975
  %v977 = vsel %vm652, %v883, 0.0
  %v978 = vadd.f32 %v976, %v977
  %v979 = vsel %vm652, %v884, 0.0
  %v980 = vadd.f32 %v978, %v979
  %v981 = vsel %vm652, %v885, 0.0
  %v982 = vadd.f32 %v980, %v981
  %v983 = vsel %vm652, %v886, 0.0
  %v984 = vadd.f32 %v982, %v983
  %v985 = vsel %vm652, %v887, 0.0
  %v986 = vadd.f32 %v984, %v985
  %v987 = vsel %vm652, %v888, 0.0
  %v988 = vadd.f32 %v986, %v987
  %v989 = vsel %vm652, %v889, 0.0
  %v990 = vadd.f32 %v988, %v989
  %v991 = vsel %vm652, %v890, 0.0
  %v992 = vadd.f32 %v990, %v991
  %v993 = vsel %vm652, %v891, 0.0
  %v994 = vadd.f32 %v992, %v993
  %v995 = vsel %vm652, %v892, 0.0
  %v996 = vadd.f32 %v994, %v995
  %v997 = vsel %vm652, %v893, 0.0
  %v998 = vadd.f32 %v996, %v997
  %v999 = vsel %vm652, %v894, 0.0
  %v1000 = vadd.f32 %v998, %v999
  %v1001 = vsel %vm652, %v895, 0.0
  %v1002 = vadd.f32 %v1000, %v1001
  %v1003 = vsel %vm652, %v896, 0.0
  %v1004 = vadd.f32 %v1002, %v1003
  %v1005 = vsel %vm652, %v897, 0.0
  %v1006 = vadd.f32 %v1004, %v1005
  %v1007 = vsel %vm652, %v898, 0.0
  %v1008 = vadd.f32 %v1006, %v1007
  %v1009 = vsel %vm652, %v899, 0.0
  %v1010 = vadd.f32 %v1008, %v1009
  %v1011 = vsel %vm652, %v900, 0.0
  %v1012 = vadd.f32 %v1010, %v1011
  %v1013 = vsel %vm652, %v901, 0.0
  %v1014 = vadd.f32 %v1012, %v1013
  %v1015 = vsel %vm652, %v902, 0.0
  %v1016 = vadd.f32 %v1014, %v1015
  %v1017 = vsel %vm652, %v903, 0.0
  %v1018 = vadd.f32 %v1016, %v1017
  %v1019 = vsel %vm652, %v904, 0.0
  %v1020 = vadd.f32 %v1018, %v1019
  %v1021 = vsel %vm652, %v905, 0.0
  %v1022 = vadd.f32 %v1020, %v1021
  %v1023 = vsel %vm652, %v906, 0.0
  %v1024 = vadd.f32 %v1022, %v1023
  %v1025 = vsel %vm652, %v907, 0.0
  %v1026 = vadd.f32 %v1024, %v1025
  %v1027 = vsel %vm652, %v908, 0.0
  %v1028 = vadd.f32 %v1026, %v1027
  %v1029 = vsel %vm652, %v909, 0.0
  %v1030 = vadd.f32 %v1028, %v1029
  %v1031 = vsel %vm652, %v910, 0.0
  %v1032 = vadd.f32 %v1030, %v1031
  %v1033 = vsel %vm652, %v911, 0.0
  %v1034 = vadd.f32 %v1032, %v1033
  %v1035 = vsel %vm652, %v912, 0.0
  %v1036 = vadd.f32 %v1034, %v1035
  %v1037 = vsel %vm652, %v913, 0.0
  %v1038 = vadd.f32 %v1036, %v1037
  %v1039 = vsel %vm652, %v914, 0.0
  %v1040 = vadd.f32 %v1038, %v1039
  %v1041 = vsel %vm652, %v915, 0.0
  %v1042 = vadd.f32 %v1040, %v1041
  %v1043 = vrot.slane %v1042, 4
  %v1044 = vadd.f32 %v1042, %v1043
  %v1045 = vrot.slane %v1044, 2
  %v1046 = vadd.f32 %v1044, %v1045
  %v1047 = vrot.slane %v1046, 1
  %v1048 = vadd.f32 %v1046, %v1047
  %v1049 = vmul.f32 %v1048, %v786
  %v1050 = vadd.f32 %v1049, 1e-05
  %v1051 = vrsqrt.pop %v1050
  %v1052 = vmul.f32 %v788, %v1051
  %v1053 = vmul.f32 %v789, %v1051
  %v1054 = vmul.f32 %v790, %v1051
  %v1055 = vmul.f32 %v791, %v1051
  %v1056 = vmul.f32 %v792, %v1051
  %v1057 = vmul.f32 %v793, %v1051
  %v1058 = vmul.f32 %v794, %v1051
  %v1059 = vmul.f32 %v795, %v1051
  %v1060 = vmul.f32 %v796, %v1051
  %v1061 = vmul.f32 %v797, %v1051
  %v1062 = vmul.f32 %v798, %v1051
  %v1063 = vmul.f32 %v799, %v1051
  %v1064 = vmul.f32 %v800, %v1051
  %v1065 = vmul.f32 %v801, %v1051
  %v1066 = vmul.f32 %v802, %v1051
  %v1067 = vmul.f32 %v803, %v1051
  %v1068 = vmul.f32 %v804, %v1051
  %v1069 = vmul.f32 %v805, %v1051
  %v1070 = vmul.f32 %v806, %v1051
  %v1071 = vmul.f32 %v807, %v1051
  %v1072 = vmul.f32 %v808, %v1051
  %v1073 = vmul.f32 %v809, %v1051
  %v1074 = vmul.f32 %v810, %v1051
  %v1075 = vmul.f32 %v811, %v1051
  %v1076 = vmul.f32 %v812, %v1051
  %v1077 = vmul.f32 %v813, %v1051
  %v1078 = vmul.f32 %v814, %v1051
  %v1079 = vmul.f32 %v815, %v1051
  %v1080 = vmul.f32 %v816, %v1051
  %v1081 = vmul.f32 %v817, %v1051
  %v1082 = vmul.f32 %v818, %v1051
  %v1083 = vmul.f32 %v819, %v1051
  %v1084 = vmul.f32 %v820, %v1051
  %v1085 = vmul.f32 %v821, %v1051
  %v1086 = vmul.f32 %v822, %v1051
  %v1087 = vmul.f32 %v823, %v1051
  %v1088 = vmul.f32 %v824, %v1051
  %v1089 = vmul.f32 %v825, %v1051
  %v1090 = vmul.f32 %v826, %v1051
  %v1091 = vmul.f32 %v827, %v1051
  %v1092 = vmul.f32 %v828, %v1051
  %v1093 = vmul.f32 %v829, %v1051
  %v1094 = vmul.f32 %v830, %v1051
  %v1095 = vmul.f32 %v831, %v1051
  %v1096 = vmul.f32 %v832, %v1051
  %v1097 = vmul.f32 %v833, %v1051
  %v1098 = vmul.f32 %v834, %v1051
  %v1099 = vmul.f32 %v835, %v1051
  %v1100 = vmul.f32 %v836, %v1051
  %v1101 = vmul.f32 %v837, %v1051
  %v1102 = vmul.f32 %v838, %v1051
  %v1103 = vmul.f32 %v839, %v1051
  %v1104 = vmul.f32 %v840, %v1051
  %v1105 = vmul.f32 %v841, %v1051
  %v1106 = vmul.f32 %v842, %v1051
  %v1107 = vmul.f32 %v843, %v1051
  %v1108 = vmul.f32 %v844, %v1051
  %v1109 = vmul.f32 %v845, %v1051
  %v1110 = vmul.f32 %v846, %v1051
  %v1111 = vmul.f32 %v847, %v1051
  %v1112 = vmul.f32 %v848, %v1051
  %v1113 = vmul.f32 %v849, %v1051
  %v1114 = vmul.f32 %v850, %v1051
  %v1115 = vmul.f32 %v851, %v1051
  %v1116 = vld [vmem:[%s2] sm:$0x1]
  %v1118 = vlaneseq
  %v1119 = vshrl.u32 %v1118, 7
  %v1120 = vsub.s32 0, %v1119
  %v1121 = vrot.slane %v1116, %v1120
  %v1123 = vmul.f32 %v1052, %v1121
  %v1124 = vmul.f32 %v1053, %v1121
  %v1125 = vmul.f32 %v1054, %v1121
  %v1126 = vmul.f32 %v1055, %v1121
  %v1127 = vmul.f32 %v1056, %v1121
  %v1128 = vmul.f32 %v1057, %v1121
  %v1129 = vmul.f32 %v1058, %v1121
  %v1130 = vmul.f32 %v1059, %v1121
  %v1131 = vmul.f32 %v1060, %v1121
  %v1132 = vmul.f32 %v1061, %v1121
  %v1133 = vmul.f32 %v1062, %v1121
  %v1134 = vmul.f32 %v1063, %v1121
  %v1135 = vmul.f32 %v1064, %v1121
  %v1136 = vmul.f32 %v1065, %v1121
  %v1137 = vmul.f32 %v1066, %v1121
  %v1138 = vmul.f32 %v1067, %v1121
  %v1139 = vmul.f32 %v1068, %v1121
  %v1140 = vmul.f32 %v1069, %v1121
  %v1141 = vmul.f32 %v1070, %v1121
  %v1142 = vmul.f32 %v1071, %v1121
  %v1143 = vmul.f32 %v1072, %v1121
  %v1144 = vmul.f32 %v1073, %v1121
  %v1145 = vmul.f32 %v1074, %v1121
  %v1146 = vmul.f32 %v1075, %v1121
  %v1147 = vmul.f32 %v1076, %v1121
  %v1148 = vmul.f32 %v1077, %v1121
  %v1149 = vmul.f32 %v1078, %v1121
  %v1150 = vmul.f32 %v1079, %v1121
  %v1151 = vmul.f32 %v1080, %v1121
  %v1152 = vmul.f32 %v1081, %v1121
  %v1153 = vmul.f32 %v1082, %v1121
  %v1154 = vmul.f32 %v1083, %v1121
  %v1155 = vmul.f32 %v1084, %v1121
  %v1156 = vmul.f32 %v1085, %v1121
  %v1157 = vmul.f32 %v1086, %v1121
  %v1158 = vmul.f32 %v1087, %v1121
  %v1159 = vmul.f32 %v1088, %v1121
  %v1160 = vmul.f32 %v1089, %v1121
  %v1161 = vmul.f32 %v1090, %v1121
  %v1162 = vmul.f32 %v1091, %v1121
  %v1163 = vmul.f32 %v1092, %v1121
  %v1164 = vmul.f32 %v1093, %v1121
  %v1165 = vmul.f32 %v1094, %v1121
  %v1166 = vmul.f32 %v1095, %v1121
  %v1167 = vmul.f32 %v1096, %v1121
  %v1168 = vmul.f32 %v1097, %v1121
  %v1169 = vmul.f32 %v1098, %v1121
  %v1170 = vmul.f32 %v1099, %v1121
  %v1171 = vmul.f32 %v1100, %v1121
  %v1172 = vmul.f32 %v1101, %v1121
  %v1173 = vmul.f32 %v1102, %v1121
  %v1174 = vmul.f32 %v1103, %v1121
  %v1175 = vmul.f32 %v1104, %v1121
  %v1176 = vmul.f32 %v1105, %v1121
  %v1177 = vmul.f32 %v1106, %v1121
  %v1178 = vmul.f32 %v1107, %v1121
  %v1179 = vmul.f32 %v1108, %v1121
  %v1180 = vmul.f32 %v1109, %v1121
  %v1181 = vmul.f32 %v1110, %v1121
  %v1182 = vmul.f32 %v1111, %v1121
  %v1183 = vmul.f32 %v1112, %v1121
  %v1184 = vmul.f32 %v1113, %v1121
  %v1185 = vmul.f32 %v1114, %v1121
  %v1186 = vmul.f32 %v1115, %v1121
  %v1187 = vld [vmem:[%s3] sm:$0x1]
  %v1189 = vlaneseq
  %v1190 = vshrl.u32 %v1189, 7
  %v1191 = vsub.s32 0, %v1190
  %v1192 = vrot.slane %v1187, %v1191
  %v1194 = vadd.f32 %v1123, %v1192
  %v1195 = vadd.f32 %v1124, %v1192
  %v1196 = vadd.f32 %v1125, %v1192
  %v1197 = vadd.f32 %v1126, %v1192
  %v1198 = vadd.f32 %v1127, %v1192
  %v1199 = vadd.f32 %v1128, %v1192
  %v1200 = vadd.f32 %v1129, %v1192
  %v1201 = vadd.f32 %v1130, %v1192
  %v1202 = vadd.f32 %v1131, %v1192
  %v1203 = vadd.f32 %v1132, %v1192
  %v1204 = vadd.f32 %v1133, %v1192
  %v1205 = vadd.f32 %v1134, %v1192
  %v1206 = vadd.f32 %v1135, %v1192
  %v1207 = vadd.f32 %v1136, %v1192
  %v1208 = vadd.f32 %v1137, %v1192
  %v1209 = vadd.f32 %v1138, %v1192
  %v1210 = vadd.f32 %v1139, %v1192
  %v1211 = vadd.f32 %v1140, %v1192
  %v1212 = vadd.f32 %v1141, %v1192
  %v1213 = vadd.f32 %v1142, %v1192
  %v1214 = vadd.f32 %v1143, %v1192
  %v1215 = vadd.f32 %v1144, %v1192
  %v1216 = vadd.f32 %v1145, %v1192
  %v1217 = vadd.f32 %v1146, %v1192
  %v1218 = vadd.f32 %v1147, %v1192
  %v1219 = vadd.f32 %v1148, %v1192
  %v1220 = vadd.f32 %v1149, %v1192
  %v1221 = vadd.f32 %v1150, %v1192
  %v1222 = vadd.f32 %v1151, %v1192
  %v1223 = vadd.f32 %v1152, %v1192
  %v1224 = vadd.f32 %v1153, %v1192
  %v1225 = vadd.f32 %v1154, %v1192
  %v1226 = vadd.f32 %v1155, %v1192
  %v1227 = vadd.f32 %v1156, %v1192
  %v1228 = vadd.f32 %v1157, %v1192
  %v1229 = vadd.f32 %v1158, %v1192
  %v1230 = vadd.f32 %v1159, %v1192
  %v1231 = vadd.f32 %v1160, %v1192
  %v1232 = vadd.f32 %v1161, %v1192
  %v1233 = vadd.f32 %v1162, %v1192
  %v1234 = vadd.f32 %v1163, %v1192
  %v1235 = vadd.f32 %v1164, %v1192
  %v1236 = vadd.f32 %v1165, %v1192
  %v1237 = vadd.f32 %v1166, %v1192
  %v1238 = vadd.f32 %v1167, %v1192
  %v1239 = vadd.f32 %v1168, %v1192
  %v1240 = vadd.f32 %v1169, %v1192
  %v1241 = vadd.f32 %v1170, %v1192
  %v1242 = vadd.f32 %v1171, %v1192
  %v1243 = vadd.f32 %v1172, %v1192
  %v1244 = vadd.f32 %v1173, %v1192
  %v1245 = vadd.f32 %v1174, %v1192
  %v1246 = vadd.f32 %v1175, %v1192
  %v1247 = vadd.f32 %v1176, %v1192
  %v1248 = vadd.f32 %v1177, %v1192
  %v1249 = vadd.f32 %v1178, %v1192
  %v1250 = vadd.f32 %v1179, %v1192
  %v1251 = vadd.f32 %v1180, %v1192
  %v1252 = vadd.f32 %v1181, %v1192
  %v1253 = vadd.f32 %v1182, %v1192
  %v1254 = vadd.f32 %v1183, %v1192
  %v1255 = vadd.f32 %v1184, %v1192
  %v1256 = vadd.f32 %v1185, %v1192
  %v1257 = vadd.f32 %v1186, %v1192
  %v1258 = vmax.f32 %v1194, 0.0
  %v1259 = vmax.f32 %v1195, 0.0
  %v1260 = vmax.f32 %v1196, 0.0
  %v1261 = vmax.f32 %v1197, 0.0
  %v1262 = vmax.f32 %v1198, 0.0
  %v1263 = vmax.f32 %v1199, 0.0
  %v1264 = vmax.f32 %v1200, 0.0
  %v1265 = vmax.f32 %v1201, 0.0
  %v1266 = vmax.f32 %v1202, 0.0
  %v1267 = vmax.f32 %v1203, 0.0
  %v1268 = vmax.f32 %v1204, 0.0
  %v1269 = vmax.f32 %v1205, 0.0
  %v1270 = vmax.f32 %v1206, 0.0
  %v1271 = vmax.f32 %v1207, 0.0
  %v1272 = vmax.f32 %v1208, 0.0
  %v1273 = vmax.f32 %v1209, 0.0
  %v1274 = vmax.f32 %v1210, 0.0
  %v1275 = vmax.f32 %v1211, 0.0
  %v1276 = vmax.f32 %v1212, 0.0
  %v1277 = vmax.f32 %v1213, 0.0
  %v1278 = vmax.f32 %v1214, 0.0
  %v1279 = vmax.f32 %v1215, 0.0
  %v1280 = vmax.f32 %v1216, 0.0
  %v1281 = vmax.f32 %v1217, 0.0
  %v1282 = vmax.f32 %v1218, 0.0
  %v1283 = vmax.f32 %v1219, 0.0
  %v1284 = vmax.f32 %v1220, 0.0
  %v1285 = vmax.f32 %v1221, 0.0
  %v1286 = vmax.f32 %v1222, 0.0
  %v1287 = vmax.f32 %v1223, 0.0
  %v1288 = vmax.f32 %v1224, 0.0
  %v1289 = vmax.f32 %v1225, 0.0
  %v1290 = vmax.f32 %v1226, 0.0
  %v1291 = vmax.f32 %v1227, 0.0
  %v1292 = vmax.f32 %v1228, 0.0
  %v1293 = vmax.f32 %v1229, 0.0
  %v1294 = vmax.f32 %v1230, 0.0
  %v1295 = vmax.f32 %v1231, 0.0
  %v1296 = vmax.f32 %v1232, 0.0
  %v1297 = vmax.f32 %v1233, 0.0
  %v1298 = vmax.f32 %v1234, 0.0
  %v1299 = vmax.f32 %v1235, 0.0
  %v1300 = vmax.f32 %v1236, 0.0
  %v1301 = vmax.f32 %v1237, 0.0
  %v1302 = vmax.f32 %v1238, 0.0
  %v1303 = vmax.f32 %v1239, 0.0
  %v1304 = vmax.f32 %v1240, 0.0
  %v1305 = vmax.f32 %v1241, 0.0
  %v1306 = vmax.f32 %v1242, 0.0
  %v1307 = vmax.f32 %v1243, 0.0
  %v1308 = vmax.f32 %v1244, 0.0
  %v1309 = vmax.f32 %v1245, 0.0
  %v1310 = vmax.f32 %v1246, 0.0
  %v1311 = vmax.f32 %v1247, 0.0
  %v1312 = vmax.f32 %v1248, 0.0
  %v1313 = vmax.f32 %v1249, 0.0
  %v1314 = vmax.f32 %v1250, 0.0
  %v1315 = vmax.f32 %v1251, 0.0
  %v1316 = vmax.f32 %v1252, 0.0
  %v1317 = vmax.f32 %v1253, 0.0
  %v1318 = vmax.f32 %v1254, 0.0
  %v1319 = vmax.f32 %v1255, 0.0
  %v1320 = vmax.f32 %v1256, 0.0
  %v1321 = vmax.f32 %v1257, 0.0
  %1322 = vst.msk [vmem:[%s4] sm:$0xff] %vm652, %v1258
  %1323 = vst.msk [vmem:[%s4 + $0x8] sm:$0xff] %vm652, %v1259
  %1324 = vst.msk [vmem:[%s4 + $0x10] sm:$0xff] %vm652, %v1260
  %1325 = vst.msk [vmem:[%s4 + $0x18] sm:$0xff] %vm652, %v1261
  %1326 = vst.msk [vmem:[%s4 + $0x20] sm:$0xff] %vm652, %v1262
  %1327 = vst.msk [vmem:[%s4 + $0x28] sm:$0xff] %vm652, %v1263
  %1328 = vst.msk [vmem:[%s4 + $0x30] sm:$0xff] %vm652, %v1264
  %1329 = vst.msk [vmem:[%s4 + $0x38] sm:$0xff] %vm652, %v1265
  %1330 = vst.msk [vmem:[%s4 + $0x40] sm:$0xff] %vm652, %v1266
  %1331 = vst.msk [vmem:[%s4 + $0x48] sm:$0xff] %vm652, %v1267
  %1332 = vst.msk [vmem:[%s4 + $0x50] sm:$0xff] %vm652, %v1268
  %1333 = vst.msk [vmem:[%s4 + $0x58] sm:$0xff] %vm652, %v1269
  %1334 = vst.msk [vmem:[%s4 + $0x60] sm:$0xff] %vm652, %v1270
  %1335 = vst.msk [vmem:[%s4 + $0x68] sm:$0xff] %vm652, %v1271
  %1336 = vst.msk [vmem:[%s4 + $0x70] sm:$0xff] %vm652, %v1272
  %1337 = vst.msk [vmem:[%s4 + $0x78] sm:$0xff] %vm652, %v1273
  %1338 = vst.msk [vmem:[%s4 + $0x80] sm:$0xff] %vm652, %v1274
  %1339 = vst.msk [vmem:[%s4 + $0x88] sm:$0xff] %vm652, %v1275
  %1340 = vst.msk [vmem:[%s4 + $0x90] sm:$0xff] %vm652, %v1276
  %1341 = vst.msk [vmem:[%s4 + $0x98] sm:$0xff] %vm652, %v1277
  %1342 = vst.msk [vmem:[%s4 + $0xa0] sm:$0xff] %vm652, %v1278
  %1343 = vst.msk [vmem:[%s4 + $0xa8] sm:$0xff] %vm652, %v1279
  %1344 = vst.msk [vmem:[%s4 + $0xb0] sm:$0xff] %vm652, %v1280
  %1345 = vst.msk [vmem:[%s4 + $0xb8] sm:$0xff] %vm652, %v1281
  %1346 = vst.msk [vmem:[%s4 + $0xc0] sm:$0xff] %vm652, %v1282
  %1347 = vst.msk [vmem:[%s4 + $0xc8] sm:$0xff] %vm652, %v1283
  %1348 = vst.msk [vmem:[%s4 + $0xd0] sm:$0xff] %vm652, %v1284
  %1349 = vst.msk [vmem:[%s4 + $0xd8] sm:$0xff] %vm652, %v1285
  %1350 = vst.msk [vmem:[%s4 + $0xe0] sm:$0xff] %vm652, %v1286
  %1351 = vst.msk [vmem:[%s4 + $0xe8] sm:$0xff] %vm652, %v1287
  %1352 = vst.msk [vmem:[%s4 + $0xf0] sm:$0xff] %vm652, %v1288
  %1353 = vst.msk [vmem:[%s4 + $0xf8] sm:$0xff] %vm652, %v1289
  %1354 = vst.msk [vmem:[%s4 + $0x100] sm:$0xff] %vm652, %v1290
  %1355 = vst.msk [vmem:[%s4 + $0x108] sm:$0xff] %vm652, %v1291
  %1356 = vst.msk [vmem:[%s4 + $0x110] sm:$0xff] %vm652, %v1292
  %1357 = vst.msk [vmem:[%s4 + $0x118] sm:$0xff] %vm652, %v1293
  %1358 = vst.msk [vmem:[%s4 + $0x120] sm:$0xff] %vm652, %v1294
  %1359 = vst.msk [vmem:[%s4 + $0x128] sm:$0xff] %vm652, %v1295
  %1360 = vst.msk [vmem:[%s4 + $0x130] sm:$0xff] %vm652, %v1296
  %1361 = vst.msk [vmem:[%s4 + $0x138] sm:$0xff] %vm652, %v1297
  %1362 = vst.msk [vmem:[%s4 + $0x140] sm:$0xff] %vm652, %v1298
  %1363 = vst.msk [vmem:[%s4 + $0x148] sm:$0xff] %vm652, %v1299
  %1364 = vst.msk [vmem:[%s4 + $0x150] sm:$0xff] %vm652, %v1300
  %1365 = vst.msk [vmem:[%s4 + $0x158] sm:$0xff] %vm652, %v1301
  %1366 = vst.msk [vmem:[%s4 + $0x160] sm:$0xff] %vm652, %v1302
  %1367 = vst.msk [vmem:[%s4 + $0x168] sm:$0xff] %vm652, %v1303
  %1368 = vst.msk [vmem:[%s4 + $0x170] sm:$0xff] %vm652, %v1304
  %1369 = vst.msk [vmem:[%s4 + $0x178] sm:$0xff] %vm652, %v1305
  %1370 = vst.msk [vmem:[%s4 + $0x180] sm:$0xff] %vm652, %v1306
  %1371 = vst.msk [vmem:[%s4 + $0x188] sm:$0xff] %vm652, %v1307
  %1372 = vst.msk [vmem:[%s4 + $0x190] sm:$0xff] %vm652, %v1308
  %1373 = vst.msk [vmem:[%s4 + $0x198] sm:$0xff] %vm652, %v1309
  %1374 = vst.msk [vmem:[%s4 + $0x1a0] sm:$0xff] %vm652, %v1310
  %1375 = vst.msk [vmem:[%s4 + $0x1a8] sm:$0xff] %vm652, %v1311
  %1376 = vst.msk [vmem:[%s4 + $0x1b0] sm:$0xff] %vm652, %v1312
  %1377 = vst.msk [vmem:[%s4 + $0x1b8] sm:$0xff] %vm652, %v1313
  %1378 = vst.msk [vmem:[%s4 + $0x1c0] sm:$0xff] %vm652, %v1314
  %1379 = vst.msk [vmem:[%s4 + $0x1c8] sm:$0xff] %vm652, %v1315
  %1380 = vst.msk [vmem:[%s4 + $0x1d0] sm:$0xff] %vm652, %v1316
  %1381 = vst.msk [vmem:[%s4 + $0x1d8] sm:$0xff] %vm652, %v1317
  %1382 = vst.msk [vmem:[%s4 + $0x1e0] sm:$0xff] %vm652, %v1318
  %1383 = vst.msk [vmem:[%s4 + $0x1e8] sm:$0xff] %vm652, %v1319
  %1384 = vst.msk [vmem:[%s4 + $0x1f0] sm:$0xff] %vm652, %v1320
  %1385 = vst.msk [vmem:[%s4 + $0x1f8] sm:$0xff] %vm652, %v1321
  // Predicated region
  $region18: #{double_conv_forward.2} parent=0 // pred_check
    _
  $region19: #{double_conv_forward.2} parent=0 // pred_check_branch
    %1387 = sbr.rel (0) target = $region21
  $region20: #{double_conv_forward.2} parent=0 // pred_region
    _
  $region21: #{double_conv_forward.2} parent=0 // pred_fallthru
    _
  // Predicated region
  $region22: #{double_conv_forward.2} parent=0 // pred_check
    _
  $region23: #{double_conv_forward.2} parent=0 // pred_check_branch
    %1389 = sbr.rel (0) target = $region25
  $region24: #{double_conv_forward.2} parent=0 // pred_region
    _
  $region25: #{double_conv_forward.2} parent=0 // pred_fallthru
    _

// kernel: double_conv_forward.3
$region0: #{double_conv_forward.3}
  #allocation0 [shape = 'u32[]', space=smem, size = 0x4, offset = 0x4, fixed_abs, tag = 'smem constant byte address 0x4 - core index']
  #allocation1 [shape = 'u32[144,128]{1,0:T(1,128)}', space=vmem, size = 0x12000, scoped, tag = 'internal scratch']
  %s0 = inlined_call_operand.vmem [shape: bf16[512,288], index: 0, kind: input, shape index: {}]
  %s1 = inlined_call_operand.vmem [shape: bf16[288,64], index: 1, kind: input, shape index: {}]
  %s2 = inlined_call_operand.vmem [shape: f32[1,64], index: 2, kind: input, shape index: {}]
  %s3 = inlined_call_operand.vmem [shape: f32[1,64], index: 3, kind: input, shape index: {}]
  %s4 = inlined_call_operand.hbm [shape: f32[512,64], index: 4, kind: output, shape index: {}]
  %s5 = sld [smem:[#allocation0]]
  $region26: #{double_conv_forward.3} parent=0
    _
  %s7 = ssub.s32 1, %s5
  %s8 = scalar_select 0, %s7, %s5
  $region1: #{double_conv_forward.3} parent=0
    #allocation2 [shape = 'u8[262144]{0}', space=vmem, size = 0x40000, scoped, tag = 'output window, operand 0, single buffered']
    #allocation3 [shape = 's32[1]{0}', space=sflag, size = 0x4, scoped, tag = 'scoped memory for double_conv_forward.3']
    %9 = vsyncpa [#allocation3], 0
    // Predicated region
    $region2: #{double_conv_forward.3} parent=1 // pred_check
      _
    $region3: #{double_conv_forward.3} parent=1 // pred_check_branch
      %11 = sbr.rel (0) target = $region5
    $region4: #{double_conv_forward.3} parent=1 // pred_region
      _
    $region5: #{double_conv_forward.3} parent=1 // pred_fallthru
      _
    // Predicated region
    $region6: #{double_conv_forward.3} parent=1 // pred_check
      _
    $region7: #{double_conv_forward.3} parent=1 // pred_check_branch
      %13 = sbr.rel (0) target = $region9
    $region8: #{double_conv_forward.3} parent=1 // pred_region
      _
    $region9: #{double_conv_forward.3} parent=1 // pred_fallthru
      _
    // Predicated region
    $region10: #{double_conv_forward.3} parent=1 // pred_check
      _
    $region11: #{double_conv_forward.3} parent=1 // pred_check_branch
      %15 = sbr.rel (0) target = $region13
    $region12: #{double_conv_forward.3} parent=1 // pred_region
      _
    $region13: #{double_conv_forward.3} parent=1 // pred_fallthru
      _
    // Predicated region
    $region14: #{double_conv_forward.3} parent=1 // pred_check
      _
    $region15: #{double_conv_forward.3} parent=1 // pred_check_branch
      %17 = sbr.rel (0) target = $region17
    $region16: #{double_conv_forward.3} parent=1 // pred_region
      _
    $region17: #{double_conv_forward.3} parent=1 // pred_fallthru
      _
    %v19 = vld [vmem:[%s0] sm:$0xff]
    %v20 = vld [vmem:[%s0 + $0x8] sm:$0xf]
    %v21 = vld [vmem:[%s0 + $0xc] sm:$0xff]
    %v22 = vld [vmem:[%s0 + $0x14] sm:$0xf]
    %v23 = vld [vmem:[%s0 + $0x18] sm:$0xff]
    %v24 = vld [vmem:[%s0 + $0x20] sm:$0xf]
    %v25 = vld [vmem:[%s0 + $0x24] sm:$0xff]
    %v26 = vld [vmem:[%s0 + $0x2c] sm:$0xf]
    %v27 = vld [vmem:[%s0 + $0x30] sm:$0xff]
    %v28 = vld [vmem:[%s0 + $0x38] sm:$0xf]
    %v29 = vld [vmem:[%s0 + $0x3c] sm:$0xff]
    %v30 = vld [vmem:[%s0 + $0x44] sm:$0xf]
    %v31 = vld [vmem:[%s0 + $0x48] sm:$0xff]
    %v32 = vld [vmem:[%s0 + $0x50] sm:$0xf]
    %v33 = vld [vmem:[%s0 + $0x54] sm:$0xff]
    %v34 = vld [vmem:[%s0 + $0x5c] sm:$0xf]
    %v35 = vld [vmem:[%s0 + $0x60] sm:$0xff]
    %v36 = vld [vmem:[%s0 + $0x68] sm:$0xf]
    %v37 = vld [vmem:[%s0 + $0x6c] sm:$0xff]
    %v38 = vld [vmem:[%s0 + $0x74] sm:$0xf]
    %v39 = vld [vmem:[%s0 + $0x78] sm:$0xff]
    %v40 = vld [vmem:[%s0 + $0x80] sm:$0xf]
    %v41 = vld [vmem:[%s0 + $0x84] sm:$0xff]
    %v42 = vld [vmem:[%s0 + $0x8c] sm:$0xf]
    %v43 = vld [vmem:[%s0 + $0x90] sm:$0xff]
    %v44 = vld [vmem:[%s0 + $0x98] sm:$0xf]
    %v45 = vld [vmem:[%s0 + $0x9c] sm:$0xff]
    %v46 = vld [vmem:[%s0 + $0xa4] sm:$0xf]
    %v47 = vld [vmem:[%s0 + $0xa8] sm:$0xff]
    %v48 = vld [vmem:[%s0 + $0xb0] sm:$0xf]
    %v49 = vld [vmem:[%s0 + $0xb4] sm:$0xff]
    %v50 = vld [vmem:[%s0 + $0xbc] sm:$0xf]
    %v51 = vld [vmem:[%s0 + $0xc0] sm:$0xff]
    %v52 = vld [vmem:[%s0 + $0xc8] sm:$0xf]
    %v53 = vld [vmem:[%s0 + $0xcc] sm:$0xff]
    %v54 = vld [vmem:[%s0 + $0xd4] sm:$0xf]
    %v55 = vld [vmem:[%s0 + $0xd8] sm:$0xff]
    %v56 = vld [vmem:[%s0 + $0xe0] sm:$0xf]
    %v57 = vld [vmem:[%s0 + $0xe4] sm:$0xff]
    %v58 = vld [vmem:[%s0 + $0xec] sm:$0xf]
    %v59 = vld [vmem:[%s0 + $0xf0] sm:$0xff]
    %v60 = vld [vmem:[%s0 + $0xf8] sm:$0xf]
    %v61 = vld [vmem:[%s0 + $0xfc] sm:$0xff]
    %v62 = vld [vmem:[%s0 + $0x104] sm:$0xf]
    %v63 = vld [vmem:[%s0 + $0x108] sm:$0xff]
    %v64 = vld [vmem:[%s0 + $0x110] sm:$0xf]
    %v65 = vld [vmem:[%s0 + $0x114] sm:$0xff]
    %v66 = vld [vmem:[%s0 + $0x11c] sm:$0xf]
    %v67 = vld [vmem:[%s0 + $0x120] sm:$0xff]
    %v68 = vld [vmem:[%s0 + $0x128] sm:$0xf]
    %v69 = vld [vmem:[%s0 + $0x12c] sm:$0xff]
    %v70 = vld [vmem:[%s0 + $0x134] sm:$0xf]
    %v71 = vld [vmem:[%s0 + $0x138] sm:$0xff]
    %v72 = vld [vmem:[%s0 + $0x140] sm:$0xf]
    %v73 = vld [vmem:[%s0 + $0x144] sm:$0xff]
    %v74 = vld [vmem:[%s0 + $0x14c] sm:$0xf]
    %v75 = vld [vmem:[%s0 + $0x150] sm:$0xff]
    %v76 = vld [vmem:[%s0 + $0x158] sm:$0xf]
    %v77 = vld [vmem:[%s0 + $0x15c] sm:$0xff]
    %v78 = vld [vmem:[%s0 + $0x164] sm:$0xf]
    %v79 = vld [vmem:[%s0 + $0x168] sm:$0xff]
    %v80 = vld [vmem:[%s0 + $0x170] sm:$0xf]
    %v81 = vld [vmem:[%s0 + $0x174] sm:$0xff]
    %v82 = vld [vmem:[%s0 + $0x17c] sm:$0xf]
    %v83 = vld [vmem:[%s0 + $0x180] sm:$0xff]
    %v84 = vld [vmem:[%s0 + $0x188] sm:$0xf]
    %v85 = vld [vmem:[%s0 + $0x18c] sm:$0xff]
    %v86 = vld [vmem:[%s0 + $0x194] sm:$0xf]
    %v87 = vld [vmem:[%s0 + $0x198] sm:$0xff]
    %v88 = vld [vmem:[%s0 + $0x1a0] sm:$0xf]
    %v89 = vld [vmem:[%s0 + $0x1a4] sm:$0xff]
    %v90 = vld [vmem:[%s0 + $0x1ac] sm:$0xf]
    %v91 = vld [vmem:[%s0 + $0x1b0] sm:$0xff]
    %v92 = vld [vmem:[%s0 + $0x1b8] sm:$0xf]
    %v93 = vld [vmem:[%s0 + $0x1bc] sm:$0xff]
    %v94 = vld [vmem:[%s0 + $0x1c4] sm:$0xf]
    %v95 = vld [vmem:[%s0 + $0x1c8] sm:$0xff]
    %v96 = vld [vmem:[%s0 + $0x1d0] sm:$0xf]
    %v97 = vld [vmem:[%s0 + $0x1d4] sm:$0xff]
    %v98 = vld [vmem:[%s0 + $0x1dc] sm:$0xf]
    %v99 = vld [vmem:[%s0 + $0x1e0] sm:$0xff]
    %v100 = vld [vmem:[%s0 + $0x1e8] sm:$0xf]
    %v101 = vld [vmem:[%s0 + $0x1ec] sm:$0xff]
    %v102 = vld [vmem:[%s0 + $0x1f4] sm:$0xf]
    %v103 = vld [vmem:[%s0 + $0x1f8] sm:$0xff]
    %v104 = vld [vmem:[%s0 + $0x200] sm:$0xf]
    %v105 = vld [vmem:[%s0 + $0x204] sm:$0xff]
    %v106 = vld [vmem:[%s0 + $0x20c] sm:$0xf]
    %v107 = vld [vmem:[%s0 + $0x210] sm:$0xff]
    %v108 = vld [vmem:[%s0 + $0x218] sm:$0xf]
    %v109 = vld [vmem:[%s0 + $0x21c] sm:$0xff]
    %v110 = vld [vmem:[%s0 + $0x224] sm:$0xf]
    %v111 = vld [vmem:[%s0 + $0x228] sm:$0xff]
    %v112 = vld [vmem:[%s0 + $0x230] sm:$0xf]
    %v113 = vld [vmem:[%s0 + $0x234] sm:$0xff]
    %v114 = vld [vmem:[%s0 + $0x23c] sm:$0xf]
    %v115 = vld [vmem:[%s0 + $0x240] sm:$0xff]
    %v116 = vld [vmem:[%s0 + $0x248] sm:$0xf]
    %v117 = vld [vmem:[%s0 + $0x24c] sm:$0xff]
    %v118 = vld [vmem:[%s0 + $0x254] sm:$0xf]
    %v119 = vld [vmem:[%s0 + $0x258] sm:$0xff]
    %v120 = vld [vmem:[%s0 + $0x260] sm:$0xf]
    %v121 = vld [vmem:[%s0 + $0x264] sm:$0xff]
    %v122 = vld [vmem:[%s0 + $0x26c] sm:$0xf]
    %v123 = vld [vmem:[%s0 + $0x270] sm:$0xff]
    %v124 = vld [vmem:[%s0 + $0x278] sm:$0xf]
    %v125 = vld [vmem:[%s0 + $0x27c] sm:$0xff]
    %v126 = vld [vmem:[%s0 + $0x284] sm:$0xf]
    %v127 = vld [vmem:[%s0 + $0x288] sm:$0xff]
    %v128 = vld [vmem:[%s0 + $0x290] sm:$0xf]
    %v129 = vld [vmem:[%s0 + $0x294] sm:$0xff]
    %v130 = vld [vmem:[%s0 + $0x29c] sm:$0xf]
    %v131 = vld [vmem:[%s0 + $0x2a0] sm:$0xff]
    %v132 = vld [vmem:[%s0 + $0x2a8] sm:$0xf]
    %v133 = vld [vmem:[%s0 + $0x2ac] sm:$0xff]
    %v134 = vld [vmem:[%s0 + $0x2b4] sm:$0xf]
    %v135 = vld [vmem:[%s0 + $0x2b8] sm:$0xff]
    %v136 = vld [vmem:[%s0 + $0x2c0] sm:$0xf]
    %v137 = vld [vmem:[%s0 + $0x2c4] sm:$0xff]
    %v138 = vld [vmem:[%s0 + $0x2cc] sm:$0xf]
    %v139 = vld [vmem:[%s0 + $0x2d0] sm:$0xff]
    %v140 = vld [vmem:[%s0 + $0x2d8] sm:$0xf]
    %v141 = vld [vmem:[%s0 + $0x2dc] sm:$0xff]
    %v142 = vld [vmem:[%s0 + $0x2e4] sm:$0xf]
    %v143 = vld [vmem:[%s0 + $0x2e8] sm:$0xff]
    %v144 = vld [vmem:[%s0 + $0x2f0] sm:$0xf]
    %v145 = vld [vmem:[%s0 + $0x2f4] sm:$0xff]
    %v146 = vld [vmem:[%s0 + $0x2fc] sm:$0xf]
    %v147 = vld [vmem:[%s1] sm:$0xf]
    %v148 = vld [vmem:[%s1 + $0x4] sm:$0xf]
    %v149 = vld [vmem:[%s1 + $0x8] sm:$0xf]
    %v150 = vld [vmem:[%s1 + $0xc] sm:$0xf]
    %v151 = vld [vmem:[%s1 + $0x10] sm:$0xf]
    %v152 = vld [vmem:[%s1 + $0x14] sm:$0xf]
    %v153 = vld [vmem:[%s1 + $0x18] sm:$0xf]
    %v154 = vld [vmem:[%s1 + $0x1c] sm:$0xf]
    %v155 = vld [vmem:[%s1 + $0x20] sm:$0xf]
    %v156 = vld [vmem:[%s1 + $0x24] sm:$0xf]
    %v157 = vld [vmem:[%s1 + $0x28] sm:$0xf]
    %v158 = vld [vmem:[%s1 + $0x2c] sm:$0xf]
    %v159 = vld [vmem:[%s1 + $0x30] sm:$0xf]
    %v160 = vld [vmem:[%s1 + $0x34] sm:$0xf]
    %v161 = vld [vmem:[%s1 + $0x38] sm:$0xf]
    %v162 = vld [vmem:[%s1 + $0x3c] sm:$0xf]
    %v163 = vld [vmem:[%s1 + $0x40] sm:$0xf]
    %v164 = vld [vmem:[%s1 + $0x44] sm:$0xf]
    %v165 = vld [vmem:[%s1 + $0x48] sm:$0xf]
    %v166 = vld [vmem:[%s1 + $0x4c] sm:$0xf]
    %v167 = vld [vmem:[%s1 + $0x50] sm:$0xf]
    %v168 = vld [vmem:[%s1 + $0x54] sm:$0xf]
    %v169 = vld [vmem:[%s1 + $0x58] sm:$0xf]
    %v170 = vld [vmem:[%s1 + $0x5c] sm:$0xf]
    %v171 = vld [vmem:[%s1 + $0x60] sm:$0xf]
    %v172 = vld [vmem:[%s1 + $0x64] sm:$0xf]
    %v173 = vld [vmem:[%s1 + $0x68] sm:$0xf]
    %v174 = vld [vmem:[%s1 + $0x6c] sm:$0xf]
    %v175 = vld [vmem:[%s1 + $0x70] sm:$0xf]
    %v176 = vld [vmem:[%s1 + $0x74] sm:$0xf]
    %v177 = vld [vmem:[%s1 + $0x78] sm:$0xf]
    %v178 = vld [vmem:[%s1 + $0x7c] sm:$0xf]
    %v179 = vld [vmem:[%s1 + $0x80] sm:$0xf]
    %v180 = vld [vmem:[%s1 + $0x84] sm:$0xf]
    %v181 = vld [vmem:[%s1 + $0x88] sm:$0xf]
    %v182 = vld [vmem:[%s1 + $0x8c] sm:$0xf]
    %v311 = vunpack.c.l.b16 %v19
    %v312 = vunpack.c.h.b16 %v19
    %v313 = vunpack.c.l.b16 %v20
    %v314 = vunpack.c.l.b16 %v21
    %v315 = vunpack.c.h.b16 %v21
    %v316 = vunpack.c.l.b16 %v22
    %v317 = vunpack.c.l.b16 %v23
    %v318 = vunpack.c.h.b16 %v23
    %v319 = vunpack.c.l.b16 %v24
    %v320 = vunpack.c.l.b16 %v25
    %v321 = vunpack.c.h.b16 %v25
    %v322 = vunpack.c.l.b16 %v26
    %v323 = vunpack.c.l.b16 %v27
    %v324 = vunpack.c.h.b16 %v27
    %v325 = vunpack.c.l.b16 %v28
    %v326 = vunpack.c.l.b16 %v29
    %v327 = vunpack.c.h.b16 %v29
    %v328 = vunpack.c.l.b16 %v30
    %v329 = vunpack.c.l.b16 %v31
    %v330 = vunpack.c.h.b16 %v31
    %v331 = vunpack.c.l.b16 %v32
    %v332 = vunpack.c.l.b16 %v33
    %v333 = vunpack.c.h.b16 %v33
    %v334 = vunpack.c.l.b16 %v34
    %v335 = vunpack.c.l.b16 %v35
    %v336 = vunpack.c.h.b16 %v35
    %v337 = vunpack.c.l.b16 %v36
    %v338 = vunpack.c.l.b16 %v37
    %v339 = vunpack.c.h.b16 %v37
    %v340 = vunpack.c.l.b16 %v38
    %v341 = vunpack.c.l.b16 %v39
    %v342 = vunpack.c.h.b16 %v39
    %v343 = vunpack.c.l.b16 %v40
    %v344 = vunpack.c.l.b16 %v41
    %v345 = vunpack.c.h.b16 %v41
    %v346 = vunpack.c.l.b16 %v42
    %v347 = vunpack.c.l.b16 %v43
    %v348 = vunpack.c.h.b16 %v43
    %v349 = vunpack.c.l.b16 %v44
    %v350 = vunpack.c.l.b16 %v45
    %v351 = vunpack.c.h.b16 %v45
    %v352 = vunpack.c.l.b16 %v46
    %v353 = vunpack.c.l.b16 %v47
    %v354 = vunpack.c.h.b16 %v47
    %v355 = vunpack.c.l.b16 %v48
    %v356 = vunpack.c.l.b16 %v49
    %v357 = vunpack.c.h.b16 %v49
    %v358 = vunpack.c.l.b16 %v50
    %v359 = vunpack.c.l.b16 %v51
    %v360 = vunpack.c.h.b16 %v51
    %v361 = vunpack.c.l.b16 %v52
    %v362 = vunpack.c.l.b16 %v53
    %v363 = vunpack.c.h.b16 %v53
    %v364 = vunpack.c.l.b16 %v54
    %v365 = vunpack.c.l.b16 %v55
    %v366 = vunpack.c.h.b16 %v55
    %v367 = vunpack.c.l.b16 %v56
    %v368 = vunpack.c.l.b16 %v57
    %v369 = vunpack.c.h.b16 %v57
    %v370 = vunpack.c.l.b16 %v58
    %v371 = vunpack.c.l.b16 %v59
    %v372 = vunpack.c.h.b16 %v59
    %v373 = vunpack.c.l.b16 %v60
    %v374 = vunpack.c.l.b16 %v61
    %v375 = vunpack.c.h.b16 %v61
    %v376 = vunpack.c.l.b16 %v62
    %v377 = vunpack.c.l.b16 %v63
    %v378 = vunpack.c.h.b16 %v63
    %v379 = vunpack.c.l.b16 %v64
    %v380 = vunpack.c.l.b16 %v65
    %v381 = vunpack.c.h.b16 %v65
    %v382 = vunpack.c.l.b16 %v66
    %v383 = vunpack.c.l.b16 %v67
    %v384 = vunpack.c.h.b16 %v67
    %v385 = vunpack.c.l.b16 %v68
    %v386 = vunpack.c.l.b16 %v69
    %v387 = vunpack.c.h.b16 %v69
    %v388 = vunpack.c.l.b16 %v70
    %v389 = vunpack.c.l.b16 %v71
    %v390 = vunpack.c.h.b16 %v71
    %v391 = vunpack.c.l.b16 %v72
    %v392 = vunpack.c.l.b16 %v73
    %v393 = vunpack.c.h.b16 %v73
    %v394 = vunpack.c.l.b16 %v74
    %v395 = vunpack.c.l.b16 %v75
    %v396 = vunpack.c.h.b16 %v75
    %v397 = vunpack.c.l.b16 %v76
    %v398 = vunpack.c.l.b16 %v77
    %v399 = vunpack.c.h.b16 %v77
    %v400 = vunpack.c.l.b16 %v78
    %v401 = vunpack.c.l.b16 %v79
    %v402 = vunpack.c.h.b16 %v79
    %v403 = vunpack.c.l.b16 %v80
    %v404 = vunpack.c.l.b16 %v81
    %v405 = vunpack.c.h.b16 %v81
    %v406 = vunpack.c.l.b16 %v82
    %v407 = vunpack.c.l.b16 %v83
    %v408 = vunpack.c.h.b16 %v83
    %v409 = vunpack.c.l.b16 %v84
    %v410 = vunpack.c.l.b16 %v85
    %v411 = vunpack.c.h.b16 %v85
    %v412 = vunpack.c.l.b16 %v86
    %v413 = vunpack.c.l.b16 %v87
    %v414 = vunpack.c.h.b16 %v87
    %v415 = vunpack.c.l.b16 %v88
    %v416 = vunpack.c.l.b16 %v89
    %v417 = vunpack.c.h.b16 %v89
    %v418 = vunpack.c.l.b16 %v90
    %v419 = vunpack.c.l.b16 %v91
    %v420 = vunpack.c.h.b16 %v91
    %v421 = vunpack.c.l.b16 %v92
    %v422 = vunpack.c.l.b16 %v93
    %v423 = vunpack.c.h.b16 %v93
    %v424 = vunpack.c.l.b16 %v94
    %v425 = vunpack.c.l.b16 %v95
    %v426 = vunpack.c.h.b16 %v95
    %v427 = vunpack.c.l.b16 %v96
    %v428 = vunpack.c.l.b16 %v97
    %v429 = vunpack.c.h.b16 %v97
    %v430 = vunpack.c.l.b16 %v98
    %v431 = vunpack.c.l.b16 %v99
    %v432 = vunpack.c.h.b16 %v99
    %v433 = vunpack.c.l.b16 %v100
    %v434 = vunpack.c.l.b16 %v101
    %v435 = vunpack.c.h.b16 %v101
    %v436 = vunpack.c.l.b16 %v102
    %v437 = vunpack.c.l.b16 %v103
    %v438 = vunpack.c.h.b16 %v103
    %v439 = vunpack.c.l.b16 %v104
    %v440 = vunpack.c.l.b16 %v105
    %v441 = vunpack.c.h.b16 %v105
    %v442 = vunpack.c.l.b16 %v106
    %v443 = vunpack.c.l.b16 %v107
    %v444 = vunpack.c.h.b16 %v107
    %v445 = vunpack.c.l.b16 %v108
    %v446 = vunpack.c.l.b16 %v109
    %v447 = vunpack.c.h.b16 %v109
    %v448 = vunpack.c.l.b16 %v110
    %v449 = vunpack.c.l.b16 %v111
    %v450 = vunpack.c.h.b16 %v111
    %v451 = vunpack.c.l.b16 %v112
    %v452 = vunpack.c.l.b16 %v113
    %v453 = vunpack.c.h.b16 %v113
    %v454 = vunpack.c.l.b16 %v114
    %v455 = vunpack.c.l.b16 %v115
    %v456 = vunpack.c.h.b16 %v115
    %v457 = vunpack.c.l.b16 %v116
    %v458 = vunpack.c.l.b16 %v117
    %v459 = vunpack.c.h.b16 %v117
    %v460 = vunpack.c.l.b16 %v118
    %v461 = vunpack.c.l.b16 %v119
    %v462 = vunpack.c.h.b16 %v119
    %v463 = vunpack.c.l.b16 %v120
    %v464 = vunpack.c.l.b16 %v121
    %v465 = vunpack.c.h.b16 %v121
    %v466 = vunpack.c.l.b16 %v122
    %v467 = vunpack.c.l.b16 %v123
    %v468 = vunpack.c.h.b16 %v123
    %v469 = vunpack.c.l.b16 %v124
    %v470 = vunpack.c.l.b16 %v125
    %v471 = vunpack.c.h.b16 %v125
    %v472 = vunpack.c.l.b16 %v126
    %v473 = vunpack.c.l.b16 %v127
    %v474 = vunpack.c.h.b16 %v127
    %v475 = vunpack.c.l.b16 %v128
    %v476 = vunpack.c.l.b16 %v129
    %v477 = vunpack.c.h.b16 %v129
    %v478 = vunpack.c.l.b16 %v130
    %v479 = vunpack.c.l.b16 %v131
    %v480 = vunpack.c.h.b16 %v131
    %v481 = vunpack.c.l.b16 %v132
    %v482 = vunpack.c.l.b16 %v133
    %v483 = vunpack.c.h.b16 %v133
    %v484 = vunpack.c.l.b16 %v134
    %v485 = vunpack.c.l.b16 %v135
    %v486 = vunpack.c.h.b16 %v135
    %v487 = vunpack.c.l.b16 %v136
    %v488 = vunpack.c.l.b16 %v137
    %v489 = vunpack.c.h.b16 %v137
    %v490 = vunpack.c.l.b16 %v138
    %v491 = vunpack.c.l.b16 %v139
    %v492 = vunpack.c.h.b16 %v139
    %v493 = vunpack.c.l.b16 %v140
    %v494 = vunpack.c.l.b16 %v141
    %v495 = vunpack.c.h.b16 %v141
    %v496 = vunpack.c.l.b16 %v142
    %v497 = vunpack.c.l.b16 %v143
    %v498 = vunpack.c.h.b16 %v143
    %v499 = vunpack.c.l.b16 %v144
    %v500 = vunpack.c.l.b16 %v145
    %v501 = vunpack.c.h.b16 %v145
    %v502 = vunpack.c.l.b16 %v146
    %v503 = vpack.c.b16 %v314, %v311
    %v504 = vpack.c.b16 %v315, %v312
    %v505 = vpack.c.b16 %v316, %v313
    %v506 = vpack.c.b16 %v320, %v317
    %v507 = vpack.c.b16 %v321, %v318
    %v508 = vpack.c.b16 %v322, %v319
    %v509 = vpack.c.b16 %v326, %v323
    %v510 = vpack.c.b16 %v327, %v324
    %v511 = vpack.c.b16 %v328, %v325
    %v512 = vpack.c.b16 %v332, %v329
    %v513 = vpack.c.b16 %v333, %v330
    %v514 = vpack.c.b16 %v334, %v331
    %v515 = vpack.c.b16 %v338, %v335
    %v516 = vpack.c.b16 %v339, %v336
    %v517 = vpack.c.b16 %v340, %v337
    %v518 = vpack.c.b16 %v344, %v341
    %v519 = vpack.c.b16 %v345, %v342
    %v520 = vpack.c.b16 %v346, %v343
    %v521 = vpack.c.b16 %v350, %v347
    %v522 = vpack.c.b16 %v351, %v348
    %v523 = vpack.c.b16 %v352, %v349
    %v524 = vpack.c.b16 %v356, %v353
    %v525 = vpack.c.b16 %v357, %v354
    %v526 = vpack.c.b16 %v358, %v355
    %v527 = vpack.c.b16 %v362, %v359
    %v528 = vpack.c.b16 %v363, %v360
    %v529 = vpack.c.b16 %v364, %v361
    %v530 = vpack.c.b16 %v368, %v365
    %v531 = vpack.c.b16 %v369, %v366
    %v532 = vpack.c.b16 %v370, %v367
    %v533 = vpack.c.b16 %v374, %v371
    %v534 = vpack.c.b16 %v375, %v372
    %v535 = vpack.c.b16 %v376, %v373
    %v536 = vpack.c.b16 %v380, %v377
    %v537 = vpack.c.b16 %v381, %v378
    %v538 = vpack.c.b16 %v382, %v379
    %v539 = vpack.c.b16 %v386, %v383
    %v540 = vpack.c.b16 %v387, %v384
    %v541 = vpack.c.b16 %v388, %v385
    %v542 = vpack.c.b16 %v392, %v389
    %v543 = vpack.c.b16 %v393, %v390
    %v544 = vpack.c.b16 %v394, %v391
    %v545 = vpack.c.b16 %v398, %v395
    %v546 = vpack.c.b16 %v399, %v396
    %v547 = vpack.c.b16 %v400, %v397
    %v548 = vpack.c.b16 %v404, %v401
    %v549 = vpack.c.b16 %v405, %v402
    %v550 = vpack.c.b16 %v406, %v403
    %v551 = vpack.c.b16 %v410, %v407
    %v552 = vpack.c.b16 %v411, %v408
    %v553 = vpack.c.b16 %v412, %v409
    %v554 = vpack.c.b16 %v416, %v413
    %v555 = vpack.c.b16 %v417, %v414
    %v556 = vpack.c.b16 %v418, %v415
    %v557 = vpack.c.b16 %v422, %v419
    %v558 = vpack.c.b16 %v423, %v420
    %v559 = vpack.c.b16 %v424, %v421
    %v560 = vpack.c.b16 %v428, %v425
    %v561 = vpack.c.b16 %v429, %v426
    %v562 = vpack.c.b16 %v430, %v427
    %v563 = vpack.c.b16 %v434, %v431
    %v564 = vpack.c.b16 %v435, %v432
    %v565 = vpack.c.b16 %v436, %v433
    %v566 = vpack.c.b16 %v440, %v437
    %v567 = vpack.c.b16 %v441, %v438
    %v568 = vpack.c.b16 %v442, %v439
    %v569 = vpack.c.b16 %v446, %v443
    %v570 = vpack.c.b16 %v447, %v444
    %v571 = vpack.c.b16 %v448, %v445
    %v572 = vpack.c.b16 %v452, %v449
    %v573 = vpack.c.b16 %v453, %v450
    %v574 = vpack.c.b16 %v454, %v451
    %v575 = vpack.c.b16 %v458, %v455
    %v576 = vpack.c.b16 %v459, %v456
    %v577 = vpack.c.b16 %v460, %v457
    %v578 = vpack.c.b16 %v464, %v461
    %v579 = vpack.c.b16 %v465, %v462
    %v580 = vpack.c.b16 %v466, %v463
    %v581 = vpack.c.b16 %v470, %v467
    %v582 = vpack.c.b16 %v471, %v468
    %v583 = vpack.c.b16 %v472, %v469
    %v584 = vpack.c.b16 %v476, %v473
    %v585 = vpack.c.b16 %v477, %v474
    %v586 = vpack.c.b16 %v478, %v475
    %v587 = vpack.c.b16 %v482, %v479
    %v588 = vpack.c.b16 %v483, %v480
    %v589 = vpack.c.b16 %v484, %v481
    %v590 = vpack.c.b16 %v488, %v485
    %v591 = vpack.c.b16 %v489, %v486
    %v592 = vpack.c.b16 %v490, %v487
    %v593 = vpack.c.b16 %v494, %v491
    %v594 = vpack.c.b16 %v495, %v492
    %v595 = vpack.c.b16 %v496, %v493
    %v596 = vpack.c.b16 %v500, %v497
    %v597 = vpack.c.b16 %v501, %v498
    %v598 = vpack.c.b16 %v502, %v499
    %v699 = vunpack.c.l.b16 %v147
    %v700 = vunpack.c.l.b16 %v148
    %v701 = vunpack.c.l.b16 %v149
    %v702 = vunpack.c.l.b16 %v150
    %v703 = vunpack.c.l.b16 %v151
    %v704 = vunpack.c.l.b16 %v152
    %v705 = vunpack.c.l.b16 %v153
    %v706 = vunpack.c.l.b16 %v154
    %v707 = vunpack.c.l.b16 %v155
    %v708 = vunpack.c.l.b16 %v156
    %v709 = vunpack.c.l.b16 %v157
    %v710 = vunpack.c.l.b16 %v158
    %v711 = vunpack.c.l.b16 %v159
    %v712 = vunpack.c.l.b16 %v160
    %v713 = vunpack.c.l.b16 %v161
    %v714 = vunpack.c.l.b16 %v162
    %v715 = vunpack.c.l.b16 %v163
    %v716 = vunpack.c.l.b16 %v164
    %v717 = vunpack.c.l.b16 %v165
    %v718 = vunpack.c.l.b16 %v166
    %v719 = vunpack.c.l.b16 %v167
    %v720 = vunpack.c.l.b16 %v168
    %v721 = vunpack.c.l.b16 %v169
    %v722 = vunpack.c.l.b16 %v170
    %v723 = vunpack.c.l.b16 %v171
    %v724 = vunpack.c.l.b16 %v172
    %v725 = vunpack.c.l.b16 %v173
    %v726 = vunpack.c.l.b16 %v174
    %v727 = vunpack.c.l.b16 %v175
    %v728 = vunpack.c.l.b16 %v176
    %v729 = vunpack.c.l.b16 %v177
    %v730 = vunpack.c.l.b16 %v178
    %v731 = vunpack.c.l.b16 %v179
    %v732 = vunpack.c.l.b16 %v180
    %v733 = vunpack.c.l.b16 %v181
    %v734 = vunpack.c.l.b16 %v182
    %v735 = vpack.c.b16 %v700, %v699
    %v736 = vpack.c.b16 %v702, %v701
    %v737 = vpack.c.b16 %v704, %v703
    %v738 = vpack.c.b16 %v706, %v705
    %v739 = vpack.c.b16 %v708, %v707
    %v740 = vpack.c.b16 %v710, %v709
    %v741 = vpack.c.b16 %v712, %v711
    %v742 = vpack.c.b16 %v714, %v713
    %v743 = vpack.c.b16 %v716, %v715
    %v744 = vpack.c.b16 %v718, %v717
    %v745 = vpack.c.b16 %v720, %v719
    %v746 = vpack.c.b16 %v722, %v721
    %v747 = vpack.c.b16 %v724, %v723
    %v748 = vpack.c.b16 %v726, %v725
    %v749 = vpack.c.b16 %v728, %v727
    %v750 = vpack.c.b16 %v730, %v729
    %v751 = vpack.c.b16 %v732, %v731
    %v752 = vpack.c.b16 %v734, %v733
    %vm771 = vcmask 261120
    %v773 = vsel %vm771, %v505, 0
    %v776 = vsel %vm771, %v508, 0
    %v779 = vsel %vm771, %v511, 0
    %v782 = vsel %vm771, %v514, 0
    %v785 = vsel %vm771, %v517, 0
    %v788 = vsel %vm771, %v520, 0
    %v791 = vsel %vm771, %v523, 0
    %v794 = vsel %vm771, %v526, 0
    %v797 = vsel %vm771, %v529, 0
    %v800 = vsel %vm771, %v532, 0
    %v803 = vsel %vm771, %v535, 0
    %v806 = vsel %vm771, %v538, 0
    %v809 = vsel %vm771, %v541, 0
    %v812 = vsel %vm771, %v544, 0
    %v815 = vsel %vm771, %v547, 0
    %v818 = vsel %vm771, %v550, 0
    %v821 = vsel %vm771, %v553, 0
    %v824 = vsel %vm771, %v556, 0
    %v827 = vsel %vm771, %v559, 0
    %v830 = vsel %vm771, %v562, 0
    %v833 = vsel %vm771, %v565, 0
    %v836 = vsel %vm771, %v568, 0
    %v839 = vsel %vm771, %v571, 0
    %v842 = vsel %vm771, %v574, 0
    %v845 = vsel %vm771, %v577, 0
    %v848 = vsel %vm771, %v580, 0
    %v851 = vsel %vm771, %v583, 0
    %v854 = vsel %vm771, %v586, 0
    %v857 = vsel %vm771, %v589, 0
    %v860 = vsel %vm771, %v592, 0
    %v863 = vsel %vm771, %v595, 0
    %v866 = vsel %vm771, %v598, 0
    %868 = vmatprep.subr.bf16.mxu0 0
    %869 = vmatpush1.bf16.msra.mxu0 %v735
    %870 = vmatprep.subr.bf16.mxu0 0
    %871 = vmatpush1.bf16.msra.mxu0 %v736
    %872 = vmatprep.subr.bf16.mxu0 0
    %873 = vmatpush1.bf16.msra.mxu0 %v737
    %874 = vmatprep.subr.bf16.mxu0 0
    %875 = vmatpush1.bf16.msra.mxu0 %v738
    %876 = vmatprep.subr.bf16.mxu0 0
    %877 = vmatpush1.bf16.msra.mxu0 %v739
    %878 = vmatprep.subr.bf16.mxu0 0
    %879 = vmatpush1.bf16.msra.mxu0 %v740
    %880 = vmatprep.subr.bf16.mxu0 0
    %881 = vmatpush1.bf16.msra.mxu0 %v741
    %882 = vmatprep.subr.bf16.mxu0 0
    %883 = vmatpush1.bf16.msra.mxu0 %v742
    %884 = vmatprep.subr.bf16.mxu0 0
    %885 = vmatpush1.bf16.msra.mxu0 %v743
    %886 = vmatprep.subr.bf16.mxu0 0
    %887 = vmatpush1.bf16.msra.mxu0 %v744
    %888 = vmatprep.subr.bf16.mxu0 0
    %889 = vmatpush1.bf16.msra.mxu0 %v745
    %890 = vmatprep.subr.bf16.mxu0 0
    %891 = vmatpush1.bf16.msra.mxu0 %v746
    %892 = vmatprep.subr.bf16.mxu0 0
    %893 = vmatpush1.bf16.msra.mxu0 %v747
    %894 = vmatprep.subr.bf16.mxu0 0
    %895 = vmatpush1.bf16.msra.mxu0 %v748
    %896 = vmatprep.subr.bf16.mxu0 0
    %897 = vmatpush1.bf16.msra.mxu0 %v749
    %898 = vmatprep.subr.bf16.mxu0 0
    %899 = vmatpush1.bf16.msra.mxu0 %v750
    %900 = vmatprep.mubr.bf16.mxu0 %v504
    %901 = vmatmul.mubr.bf16.gmra.mrb[0].mxu0 %v503
    %v902 = vpop.f32.mrb[0].mxu0
    %v903 = vadd.f32 0.0, %v902
    %v904 = vpop.f32.mrb[0].mxu0
    %v905 = vpop.f32.mrb[0].mxu0
    %v906 = vadd.f32 0.0, %v905
    %v907 = vpop.f32.mrb[0].mxu0
    %908 = vmatprep.mubr.bf16.mxu0 %v507
    %909 = vmatmul.mubr.bf16.gmra.mrb[0].mxu0 %v506
    %v910 = vpop.f32.mrb[0].mxu0
    %v911 = vadd.f32 0.0, %v910
    %v912 = vpop.f32.mrb[0].mxu0
    %v913 = vpop.f32.mrb[0].mxu0
    %v914 = vadd.f32 0.0, %v913
    %v915 = vpop.f32.mrb[0].mxu0
    %916 = vmatprep.mubr.bf16.mxu0 %v510
    %917 = vmatmul.mubr.bf16.gmra.mrb[0].mxu0 %v509
    %v918 = vpop.f32.mrb[0].mxu0
    %v919 = vadd.f32 0.0, %v918
    %v920 = vpop.f32.mrb[0].mxu0
    %v921 = vpop.f32.mrb[0].mxu0
    %v922 = vadd.f32 0.0, %v921
    %v923 = vpop.f32.mrb[0].mxu0
    %924 = vmatprep.mubr.bf16.mxu0 %v513
    %925 = vmatmul.mubr.bf16.gmra.mrb[0].mxu0 %v512
    %v926 = vpop.f32.mrb[0].mxu0
    %v927 = vadd.f32 0.0, %v926
    %v928 = vpop.f32.mrb[0].mxu0
    %v929 = vpop.f32.mrb[0].mxu0
    %v930 = vadd.f32 0.0, %v929
    %v931 = vpop.f32.mrb[0].mxu0
    %932 = vmatprep.mubr.bf16.mxu0 %v516
    %933 = vmatmul.mubr.bf16.gmra.mrb[0].mxu0 %v515
    %v934 = vpop.f32.mrb[0].mxu0
    %v935 = vadd.f32 0.0, %v934
    %v936 = vpop.f32.mrb[0].mxu0
    %v937 = vpop.f32.mrb[0].mxu0
    %v938 = vadd.f32 0.0, %v937
    %v939 = vpop.f32.mrb[0].mxu0
    %940 = vmatprep.mubr.bf16.mxu0 %v519
    %941 = vmatmul.mubr.bf16.gmra.mrb[0].mxu0 %v518
    %v942 = vpop.f32.mrb[0].mxu0
    %v943 = vadd.f32 0.0, %v942
    %v944 = vpop.f32.mrb[0].mxu0
    %v945 = vpop.f32.mrb[0].mxu0
    %v946 = vadd.f32 0.0, %v945
    %v947 = vpop.f32.mrb[0].mxu0
    %948 = vmatprep.mubr.bf16.mxu0 %v522
    %949 = vmatmul.mubr.bf16.gmra.mrb[0].mxu0 %v521
    %v950 = vpop.f32.mrb[0].mxu0
    %v951 = vadd.f32 0.0, %v950
    %v952 = vpop.f32.mrb[0].mxu0
    %v953 = vpop.f32.mrb[0].mxu0
    %v954 = vadd.f32 0.0, %v953
    %v955 = vpop.f32.mrb[0].mxu0
    %956 = vmatprep.mubr.bf16.mxu0 %v525
    %957 = vmatmul.mubr.bf16.gmra.mrb[0].mxu0 %v524
    %v958 = vpop.f32.mrb[0].mxu0
    %v959 = vadd.f32 0.0, %v958
    %v960 = vpop.f32.mrb[0].mxu0
    %v961 = vpop.f32.mrb[0].mxu0
    %v962 = vadd.f32 0.0, %v961
    %v963 = vpop.f32.mrb[0].mxu0
    %964 = vmatprep.mubr.bf16.mxu0 %v528
    %965 = vmatmul.mubr.bf16.gmra.mrb[0].mxu0 %v527
    %v966 = vpop.f32.mrb[0].mxu0
    %v967 = vadd.f32 0.0, %v966
    %v968 = vpop.f32.mrb[0].mxu0
    %v969 = vpop.f32.mrb[0].mxu0
    %v970 = vadd.f32 0.0, %v969
    %v971 = vpop.f32.mrb[0].mxu0
    %972 = vmatprep.mubr.bf16.mxu0 %v531
    %973 = vmatmul.mubr.bf16.gmra.mrb[0].mxu0 %v530
    %v974 = vpop.f32.mrb[0].mxu0
    %v975 = vadd.f32 0.0, %v974
    %v976 = vpop.f32.mrb[0].mxu0
    %v977 = vpop.f32.mrb[0].mxu0
    %v978 = vadd.f32 0.0, %v977
    %v979 = vpop.f32.mrb[0].mxu0
    %980 = vmatprep.mubr.bf16.mxu0 %v534
    %981 = vmatmul.mubr.bf16.gmra.mrb[0].mxu0 %v533
    %v982 = vpop.f32.mrb[0].mxu0
    %v983 = vadd.f32 0.0, %v982
    %v984 = vpop.f32.mrb[0].mxu0
    %v985 = vpop.f32.mrb[0].mxu0
    %v986 = vadd.f32 0.0, %v985
    %v987 = vpop.f32.mrb[0].mxu0
    %988 = vmatprep.mubr.bf16.mxu0 %v537
    %989 = vmatmul.mubr.bf16.gmra.mrb[0].mxu0 %v536
    %v990 = vpop.f32.mrb[0].mxu0
    %v991 = vadd.f32 0.0, %v990
    %v992 = vpop.f32.mrb[0].mxu0
    %v993 = vpop.f32.mrb[0].mxu0
    %v994 = vadd.f32 0.0, %v993
    %v995 = vpop.f32.mrb[0].mxu0
    %996 = vmatprep.mubr.bf16.mxu0 %v540
    %997 = vmatmul.mubr.bf16.gmra.mrb[0].mxu0 %v539
    %v998 = vpop.f32.mrb[0].mxu0
    %v999 = vadd.f32 0.0, %v998
    %v1000 = vpop.f32.mrb[0].mxu0
    %v1001 = vpop.f32.mrb[0].mxu0
    %v1002 = vadd.f32 0.0, %v1001
    %v1003 = vpop.f32.mrb[0].mxu0
    %1004 = vmatprep.mubr.bf16.mxu0 %v543
    %1005 = vmatmul.mubr.bf16.gmra.mrb[0].mxu0 %v542
    %v1006 = vpop.f32.mrb[0].mxu0
    %v1007 = vadd.f32 0.0, %v1006
    %v1008 = vpop.f32.mrb[0].mxu0
    %v1009 = vpop.f32.mrb[0].mxu0
    %v1010 = vadd.f32 0.0, %v1009
    %v1011 = vpop.f32.mrb[0].mxu0
    %1012 = vmatprep.mubr.bf16.mxu0 %v546
    %1013 = vmatmul.mubr.bf16.gmra.mrb[0].mxu0 %v545
    %v1014 = vpop.f32.mrb[0].mxu0
    %v1015 = vadd.f32 0.0, %v1014
    %v1016 = vpop.f32.mrb[0].mxu0
    %v1017 = vpop.f32.mrb[0].mxu0
    %v1018 = vadd.f32 0.0, %v1017
    %v1019 = vpop.f32.mrb[0].mxu0
    %1020 = vmatprep.mubr.bf16.mxu0 %v549
    %1021 = vmatmul.mubr.bf16.gmra.mrb[0].mxu0 %v548
    %v1022 = vpop.f32.mrb[0].mxu0
    %v1023 = vadd.f32 0.0, %v1022
    %v1024 = vpop.f32.mrb[0].mxu0
    %v1025 = vpop.f32.mrb[0].mxu0
    %v1026 = vadd.f32 0.0, %v1025
    %v1027 = vpop.f32.mrb[0].mxu0
    %1028 = vmatprep.mubr.bf16.mxu0 %v552
    %1029 = vmatmul.mubr.bf16.gmra.mrb[0].mxu0 %v551
    %v1030 = vpop.f32.mrb[0].mxu0
    %v1031 = vadd.f32 0.0, %v1030
    %v1032 = vpop.f32.mrb[0].mxu0
    %v1033 = vpop.f32.mrb[0].mxu0
    %v1034 = vadd.f32 0.0, %v1033
    %v1035 = vpop.f32.mrb[0].mxu0
    %1036 = vmatprep.mubr.bf16.mxu0 %v555
    %1037 = vmatmul.mubr.bf16.gmra.mrb[0].mxu0 %v554
    %v1038 = vpop.f32.mrb[0].mxu0
    %v1039 = vadd.f32 0.0, %v1038
    %v1040 = vpop.f32.mrb[0].mxu0
    %v1041 = vpop.f32.mrb[0].mxu0
    %v1042 = vadd.f32 0.0, %v1041
    %v1043 = vpop.f32.mrb[0].mxu0
    %1044 = vmatprep.mubr.bf16.mxu0 %v558
    %1045 = vmatmul.mubr.bf16.gmra.mrb[0].mxu0 %v557
    %v1046 = vpop.f32.mrb[0].mxu0
    %v1047 = vadd.f32 0.0, %v1046
    %v1048 = vpop.f32.mrb[0].mxu0
    %v1049 = vpop.f32.mrb[0].mxu0
    %v1050 = vadd.f32 0.0, %v1049
    %v1051 = vpop.f32.mrb[0].mxu0
    %1052 = vmatprep.mubr.bf16.mxu0 %v561
    %1053 = vmatmul.mubr.bf16.gmra.mrb[0].mxu0 %v560
    %v1054 = vpop.f32.mrb[0].mxu0
    %v1055 = vadd.f32 0.0, %v1054
    %v1056 = vpop.f32.mrb[0].mxu0
    %v1057 = vpop.f32.mrb[0].mxu0
    %v1058 = vadd.f32 0.0, %v1057
    %v1059 = vpop.f32.mrb[0].mxu0
    %1060 = vmatprep.mubr.bf16.mxu0 %v564
    %1061 = vmatmul.mubr.bf16.gmra.mrb[0].mxu0 %v563
    %v1062 = vpop.f32.mrb[0].mxu0
    %v1063 = vadd.f32 0.0, %v1062
    %v1064 = vpop.f32.mrb[0].mxu0
    %v1065 = vpop.f32.mrb[0].mxu0
    %v1066 = vadd.f32 0.0, %v1065
    %v1067 = vpop.f32.mrb[0].mxu0
    %1068 = vmatprep.mubr.bf16.mxu0 %v567
    %1069 = vmatmul.mubr.bf16.gmra.mrb[0].mxu0 %v566
    %v1070 = vpop.f32.mrb[0].mxu0
    %v1071 = vadd.f32 0.0, %v1070
    %v1072 = vpop.f32.mrb[0].mxu0
    %v1073 = vpop.f32.mrb[0].mxu0
    %v1074 = vadd.f32 0.0, %v1073
    %v1075 = vpop.f32.mrb[0].mxu0
    %1076 = vmatprep.mubr.bf16.mxu0 %v570
    %1077 = vmatmul.mubr.bf16.gmra.mrb[0].mxu0 %v569
    %v1078 = vpop.f32.mrb[0].mxu0
    %v1079 = vadd.f32 0.0, %v1078
    %v1080 = vpop.f32.mrb[0].mxu0
    %v1081 = vpop.f32.mrb[0].mxu0
    %v1082 = vadd.f32 0.0, %v1081
    %v1083 = vpop.f32.mrb[0].mxu0
    %1084 = vmatprep.mubr.bf16.mxu0 %v573
    %1085 = vmatmul.mubr.bf16.gmra.mrb[0].mxu0 %v572
    %v1086 = vpop.f32.mrb[0].mxu0
    %v1087 = vadd.f32 0.0, %v1086
    %v1088 = vpop.f32.mrb[0].mxu0
    %v1089 = vpop.f32.mrb[0].mxu0
    %v1090 = vadd.f32 0.0, %v1089
    %v1091 = vpop.f32.mrb[0].mxu0
    %1092 = vmatprep.mubr.bf16.mxu0 %v576
    %1093 = vmatmul.mubr.bf16.gmra.mrb[0].mxu0 %v575
    %v1094 = vpop.f32.mrb[0].mxu0
    %v1095 = vadd.f32 0.0, %v1094
    %v1096 = vpop.f32.mrb[0].mxu0
    %v1097 = vpop.f32.mrb[0].mxu0
    %v1098 = vadd.f32 0.0, %v1097
    %v1099 = vpop.f32.mrb[0].mxu0
    %1100 = vmatprep.mubr.bf16.mxu0 %v579
    %1101 = vmatmul.mubr.bf16.gmra.mrb[0].mxu0 %v578
    %v1102 = vpop.f32.mrb[0].mxu0
    %v1103 = vadd.f32 0.0, %v1102
    %v1104 = vpop.f32.mrb[0].mxu0
    %v1105 = vpop.f32.mrb[0].mxu0
    %v1106 = vadd.f32 0.0, %v1105
    %v1107 = vpop.f32.mrb[0].mxu0
    %1108 = vmatprep.mubr.bf16.mxu0 %v582
    %1109 = vmatmul.mubr.bf16.gmra.mrb[0].mxu0 %v581
    %v1110 = vpop.f32.mrb[0].mxu0
    %v1111 = vadd.f32 0.0, %v1110
    %v1112 = vpop.f32.mrb[0].mxu0
    %v1113 = vpop.f32.mrb[0].mxu0
    %v1114 = vadd.f32 0.0, %v1113
    %v1115 = vpop.f32.mrb[0].mxu0
    %1116 = vmatprep.mubr.bf16.mxu0 %v585
    %1117 = vmatmul.mubr.bf16.gmra.mrb[0].mxu0 %v584
    %v1118 = vpop.f32.mrb[0].mxu0
    %v1119 = vadd.f32 0.0, %v1118
    %v1120 = vpop.f32.mrb[0].mxu0
    %v1121 = vpop.f32.mrb[0].mxu0
    %v1122 = vadd.f32 0.0, %v1121
    %v1123 = vpop.f32.mrb[0].mxu0
    %1124 = vmatprep.mubr.bf16.mxu0 %v588
    %1125 = vmatmul.mubr.bf16.gmra.mrb[0].mxu0 %v587
    %v1126 = vpop.f32.mrb[0].mxu0
    %v1127 = vadd.f32 0.0, %v1126
    %v1128 = vpop.f32.mrb[0].mxu0
    %v1129 = vpop.f32.mrb[0].mxu0
    %v1130 = vadd.f32 0.0, %v1129
    %v1131 = vpop.f32.mrb[0].mxu0
    %1132 = vmatprep.mubr.bf16.mxu0 %v591
    %1133 = vmatmul.mubr.bf16.gmra.mrb[0].mxu0 %v590
    %v1134 = vpop.f32.mrb[0].mxu0
    %v1135 = vadd.f32 0.0, %v1134
    %v1136 = vpop.f32.mrb[0].mxu0
    %v1137 = vpop.f32.mrb[0].mxu0
    %v1138 = vadd.f32 0.0, %v1137
    %v1139 = vpop.f32.mrb[0].mxu0
    %1140 = vmatprep.mubr.bf16.mxu0 %v594
    %1141 = vmatmul.mubr.bf16.gmra.mrb[0].mxu0 %v593
    %v1142 = vpop.f32.mrb[0].mxu0
    %v1143 = vadd.f32 0.0, %v1142
    %v1144 = vpop.f32.mrb[0].mxu0
    %v1145 = vpop.f32.mrb[0].mxu0
    %v1146 = vadd.f32 0.0, %v1145
    %v1147 = vpop.f32.mrb[0].mxu0
    %1148 = vmatprep.mubr.bf16.mxu0 %v597
    %1149 = vmatmul.mubr.bf16.gmra.mrb[0].mxu0 %v596
    %v1150 = vpop.f32.mrb[0].mxu0
    %v1151 = vadd.f32 0.0, %v1150
    %v1152 = vpop.f32.mrb[0].mxu0
    %v1153 = vpop.f32.mrb[0].mxu0
    %v1154 = vadd.f32 0.0, %v1153
    %v1155 = vpop.f32.mrb[0].mxu0
    %1156 = vdwg.mxu0
    %1157 = vmatprep.subr.bf16.mxu0 0
    %1158 = vmatpush1.bf16.msra.mxu0 %v751
    %1159 = vmatprep.subr.bf16.mxu0 0
    %1160 = vmatpush1.bf16.msra.mxu0 %v752
    %1161 = vmatprep.subr.bf16.mxu0 0
    %1162 = vmatpush1.bf16.msra.mxu0 0
    %1163 = vmatprep.subr.bf16.mxu0 0
    %1164 = vmatpush1.bf16.msra.mxu0 0
    %1165 = vmatprep.subr.bf16.mxu0 0
    %1166 = vmatpush1.bf16.msra.mxu0 0
    %1167 = vmatprep.subr.bf16.mxu0 0
    %1168 = vmatpush1.bf16.msra.mxu0 0
    %1169 = vmatprep.subr.bf16.mxu0 0
    %1170 = vmatpush1.bf16.msra.mxu0 0
    %1171 = vmatprep.subr.bf16.mxu0 0
    %1172 = vmatpush1.bf16.msra.mxu0 0
    %1173 = vmatprep.subr.bf16.mxu0 0
    %1174 = vmatpush1.bf16.msra.mxu0 0
    %1175 = vmatprep.subr.bf16.mxu0 0
    %1176 = vmatpush1.bf16.msra.mxu0 0
    %1177 = vmatprep.subr.bf16.mxu0 0
    %1178 = vmatpush1.bf16.msra.mxu0 0
    %1179 = vmatprep.subr.bf16.mxu0 0
    %1180 = vmatpush1.bf16.msra.mxu0 0
    %1181 = vmatprep.subr.bf16.mxu0 0
    %1182 = vmatpush1.bf16.msra.mxu0 0
    %1183 = vmatprep.subr.bf16.mxu0 0
    %1184 = vmatpush1.bf16.msra.mxu0 0
    %1185 = vmatprep.subr.bf16.mxu0 0
    %1186 = vmatpush1.bf16.msra.mxu0 0
    %1187 = vmatprep.subr.bf16.mxu0 0
    %1188 = vmatpush1.bf16.msra.mxu0 0
    %1189 = vmatprep.mubr.bf16.mxu0 0
    %1190 = vmatmul.mubr.bf16.gmra.mrb[0].mxu0 %v773
    %v1191 = vpop.f32.mrb[0].mxu0
    %v1192 = vadd.f32 %v903, %v1191
    %v1193 = vpop.f32.mrb[0].mxu0
    %v1194 = vpop.f32.mrb[0].mxu0
    %v1195 = vadd.f32 %v906, %v1194
    %v1196 = vpop.f32.mrb[0].mxu0
    %1197 = vmatprep.mubr.bf16.mxu0 0
    %1198 = vmatmul.mubr.bf16.gmra.mrb[0].mxu0 %v776
    %v1199 = vpop.f32.mrb[0].mxu0
    %v1200 = vadd.f32 %v911, %v1199
    %v1201 = vpop.f32.mrb[0].mxu0
    %v1202 = vpop.f32.mrb[0].mxu0
    %v1203 = vadd.f32 %v914, %v1202
    %v1204 = vpop.f32.mrb[0].mxu0
    %1205 = vmatprep.mubr.bf16.mxu0 0
    %1206 = vmatmul.mubr.bf16.gmra.mrb[0].mxu0 %v779
    %v1207 = vpop.f32.mrb[0].mxu0
    %v1208 = vadd.f32 %v919, %v1207
    %v1209 = vpop.f32.mrb[0].mxu0
    %v1210 = vpop.f32.mrb[0].mxu0
    %v1211 = vadd.f32 %v922, %v1210
    %v1212 = vpop.f32.mrb[0].mxu0
    %1213 = vmatprep.mubr.bf16.mxu0 0
    %1214 = vmatmul.mubr.bf16.gmra.mrb[0].mxu0 %v782
    %v1215 = vpop.f32.mrb[0].mxu0
    %v1216 = vadd.f32 %v927, %v1215
    %v1217 = vpop.f32.mrb[0].mxu0
    %v1218 = vpop.f32.mrb[0].mxu0
    %v1219 = vadd.f32 %v930, %v1218
    %v1220 = vpop.f32.mrb[0].mxu0
    %1221 = vmatprep.mubr.bf16.mxu0 0
    %1222 = vmatmul.mubr.bf16.gmra.mrb[0].mxu0 %v785
    %v1223 = vpop.f32.mrb[0].mxu0
    %v1224 = vadd.f32 %v935, %v1223
    %v1225 = vpop.f32.mrb[0].mxu0
    %v1226 = vpop.f32.mrb[0].mxu0
    %v1227 = vadd.f32 %v938, %v1226
    %v1228 = vpop.f32.mrb[0].mxu0
    %1229 = vmatprep.mubr.bf16.mxu0 0
    %1230 = vmatmul.mubr.bf16.gmra.mrb[0].mxu0 %v788
    %v1231 = vpop.f32.mrb[0].mxu0
    %v1232 = vadd.f32 %v943, %v1231
    %v1233 = vpop.f32.mrb[0].mxu0
    %v1234 = vpop.f32.mrb[0].mxu0
    %v1235 = vadd.f32 %v946, %v1234
    %v1236 = vpop.f32.mrb[0].mxu0
    %1237 = vmatprep.mubr.bf16.mxu0 0
    %1238 = vmatmul.mubr.bf16.gmra.mrb[0].mxu0 %v791
    %v1239 = vpop.f32.mrb[0].mxu0
    %v1240 = vadd.f32 %v951, %v1239
    %v1241 = vpop.f32.mrb[0].mxu0
    %v1242 = vpop.f32.mrb[0].mxu0
    %v1243 = vadd.f32 %v954, %v1242
    %v1244 = vpop.f32.mrb[0].mxu0
    %1245 = vmatprep.mubr.bf16.mxu0 0
    %1246 = vmatmul.mubr.bf16.gmra.mrb[0].mxu0 %v794
    %v1247 = vpop.f32.mrb[0].mxu0
    %v1248 = vadd.f32 %v959, %v1247
    %v1249 = vpop.f32.mrb[0].mxu0
    %v1250 = vpop.f32.mrb[0].mxu0
    %v1251 = vadd.f32 %v962, %v1250
    %v1252 = vpop.f32.mrb[0].mxu0
    %1253 = vmatprep.mubr.bf16.mxu0 0
    %1254 = vmatmul.mubr.bf16.gmra.mrb[0].mxu0 %v797
    %v1255 = vpop.f32.mrb[0].mxu0
    %v1256 = vadd.f32 %v967, %v1255
    %v1257 = vpop.f32.mrb[0].mxu0
    %v1258 = vpop.f32.mrb[0].mxu0
    %v1259 = vadd.f32 %v970, %v1258
    %v1260 = vpop.f32.mrb[0].mxu0
    %1261 = vmatprep.mubr.bf16.mxu0 0
    %1262 = vmatmul.mubr.bf16.gmra.mrb[0].mxu0 %v800
    %v1263 = vpop.f32.mrb[0].mxu0
    %v1264 = vadd.f32 %v975, %v1263
    %v1265 = vpop.f32.mrb[0].mxu0
    %v1266 = vpop.f32.mrb[0].mxu0
    %v1267 = vadd.f32 %v978, %v1266
    %v1268 = vpop.f32.mrb[0].mxu0
    %1269 = vmatprep.mubr.bf16.mxu0 0
    %1270 = vmatmul.mubr.bf16.gmra.mrb[0].mxu0 %v803
    %v1271 = vpop.f32.mrb[0].mxu0
    %v1272 = vadd.f32 %v983, %v1271
    %v1273 = vpop.f32.mrb[0].mxu0
    %v1274 = vpop.f32.mrb[0].mxu0
    %v1275 = vadd.f32 %v986, %v1274
    %v1276 = vpop.f32.mrb[0].mxu0
    %1277 = vmatprep.mubr.bf16.mxu0 0
    %1278 = vmatmul.mubr.bf16.gmra.mrb[0].mxu0 %v806
    %v1279 = vpop.f32.mrb[0].mxu0
    %v1280 = vadd.f32 %v991, %v1279
    %v1281 = vpop.f32.mrb[0].mxu0
    %v1282 = vpop.f32.mrb[0].mxu0
    %v1283 = vadd.f32 %v994, %v1282
    %v1284 = vpop.f32.mrb[0].mxu0
    %1285 = vmatprep.mubr.bf16.mxu0 0
    %1286 = vmatmul.mubr.bf16.gmra.mrb[0].mxu0 %v809
    %v1287 = vpop.f32.mrb[0].mxu0
    %v1288 = vadd.f32 %v999, %v1287
    %v1289 = vpop.f32.mrb[0].mxu0
    %v1290 = vpop.f32.mrb[0].mxu0
    %v1291 = vadd.f32 %v1002, %v1290
    %v1292 = vpop.f32.mrb[0].mxu0
    %1293 = vmatprep.mubr.bf16.mxu0 0
    %1294 = vmatmul.mubr.bf16.gmra.mrb[0].mxu0 %v812
    %v1295 = vpop.f32.mrb[0].mxu0
    %v1296 = vadd.f32 %v1007, %v1295
    %v1297 = vpop.f32.mrb[0].mxu0
    %v1298 = vpop.f32.mrb[0].mxu0
    %v1299 = vadd.f32 %v1010, %v1298
    %v1300 = vpop.f32.mrb[0].mxu0
    %1301 = vmatprep.mubr.bf16.mxu0 0
    %1302 = vmatmul.mubr.bf16.gmra.mrb[0].mxu0 %v815
    %v1303 = vpop.f32.mrb[0].mxu0
    %v1304 = vadd.f32 %v1015, %v1303
    %v1305 = vpop.f32.mrb[0].mxu0
    %v1306 = vpop.f32.mrb[0].mxu0
    %v1307 = vadd.f32 %v1018, %v1306
    %v1308 = vpop.f32.mrb[0].mxu0
    %1309 = vmatprep.mubr.bf16.mxu0 0
    %1310 = vmatmul.mubr.bf16.gmra.mrb[0].mxu0 %v818
    %v1311 = vpop.f32.mrb[0].mxu0
    %v1312 = vadd.f32 %v1023, %v1311
    %v1313 = vpop.f32.mrb[0].mxu0
    %v1314 = vpop.f32.mrb[0].mxu0
    %v1315 = vadd.f32 %v1026, %v1314
    %v1316 = vpop.f32.mrb[0].mxu0
    %1317 = vmatprep.mubr.bf16.mxu0 0
    %1318 = vmatmul.mubr.bf16.gmra.mrb[0].mxu0 %v821
    %v1319 = vpop.f32.mrb[0].mxu0
    %v1320 = vadd.f32 %v1031, %v1319
    %v1321 = vpop.f32.mrb[0].mxu0
    %v1322 = vpop.f32.mrb[0].mxu0
    %v1323 = vadd.f32 %v1034, %v1322
    %v1324 = vpop.f32.mrb[0].mxu0
    %1325 = vmatprep.mubr.bf16.mxu0 0
    %1326 = vmatmul.mubr.bf16.gmra.mrb[0].mxu0 %v824
    %v1327 = vpop.f32.mrb[0].mxu0
    %v1328 = vadd.f32 %v1039, %v1327
    %v1329 = vpop.f32.mrb[0].mxu0
    %v1330 = vpop.f32.mrb[0].mxu0
    %v1331 = vadd.f32 %v1042, %v1330
    %v1332 = vpop.f32.mrb[0].mxu0
    %1333 = vmatprep.mubr.bf16.mxu0 0
    %1334 = vmatmul.mubr.bf16.gmra.mrb[0].mxu0 %v827
    %v1335 = vpop.f32.mrb[0].mxu0
    %v1336 = vadd.f32 %v1047, %v1335
    %v1337 = vpop.f32.mrb[0].mxu0
    %v1338 = vpop.f32.mrb[0].mxu0
    %v1339 = vadd.f32 %v1050, %v1338
    %v1340 = vpop.f32.mrb[0].mxu0
    %1341 = vmatprep.mubr.bf16.mxu0 0
    %1342 = vmatmul.mubr.bf16.gmra.mrb[0].mxu0 %v830
    %v1343 = vpop.f32.mrb[0].mxu0
    %v1344 = vadd.f32 %v1055, %v1343
    %v1345 = vpop.f32.mrb[0].mxu0
    %v1346 = vpop.f32.mrb[0].mxu0
    %v1347 = vadd.f32 %v1058, %v1346
    %v1348 = vpop.f32.mrb[0].mxu0
    %1349 = vmatprep.mubr.bf16.mxu0 0
    %1350 = vmatmul.mubr.bf16.gmra.mrb[0].mxu0 %v833
    %v1351 = vpop.f32.mrb[0].mxu0
    %v1352 = vadd.f32 %v1063, %v1351
    %v1353 = vpop.f32.mrb[0].mxu0
    %v1354 = vpop.f32.mrb[0].mxu0
    %v1355 = vadd.f32 %v1066, %v1354
    %v1356 = vpop.f32.mrb[0].mxu0
    %1357 = vmatprep.mubr.bf16.mxu0 0
    %1358 = vmatmul.mubr.bf16.gmra.mrb[0].mxu0 %v836
    %v1359 = vpop.f32.mrb[0].mxu0
    %v1360 = vadd.f32 %v1071, %v1359
    %v1361 = vpop.f32.mrb[0].mxu0
    %v1362 = vpop.f32.mrb[0].mxu0
    %v1363 = vadd.f32 %v1074, %v1362
    %v1364 = vpop.f32.mrb[0].mxu0
    %1365 = vmatprep.mubr.bf16.mxu0 0
    %1366 = vmatmul.mubr.bf16.gmra.mrb[0].mxu0 %v839
    %v1367 = vpop.f32.mrb[0].mxu0
    %v1368 = vadd.f32 %v1079, %v1367
    %v1369 = vpop.f32.mrb[0].mxu0
    %v1370 = vpop.f32.mrb[0].mxu0
    %v1371 = vadd.f32 %v1082, %v1370
    %v1372 = vpop.f32.mrb[0].mxu0
    %1373 = vmatprep.mubr.bf16.mxu0 0
    %1374 = vmatmul.mubr.bf16.gmra.mrb[0].mxu0 %v842
    %v1375 = vpop.f32.mrb[0].mxu0
    %v1376 = vadd.f32 %v1087, %v1375
    %v1377 = vpop.f32.mrb[0].mxu0
    %v1378 = vpop.f32.mrb[0].mxu0
    %v1379 = vadd.f32 %v1090, %v1378
    %v1380 = vpop.f32.mrb[0].mxu0
    %1381 = vmatprep.mubr.bf16.mxu0 0
    %1382 = vmatmul.mubr.bf16.gmra.mrb[0].mxu0 %v845
    %v1383 = vpop.f32.mrb[0].mxu0
    %v1384 = vadd.f32 %v1095, %v1383
    %v1385 = vpop.f32.mrb[0].mxu0
    %v1386 = vpop.f32.mrb[0].mxu0
    %v1387 = vadd.f32 %v1098, %v1386
    %v1388 = vpop.f32.mrb[0].mxu0
    %1389 = vmatprep.mubr.bf16.mxu0 0
    %1390 = vmatmul.mubr.bf16.gmra.mrb[0].mxu0 %v848
    %v1391 = vpop.f32.mrb[0].mxu0
    %v1392 = vadd.f32 %v1103, %v1391
    %v1393 = vpop.f32.mrb[0].mxu0
    %v1394 = vpop.f32.mrb[0].mxu0
    %v1395 = vadd.f32 %v1106, %v1394
    %v1396 = vpop.f32.mrb[0].mxu0
    %1397 = vmatprep.mubr.bf16.mxu0 0
    %1398 = vmatmul.mubr.bf16.gmra.mrb[0].mxu0 %v851
    %v1399 = vpop.f32.mrb[0].mxu0
    %v1400 = vadd.f32 %v1111, %v1399
    %v1401 = vpop.f32.mrb[0].mxu0
    %v1402 = vpop.f32.mrb[0].mxu0
    %v1403 = vadd.f32 %v1114, %v1402
    %v1404 = vpop.f32.mrb[0].mxu0
    %1405 = vmatprep.mubr.bf16.mxu0 0
    %1406 = vmatmul.mubr.bf16.gmra.mrb[0].mxu0 %v854
    %v1407 = vpop.f32.mrb[0].mxu0
    %v1408 = vadd.f32 %v1119, %v1407
    %v1409 = vpop.f32.mrb[0].mxu0
    %v1410 = vpop.f32.mrb[0].mxu0
    %v1411 = vadd.f32 %v1122, %v1410
    %v1412 = vpop.f32.mrb[0].mxu0
    %1413 = vmatprep.mubr.bf16.mxu0 0
    %1414 = vmatmul.mubr.bf16.gmra.mrb[0].mxu0 %v857
    %v1415 = vpop.f32.mrb[0].mxu0
    %v1416 = vadd.f32 %v1127, %v1415
    %v1417 = vpop.f32.mrb[0].mxu0
    %v1418 = vpop.f32.mrb[0].mxu0
    %v1419 = vadd.f32 %v1130, %v1418
    %v1420 = vpop.f32.mrb[0].mxu0
    %1421 = vmatprep.mubr.bf16.mxu0 0
    %1422 = vmatmul.mubr.bf16.gmra.mrb[0].mxu0 %v860
    %v1423 = vpop.f32.mrb[0].mxu0
    %v1424 = vadd.f32 %v1135, %v1423
    %v1425 = vpop.f32.mrb[0].mxu0
    %v1426 = vpop.f32.mrb[0].mxu0
    %v1427 = vadd.f32 %v1138, %v1426
    %v1428 = vpop.f32.mrb[0].mxu0
    %1429 = vmatprep.mubr.bf16.mxu0 0
    %1430 = vmatmul.mubr.bf16.gmra.mrb[0].mxu0 %v863
    %v1431 = vpop.f32.mrb[0].mxu0
    %v1432 = vadd.f32 %v1143, %v1431
    %v1433 = vpop.f32.mrb[0].mxu0
    %v1434 = vpop.f32.mrb[0].mxu0
    %v1435 = vadd.f32 %v1146, %v1434
    %v1436 = vpop.f32.mrb[0].mxu0
    %1437 = vmatprep.mubr.bf16.mxu0 0
    %1438 = vmatmul.mubr.bf16.gmra.mrb[0].mxu0 %v866
    %v1439 = vpop.f32.mrb[0].mxu0
    %v1440 = vadd.f32 %v1151, %v1439
    %v1441 = vpop.f32.mrb[0].mxu0
    %v1442 = vpop.f32.mrb[0].mxu0
    %v1443 = vadd.f32 %v1154, %v1442
    %v1444 = vpop.f32.mrb[0].mxu0
    %1445 = vdwg.mxu0
    %vm1446 = vcmask 523264
    %v1447 = vsel %vm1446, %v1192, 0.0
    %v1448 = vsel %vm1446, %v1195, 0.0
    %v1449 = vadd.f32 %v1447, %v1448
    %v1450 = vsel %vm1446, %v1200, 0.0
    %v1451 = vadd.f32 %v1449, %v1450
    %v1452 = vsel %vm1446, %v1203, 0.0
    %v1453 = vadd.f32 %v1451, %v1452
    %v1454 = vsel %vm1446, %v1208, 0.0
    %v1455 = vadd.f32 %v1453, %v1454
    %v1456 = vsel %vm1446, %v1211, 0.0
    %v1457 = vadd.f32 %v1455, %v1456
    %v1458 = vsel %vm1446, %v1216, 0.0
    %v1459 = vadd.f32 %v1457, %v1458
    %v1460 = vsel %vm1446, %v1219, 0.0
    %v1461 = vadd.f32 %v1459, %v1460
    %v1462 = vsel %vm1446, %v1224, 0.0
    %v1463 = vadd.f32 %v1461, %v1462
    %v1464 = vsel %vm1446, %v1227, 0.0
    %v1465 = vadd.f32 %v1463, %v1464
    %v1466 = vsel %vm1446, %v1232, 0.0
    %v1467 = vadd.f32 %v1465, %v1466
    %v1468 = vsel %vm1446, %v1235, 0.0
    %v1469 = vadd.f32 %v1467, %v1468
    %v1470 = vsel %vm1446, %v1240, 0.0
    %v1471 = vadd.f32 %v1469, %v1470
    %v1472 = vsel %vm1446, %v1243, 0.0
    %v1473 = vadd.f32 %v1471, %v1472
    %v1474 = vsel %vm1446, %v1248, 0.0
    %v1475 = vadd.f32 %v1473, %v1474
    %v1476 = vsel %vm1446, %v1251, 0.0
    %v1477 = vadd.f32 %v1475, %v1476
    %v1478 = vsel %vm1446, %v1256, 0.0
    %v1479 = vadd.f32 %v1477, %v1478
    %v1480 = vsel %vm1446, %v1259, 0.0
    %v1481 = vadd.f32 %v1479, %v1480
    %v1482 = vsel %vm1446, %v1264, 0.0
    %v1483 = vadd.f32 %v1481, %v1482
    %v1484 = vsel %vm1446, %v1267, 0.0
    %v1485 = vadd.f32 %v1483, %v1484
    %v1486 = vsel %vm1446, %v1272, 0.0
    %v1487 = vadd.f32 %v1485, %v1486
    %v1488 = vsel %vm1446, %v1275, 0.0
    %v1489 = vadd.f32 %v1487, %v1488
    %v1490 = vsel %vm1446, %v1280, 0.0
    %v1491 = vadd.f32 %v1489, %v1490
    %v1492 = vsel %vm1446, %v1283, 0.0
    %v1493 = vadd.f32 %v1491, %v1492
    %v1494 = vsel %vm1446, %v1288, 0.0
    %v1495 = vadd.f32 %v1493, %v1494
    %v1496 = vsel %vm1446, %v1291, 0.0
    %v1497 = vadd.f32 %v1495, %v1496
    %v1498 = vsel %vm1446, %v1296, 0.0
    %v1499 = vadd.f32 %v1497, %v1498
    %v1500 = vsel %vm1446, %v1299, 0.0
    %v1501 = vadd.f32 %v1499, %v1500
    %v1502 = vsel %vm1446, %v1304, 0.0
    %v1503 = vadd.f32 %v1501, %v1502
    %v1504 = vsel %vm1446, %v1307, 0.0
    %v1505 = vadd.f32 %v1503, %v1504
    %v1506 = vsel %vm1446, %v1312, 0.0
    %v1507 = vadd.f32 %v1505, %v1506
    %v1508 = vsel %vm1446, %v1315, 0.0
    %v1509 = vadd.f32 %v1507, %v1508
    %v1510 = vsel %vm1446, %v1320, 0.0
    %v1511 = vadd.f32 %v1509, %v1510
    %v1512 = vsel %vm1446, %v1323, 0.0
    %v1513 = vadd.f32 %v1511, %v1512
    %v1514 = vsel %vm1446, %v1328, 0.0
    %v1515 = vadd.f32 %v1513, %v1514
    %v1516 = vsel %vm1446, %v1331, 0.0
    %v1517 = vadd.f32 %v1515, %v1516
    %v1518 = vsel %vm1446, %v1336, 0.0
    %v1519 = vadd.f32 %v1517, %v1518
    %v1520 = vsel %vm1446, %v1339, 0.0
    %v1521 = vadd.f32 %v1519, %v1520
    %v1522 = vsel %vm1446, %v1344, 0.0
    %v1523 = vadd.f32 %v1521, %v1522
    %v1524 = vsel %vm1446, %v1347, 0.0
    %v1525 = vadd.f32 %v1523, %v1524
    %v1526 = vsel %vm1446, %v1352, 0.0
    %v1527 = vadd.f32 %v1525, %v1526
    %v1528 = vsel %vm1446, %v1355, 0.0
    %v1529 = vadd.f32 %v1527, %v1528
    %v1530 = vsel %vm1446, %v1360, 0.0
    %v1531 = vadd.f32 %v1529, %v1530
    %v1532 = vsel %vm1446, %v1363, 0.0
    %v1533 = vadd.f32 %v1531, %v1532
    %v1534 = vsel %vm1446, %v1368, 0.0
    %v1535 = vadd.f32 %v1533, %v1534
    %v1536 = vsel %vm1446, %v1371, 0.0
    %v1537 = vadd.f32 %v1535, %v1536
    %v1538 = vsel %vm1446, %v1376, 0.0
    %v1539 = vadd.f32 %v1537, %v1538
    %v1540 = vsel %vm1446, %v1379, 0.0
    %v1541 = vadd.f32 %v1539, %v1540
    %v1542 = vsel %vm1446, %v1384, 0.0
    %v1543 = vadd.f32 %v1541, %v1542
    %v1544 = vsel %vm1446, %v1387, 0.0
    %v1545 = vadd.f32 %v1543, %v1544
    %v1546 = vsel %vm1446, %v1392, 0.0
    %v1547 = vadd.f32 %v1545, %v1546
    %v1548 = vsel %vm1446, %v1395, 0.0
    %v1549 = vadd.f32 %v1547, %v1548
    %v1550 = vsel %vm1446, %v1400, 0.0
    %v1551 = vadd.f32 %v1549, %v1550
    %v1552 = vsel %vm1446, %v1403, 0.0
    %v1553 = vadd.f32 %v1551, %v1552
    %v1554 = vsel %vm1446, %v1408, 0.0
    %v1555 = vadd.f32 %v1553, %v1554
    %v1556 = vsel %vm1446, %v1411, 0.0
    %v1557 = vadd.f32 %v1555, %v1556
    %v1558 = vsel %vm1446, %v1416, 0.0
    %v1559 = vadd.f32 %v1557, %v1558
    %v1560 = vsel %vm1446, %v1419, 0.0
    %v1561 = vadd.f32 %v1559, %v1560
    %v1562 = vsel %vm1446, %v1424, 0.0
    %v1563 = vadd.f32 %v1561, %v1562
    %v1564 = vsel %vm1446, %v1427, 0.0
    %v1565 = vadd.f32 %v1563, %v1564
    %v1566 = vsel %vm1446, %v1432, 0.0
    %v1567 = vadd.f32 %v1565, %v1566
    %v1568 = vsel %vm1446, %v1435, 0.0
    %v1569 = vadd.f32 %v1567, %v1568
    %v1570 = vsel %vm1446, %v1440, 0.0
    %v1571 = vadd.f32 %v1569, %v1570
    %v1572 = vsel %vm1446, %v1443, 0.0
    %v1573 = vadd.f32 %v1571, %v1572
    %v1574 = vrot.slane %v1573, 4
    %v1575 = vadd.f32 %v1573, %v1574
    %v1576 = vrot.slane %v1575, 2
    %v1577 = vadd.f32 %v1575, %v1576
    %v1578 = vrot.slane %v1577, 1
    %v1579 = vadd.f32 %v1577, %v1578
    %v1580 = vrcp.pop 512.0
    %v1581 = vmul.f32 %v1579, %v1580
    %v1582 = vsub.f32 %v1192, %v1581
    %v1583 = vsub.f32 %v1195, %v1581
    %v1584 = vsub.f32 %v1200, %v1581
    %v1585 = vsub.f32 %v1203, %v1581
    %v1586 = vsub.f32 %v1208, %v1581
    %v1587 = vsub.f32 %v1211, %v1581
    %v1588 = vsub.f32 %v1216, %v1581
    %v1589 = vsub.f32 %v1219, %v1581
    %v1590 = vsub.f32 %v1224, %v1581
    %v1591 = vsub.f32 %v1227, %v1581
    %v1592 = vsub.f32 %v1232, %v1581
    %v1593 = vsub.f32 %v1235, %v1581
    %v1594 = vsub.f32 %v1240, %v1581
    %v1595 = vsub.f32 %v1243, %v1581
    %v1596 = vsub.f32 %v1248, %v1581
    %v1597 = vsub.f32 %v1251, %v1581
    %v1598 = vsub.f32 %v1256, %v1581
    %v1599 = vsub.f32 %v1259, %v1581
    %v1600 = vsub.f32 %v1264, %v1581
    %v1601 = vsub.f32 %v1267, %v1581
    %v1602 = vsub.f32 %v1272, %v1581
    %v1603 = vsub.f32 %v1275, %v1581
    %v1604 = vsub.f32 %v1280, %v1581
    %v1605 = vsub.f32 %v1283, %v1581
    %v1606 = vsub.f32 %v1288, %v1581
    %v1607 = vsub.f32 %v1291, %v1581
    %v1608 = vsub.f32 %v1296, %v1581
    %v1609 = vsub.f32 %v1299, %v1581
    %v1610 = vsub.f32 %v1304, %v1581
    %v1611 = vsub.f32 %v1307, %v1581
    %v1612 = vsub.f32 %v1312, %v1581
    %v1613 = vsub.f32 %v1315, %v1581
    %v1614 = vsub.f32 %v1320, %v1581
    %v1615 = vsub.f32 %v1323, %v1581
    %v1616 = vsub.f32 %v1328, %v1581
    %v1617 = vsub.f32 %v1331, %v1581
    %v1618 = vsub.f32 %v1336, %v1581
    %v1619 = vsub.f32 %v1339, %v1581
    %v1620 = vsub.f32 %v1344, %v1581
    %v1621 = vsub.f32 %v1347, %v1581
    %v1622 = vsub.f32 %v1352, %v1581
    %v1623 = vsub.f32 %v1355, %v1581
    %v1624 = vsub.f32 %v1360, %v1581
    %v1625 = vsub.f32 %v1363, %v1581
    %v1626 = vsub.f32 %v1368, %v1581
    %v1627 = vsub.f32 %v1371, %v1581
    %v1628 = vsub.f32 %v1376, %v1581
    %v1629 = vsub.f32 %v1379, %v1581
    %v1630 = vsub.f32 %v1384, %v1581
    %v1631 = vsub.f32 %v1387, %v1581
    %v1632 = vsub.f32 %v1392, %v1581
    %v1633 = vsub.f32 %v1395, %v1581
    %v1634 = vsub.f32 %v1400, %v1581
    %v1635 = vsub.f32 %v1403, %v1581
    %v1636 = vsub.f32 %v1408, %v1581
    %v1637 = vsub.f32 %v1411, %v1581
    %v1638 = vsub.f32 %v1416, %v1581
    %v1639 = vsub.f32 %v1419, %v1581
    %v1640 = vsub.f32 %v1424, %v1581
    %v1641 = vsub.f32 %v1427, %v1581
    %v1642 = vsub.f32 %v1432, %v1581
    %v1643 = vsub.f32 %v1435, %v1581
    %v1644 = vsub.f32 %v1440, %v1581
    %v1645 = vsub.f32 %v1443, %v1581
    %v1646 = vmul.f32 %v1582, %v1582
    %v1647 = vmul.f32 %v1583, %v1583
    %v1648 = vmul.f32 %v1584, %v1584
    %v1649 = vmul.f32 %v1585, %v1585
    %v1650 = vmul.f32 %v1586, %v1586
    %v1651 = vmul.f32 %v1587, %v1587
    %v1652 = vmul.f32 %v1588, %v1588
    %v1653 = vmul.f32 %v1589, %v1589
    %v1654 = vmul.f32 %v1590, %v1590
    %v1655 = vmul.f32 %v1591, %v1591
    %v1656 = vmul.f32 %v1592, %v1592
    %v1657 = vmul.f32 %v1593, %v1593
    %v1658 = vmul.f32 %v1594, %v1594
    %v1659 = vmul.f32 %v1595, %v1595
    %v1660 = vmul.f32 %v1596, %v1596
    %v1661 = vmul.f32 %v1597, %v1597
    %v1662 = vmul.f32 %v1598, %v1598
    %v1663 = vmul.f32 %v1599, %v1599
    %v1664 = vmul.f32 %v1600, %v1600
    %v1665 = vmul.f32 %v1601, %v1601
    %v1666 = vmul.f32 %v1602, %v1602
    %v1667 = vmul.f32 %v1603, %v1603
    %v1668 = vmul.f32 %v1604, %v1604
    %v1669 = vmul.f32 %v1605, %v1605
    %v1670 = vmul.f32 %v1606, %v1606
    %v1671 = vmul.f32 %v1607, %v1607
    %v1672 = vmul.f32 %v1608, %v1608
    %v1673 = vmul.f32 %v1609, %v1609
    %v1674 = vmul.f32 %v1610, %v1610
    %v1675 = vmul.f32 %v1611, %v1611
    %v1676 = vmul.f32 %v1612, %v1612
    %v1677 = vmul.f32 %v1613, %v1613
    %v1678 = vmul.f32 %v1614, %v1614
    %v1679 = vmul.f32 %v1615, %v1615
    %v1680 = vmul.f32 %v1616, %v1616
    %v1681 = vmul.f32 %v1617, %v1617
    %v1682 = vmul.f32 %v1618, %v1618
    %v1683 = vmul.f32 %v1619, %v1619
    %v1684 = vmul.f32 %v1620, %v1620
    %v1685 = vmul.f32 %v1621, %v1621
    %v1686 = vmul.f32 %v1622, %v1622
    %v1687 = vmul.f32 %v1623, %v1623
    %v1688 = vmul.f32 %v1624, %v1624
    %v1689 = vmul.f32 %v1625, %v1625
    %v1690 = vmul.f32 %v1626, %v1626
    %v1691 = vmul.f32 %v1627, %v1627
    %v1692 = vmul.f32 %v1628, %v1628
    %v1693 = vmul.f32 %v1629, %v1629
    %v1694 = vmul.f32 %v1630, %v1630
    %v1695 = vmul.f32 %v1631, %v1631
    %v1696 = vmul.f32 %v1632, %v1632
    %v1697 = vmul.f32 %v1633, %v1633
    %v1698 = vmul.f32 %v1634, %v1634
    %v1699 = vmul.f32 %v1635, %v1635
    %v1700 = vmul.f32 %v1636, %v1636
    %v1701 = vmul.f32 %v1637, %v1637
    %v1702 = vmul.f32 %v1638, %v1638
    %v1703 = vmul.f32 %v1639, %v1639
    %v1704 = vmul.f32 %v1640, %v1640
    %v1705 = vmul.f32 %v1641, %v1641
    %v1706 = vmul.f32 %v1642, %v1642
    %v1707 = vmul.f32 %v1643, %v1643
    %v1708 = vmul.f32 %v1644, %v1644
    %v1709 = vmul.f32 %v1645, %v1645
    %v1710 = vsel %vm1446, %v1646, 0.0
    %v1711 = vsel %vm1446, %v1647, 0.0
    %v1712 = vadd.f32 %v1710, %v1711
    %v1713 = vsel %vm1446, %v1648, 0.0
    %v1714 = vadd.f32 %v1712, %v1713
    %v1715 = vsel %vm1446, %v1649, 0.0
    %v1716 = vadd.f32 %v1714, %v1715
    %v1717 = vsel %vm1446, %v1650, 0.0
    %v1718 = vadd.f32 %v1716, %v1717
    %v1719 = vsel %vm1446, %v1651, 0.0
    %v1720 = vadd.f32 %v1718, %v1719
    %v1721 = vsel %vm1446, %v1652, 0.0
    %v1722 = vadd.f32 %v1720, %v1721
    %v1723 = vsel %vm1446, %v1653, 0.0
    %v1724 = vadd.f32 %v1722, %v1723
    %v1725 = vsel %vm1446, %v1654, 0.0
    %v1726 = vadd.f32 %v1724, %v1725
    %v1727 = vsel %vm1446, %v1655, 0.0
    %v1728 = vadd.f32 %v1726, %v1727
    %v1729 = vsel %vm1446, %v1656, 0.0
    %v1730 = vadd.f32 %v1728, %v1729
    %v1731 = vsel %vm1446, %v1657, 0.0
    %v1732 = vadd.f32 %v1730, %v1731
    %v1733 = vsel %vm1446, %v1658, 0.0
    %v1734 = vadd.f32 %v1732, %v1733
    %v1735 = vsel %vm1446, %v1659, 0.0
    %v1736 = vadd.f32 %v1734, %v1735
    %v1737 = vsel %vm1446, %v1660, 0.0
    %v1738 = vadd.f32 %v1736, %v1737
    %v1739 = vsel %vm1446, %v1661, 0.0
    %v1740 = vadd.f32 %v1738, %v1739
    %v1741 = vsel %vm1446, %v1662, 0.0
    %v1742 = vadd.f32 %v1740, %v1741
    %v1743 = vsel %vm1446, %v1663, 0.0
    %v1744 = vadd.f32 %v1742, %v1743
    %v1745 = vsel %vm1446, %v1664, 0.0
    %v1746 = vadd.f32 %v1744, %v1745
    %v1747 = vsel %vm1446, %v1665, 0.0
    %v1748 = vadd.f32 %v1746, %v1747
    %v1749 = vsel %vm1446, %v1666, 0.0
    %v1750 = vadd.f32 %v1748, %v1749
    %v1751 = vsel %vm1446, %v1667, 0.0
    %v1752 = vadd.f32 %v1750, %v1751
    %v1753 = vsel %vm1446, %v1668, 0.0
    %v1754 = vadd.f32 %v1752, %v1753
    %v1755 = vsel %vm1446, %v1669, 0.0
    %v1756 = vadd.f32 %v1754, %v1755
    %v1757 = vsel %vm1446, %v1670, 0.0
    %v1758 = vadd.f32 %v1756, %v1757
    %v1759 = vsel %vm1446, %v1671, 0.0
    %v1760 = vadd.f32 %v1758, %v1759
    %v1761 = vsel %vm1446, %v1672, 0.0
    %v1762 = vadd.f32 %v1760, %v1761
    %v1763 = vsel %vm1446, %v1673, 0.0
    %v1764 = vadd.f32 %v1762, %v1763
    %v1765 = vsel %vm1446, %v1674, 0.0
    %v1766 = vadd.f32 %v1764, %v1765
    %v1767 = vsel %vm1446, %v1675, 0.0
    %v1768 = vadd.f32 %v1766, %v1767
    %v1769 = vsel %vm1446, %v1676, 0.0
    %v1770 = vadd.f32 %v1768, %v1769
    %v1771 = vsel %vm1446, %v1677, 0.0
    %v1772 = vadd.f32 %v1770, %v1771
    %v1773 = vsel %vm1446, %v1678, 0.0
    %v1774 = vadd.f32 %v1772, %v1773
    %v1775 = vsel %vm1446, %v1679, 0.0
    %v1776 = vadd.f32 %v1774, %v1775
    %v1777 = vsel %vm1446, %v1680, 0.0
    %v1778 = vadd.f32 %v1776, %v1777
    %v1779 = vsel %vm1446, %v1681, 0.0
    %v1780 = vadd.f32 %v1778, %v1779
    %v1781 = vsel %vm1446, %v1682, 0.0
    %v1782 = vadd.f32 %v1780, %v1781
    %v1783 = vsel %vm1446, %v1683, 0.0
    %v1784 = vadd.f32 %v1782, %v1783
    %v1785 = vsel %vm1446, %v1684, 0.0
    %v1786 = vadd.f32 %v1784, %v1785
    %v1787 = vsel %vm1446, %v1685, 0.0
    %v1788 = vadd.f32 %v1786, %v1787
    %v1789 = vsel %vm1446, %v1686, 0.0
    %v1790 = vadd.f32 %v1788, %v1789
    %v1791 = vsel %vm1446, %v1687, 0.0
    %v1792 = vadd.f32 %v1790, %v1791
    %v1793 = vsel %vm1446, %v1688, 0.0
    %v1794 = vadd.f32 %v1792, %v1793
    %v1795 = vsel %vm1446, %v1689, 0.0
    %v1796 = vadd.f32 %v1794, %v1795
    %v1797 = vsel %vm1446, %v1690, 0.0
    %v1798 = vadd.f32 %v1796, %v1797
    %v1799 = vsel %vm1446, %v1691, 0.0
    %v1800 = vadd.f32 %v1798, %v1799
    %v1801 = vsel %vm1446, %v1692, 0.0
    %v1802 = vadd.f32 %v1800, %v1801
    %v1803 = vsel %vm1446, %v1693, 0.0
    %v1804 = vadd.f32 %v1802, %v1803
    %v1805 = vsel %vm1446, %v1694, 0.0
    %v1806 = vadd.f32 %v1804, %v1805
    %v1807 = vsel %vm1446, %v1695, 0.0
    %v1808 = vadd.f32 %v1806, %v1807
    %v1809 = vsel %vm1446, %v1696, 0.0
    %v1810 = vadd.f32 %v1808, %v1809
    %v1811 = vsel %vm1446, %v1697, 0.0
    %v1812 = vadd.f32 %v1810, %v1811
    %v1813 = vsel %vm1446, %v1698, 0.0
    %v1814 = vadd.f32 %v1812, %v1813
    %v1815 = vsel %vm1446, %v1699, 0.0
    %v1816 = vadd.f32 %v1814, %v1815
    %v1817 = vsel %vm1446, %v1700, 0.0
    %v1818 = vadd.f32 %v1816, %v1817
    %v1819 = vsel %vm1446, %v1701, 0.0
    %v1820 = vadd.f32 %v1818, %v1819
    %v1821 = vsel %vm1446, %v1702, 0.0
    %v1822 = vadd.f32 %v1820, %v1821
    %v1823 = vsel %vm1446, %v1703, 0.0
    %v1824 = vadd.f32 %v1822, %v1823
    %v1825 = vsel %vm1446, %v1704, 0.0
    %v1826 = vadd.f32 %v1824, %v1825
    %v1827 = vsel %vm1446, %v1705, 0.0
    %v1828 = vadd.f32 %v1826, %v1827
    %v1829 = vsel %vm1446, %v1706, 0.0
    %v1830 = vadd.f32 %v1828, %v1829
    %v1831 = vsel %vm1446, %v1707, 0.0
    %v1832 = vadd.f32 %v1830, %v1831
    %v1833 = vsel %vm1446, %v1708, 0.0
    %v1834 = vadd.f32 %v1832, %v1833
    %v1835 = vsel %vm1446, %v1709, 0.0
    %v1836 = vadd.f32 %v1834, %v1835
    %v1837 = vrot.slane %v1836, 4
    %v1838 = vadd.f32 %v1836, %v1837
    %v1839 = vrot.slane %v1838, 2
    %v1840 = vadd.f32 %v1838, %v1839
    %v1841 = vrot.slane %v1840, 1
    %v1842 = vadd.f32 %v1840, %v1841
    %v1843 = vmul.f32 %v1842, %v1580
    %v1844 = vadd.f32 %v1843, 1e-05
    %v1845 = vrsqrt.pop %v1844
    %v1846 = vmul.f32 %v1582, %v1845
    %v1847 = vmul.f32 %v1583, %v1845
    %v1848 = vmul.f32 %v1584, %v1845
    %v1849 = vmul.f32 %v1585, %v1845
    %v1850 = vmul.f32 %v1586, %v1845
    %v1851 = vmul.f32 %v1587, %v1845
    %v1852 = vmul.f32 %v1588, %v1845
    %v1853 = vmul.f32 %v1589, %v1845
    %v1854 = vmul.f32 %v1590, %v1845
    %v1855 = vmul.f32 %v1591, %v1845
    %v1856 = vmul.f32 %v1592, %v1845
    %v1857 = vmul.f32 %v1593, %v1845
    %v1858 = vmul.f32 %v1594, %v1845
    %v1859 = vmul.f32 %v1595, %v1845
    %v1860 = vmul.f32 %v1596, %v1845
    %v1861 = vmul.f32 %v1597, %v1845
    %v1862 = vmul.f32 %v1598, %v1845
    %v1863 = vmul.f32 %v1599, %v1845
    %v1864 = vmul.f32 %v1600, %v1845
    %v1865 = vmul.f32 %v1601, %v1845
    %v1866 = vmul.f32 %v1602, %v1845
    %v1867 = vmul.f32 %v1603, %v1845
    %v1868 = vmul.f32 %v1604, %v1845
    %v1869 = vmul.f32 %v1605, %v1845
    %v1870 = vmul.f32 %v1606, %v1845
    %v1871 = vmul.f32 %v1607, %v1845
    %v1872 = vmul.f32 %v1608, %v1845
    %v1873 = vmul.f32 %v1609, %v1845
    %v1874 = vmul.f32 %v1610, %v1845
    %v1875 = vmul.f32 %v1611, %v1845
    %v1876 = vmul.f32 %v1612, %v1845
    %v1877 = vmul.f32 %v1613, %v1845
    %v1878 = vmul.f32 %v1614, %v1845
    %v1879 = vmul.f32 %v1615, %v1845
    %v1880 = vmul.f32 %v1616, %v1845
    %v1881 = vmul.f32 %v1617, %v1845
    %v1882 = vmul.f32 %v1618, %v1845
    %v1883 = vmul.f32 %v1619, %v1845
    %v1884 = vmul.f32 %v1620, %v1845
    %v1885 = vmul.f32 %v1621, %v1845
    %v1886 = vmul.f32 %v1622, %v1845
    %v1887 = vmul.f32 %v1623, %v1845
    %v1888 = vmul.f32 %v1624, %v1845
    %v1889 = vmul.f32 %v1625, %v1845
    %v1890 = vmul.f32 %v1626, %v1845
    %v1891 = vmul.f32 %v1627, %v1845
    %v1892 = vmul.f32 %v1628, %v1845
    %v1893 = vmul.f32 %v1629, %v1845
    %v1894 = vmul.f32 %v1630, %v1845
    %v1895 = vmul.f32 %v1631, %v1845
    %v1896 = vmul.f32 %v1632, %v1845
    %v1897 = vmul.f32 %v1633, %v1845
    %v1898 = vmul.f32 %v1634, %v1845
    %v1899 = vmul.f32 %v1635, %v1845
    %v1900 = vmul.f32 %v1636, %v1845
    %v1901 = vmul.f32 %v1637, %v1845
    %v1902 = vmul.f32 %v1638, %v1845
    %v1903 = vmul.f32 %v1639, %v1845
    %v1904 = vmul.f32 %v1640, %v1845
    %v1905 = vmul.f32 %v1641, %v1845
    %v1906 = vmul.f32 %v1642, %v1845
    %v1907 = vmul.f32 %v1643, %v1845
    %v1908 = vmul.f32 %v1644, %v1845
    %v1909 = vmul.f32 %v1645, %v1845
    %v1910 = vld [vmem:[%s2] sm:$0x1]
    %v1912 = vlaneseq
    %v1913 = vshrl.u32 %v1912, 7
    %v1914 = vsub.s32 0, %v1913
    %v1915 = vrot.slane %v1910, %v1914
    %v1917 = vmul.f32 %v1846, %v1915
    %v1918 = vmul.f32 %v1847, %v1915
    %v1919 = vmul.f32 %v1848, %v1915
    %v1920 = vmul.f32 %v1849, %v1915
    %v1921 = vmul.f32 %v1850, %v1915
    %v1922 = vmul.f32 %v1851, %v1915
    %v1923 = vmul.f32 %v1852, %v1915
    %v1924 = vmul.f32 %v1853, %v1915
    %v1925 = vmul.f32 %v1854, %v1915
    %v1926 = vmul.f32 %v1855, %v1915
    %v1927 = vmul.f32 %v1856, %v1915
    %v1928 = vmul.f32 %v1857, %v1915
    %v1929 = vmul.f32 %v1858, %v1915
    %v1930 = vmul.f32 %v1859, %v1915
    %v1931 = vmul.f32 %v1860, %v1915
    %v1932 = vmul.f32 %v1861, %v1915
    %v1933 = vmul.f32 %v1862, %v1915
    %v1934 = vmul.f32 %v1863, %v1915
    %v1935 = vmul.f32 %v1864, %v1915
    %v1936 = vmul.f32 %v1865, %v1915
    %v1937 = vmul.f32 %v1866, %v1915
    %v1938 = vmul.f32 %v1867, %v1915
    %v1939 = vmul.f32 %v1868, %v1915
    %v1940 = vmul.f32 %v1869, %v1915
    %v1941 = vmul.f32 %v1870, %v1915
    %v1942 = vmul.f32 %v1871, %v1915
    %v1943 = vmul.f32 %v1872, %v1915
    %v1944 = vmul.f32 %v1873, %v1915
    %v1945 = vmul.f32 %v1874, %v1915
    %v1946 = vmul.f32 %v1875, %v1915
    %v1947 = vmul.f32 %v1876, %v1915
    %v1948 = vmul.f32 %v1877, %v1915
    %v1949 = vmul.f32 %v1878, %v1915
    %v1950 = vmul.f32 %v1879, %v1915
    %v1951 = vmul.f32 %v1880, %v1915
    %v1952 = vmul.f32 %v1881, %v1915
    %v1953 = vmul.f32 %v1882, %v1915
    %v1954 = vmul.f32 %v1883, %v1915
    %v1955 = vmul.f32 %v1884, %v1915
    %v1956 = vmul.f32 %v1885, %v1915
    %v1957 = vmul.f32 %v1886, %v1915
    %v1958 = vmul.f32 %v1887, %v1915
    %v1959 = vmul.f32 %v1888, %v1915
    %v1960 = vmul.f32 %v1889, %v1915
    %v1961 = vmul.f32 %v1890, %v1915
    %v1962 = vmul.f32 %v1891, %v1915
    %v1963 = vmul.f32 %v1892, %v1915
    %v1964 = vmul.f32 %v1893, %v1915
    %v1965 = vmul.f32 %v1894, %v1915
    %v1966 = vmul.f32 %v1895, %v1915
    %v1967 = vmul.f32 %v1896, %v1915
    %v1968 = vmul.f32 %v1897, %v1915
    %v1969 = vmul.f32 %v1898, %v1915
    %v1970 = vmul.f32 %v1899, %v1915
    %v1971 = vmul.f32 %v1900, %v1915
    %v1972 = vmul.f32 %v1901, %v1915
    %v1973 = vmul.f32 %v1902, %v1915
    %v1974 = vmul.f32 %v1903, %v1915
    %v1975 = vmul.f32 %v1904, %v1915
    %v1976 = vmul.f32 %v1905, %v1915
    %v1977 = vmul.f32 %v1906, %v1915
    %v1978 = vmul.f32 %v1907, %v1915
    %v1979 = vmul.f32 %v1908, %v1915
    %v1980 = vmul.f32 %v1909, %v1915
    %v1981 = vld [vmem:[%s3] sm:$0x1]
    %v1983 = vlaneseq
    %v1984 = vshrl.u32 %v1983, 7
    %v1985 = vsub.s32 0, %v1984
    %v1986 = vrot.slane %v1981, %v1985
    %v1988 = vadd.f32 %v1917, %v1986
    %v1989 = vadd.f32 %v1918, %v1986
    %v1990 = vadd.f32 %v1919, %v1986
    %v1991 = vadd.f32 %v1920, %v1986
    %v1992 = vadd.f32 %v1921, %v1986
    %v1993 = vadd.f32 %v1922, %v1986
    %v1994 = vadd.f32 %v1923, %v1986
    %v1995 = vadd.f32 %v1924, %v1986
    %v1996 = vadd.f32 %v1925, %v1986
    %v1997 = vadd.f32 %v1926, %v1986
    %v1998 = vadd.f32 %v1927, %v1986
    %v1999 = vadd.f32 %v1928, %v1986
    %v2000 = vadd.f32 %v1929, %v1986
    %v2001 = vadd.f32 %v1930, %v1986
    %v2002 = vadd.f32 %v1931, %v1986
    %v2003 = vadd.f32 %v1932, %v1986
    %v2004 = vadd.f32 %v1933, %v1986
    %v2005 = vadd.f32 %v1934, %v1986
    %v2006 = vadd.f32 %v1935, %v1986
    %v2007 = vadd.f32 %v1936, %v1986
    %v2008 = vadd.f32 %v1937, %v1986
    %v2009 = vadd.f32 %v1938, %v1986
    %v2010 = vadd.f32 %v1939, %v1986
    %v2011 = vadd.f32 %v1940, %v1986
    %v2012 = vadd.f32 %v1941, %v1986
    %v2013 = vadd.f32 %v1942, %v1986
    %v2014 = vadd.f32 %v1943, %v1986
    %v2015 = vadd.f32 %v1944, %v1986
    %v2016 = vadd.f32 %v1945, %v1986
    %v2017 = vadd.f32 %v1946, %v1986
    %v2018 = vadd.f32 %v1947, %v1986
    %v2019 = vadd.f32 %v1948, %v1986
    %v2020 = vadd.f32 %v1949, %v1986
    %v2021 = vadd.f32 %v1950, %v1986
    %v2022 = vadd.f32 %v1951, %v1986
    %v2023 = vadd.f32 %v1952, %v1986
    %v2024 = vadd.f32 %v1953, %v1986
    %v2025 = vadd.f32 %v1954, %v1986
    %v2026 = vadd.f32 %v1955, %v1986
    %v2027 = vadd.f32 %v1956, %v1986
    %v2028 = vadd.f32 %v1957, %v1986
    %v2029 = vadd.f32 %v1958, %v1986
    %v2030 = vadd.f32 %v1959, %v1986
    %v2031 = vadd.f32 %v1960, %v1986
    %v2032 = vadd.f32 %v1961, %v1986
    %v2033 = vadd.f32 %v1962, %v1986
    %v2034 = vadd.f32 %v1963, %v1986
    %v2035 = vadd.f32 %v1964, %v1986
    %v2036 = vadd.f32 %v1965, %v1986
    %v2037 = vadd.f32 %v1966, %v1986
    %v2038 = vadd.f32 %v1967, %v1986
    %v2039 = vadd.f32 %v1968, %v1986
    %v2040 = vadd.f32 %v1969, %v1986
    %v2041 = vadd.f32 %v1970, %v1986
    %v2042 = vadd.f32 %v1971, %v1986
    %v2043 = vadd.f32 %v1972, %v1986
    %v2044 = vadd.f32 %v1973, %v1986
    %v2045 = vadd.f32 %v1974, %v1986
    %v2046 = vadd.f32 %v1975, %v1986
    %v2047 = vadd.f32 %v1976, %v1986
    %v2048 = vadd.f32 %v1977, %v1986
    %v2049 = vadd.f32 %v1978, %v1986
    %v2050 = vadd.f32 %v1979, %v1986
    %v2051 = vadd.f32 %v1980, %v1986
    %v2052 = vmax.f32 %v1988, 0.0
    %v2053 = vmax.f32 %v1989, 0.0
    %v2054 = vmax.f32 %v1990, 0.0
    %v2055 = vmax.f32 %v1991, 0.0
    %v2056 = vmax.f32 %v1992, 0.0
    %v2057 = vmax.f32 %v1993, 0.0
    %v2058 = vmax.f32 %v1994, 0.0
    %v2059 = vmax.f32 %v1995, 0.0
    %v2060 = vmax.f32 %v1996, 0.0
    %v2061 = vmax.f32 %v1997, 0.0
    %v2062 = vmax.f32 %v1998, 0.0
    %v2063 = vmax.f32 %v1999, 0.0
    %v2064 = vmax.f32 %v2000, 0.0
    %v2065 = vmax.f32 %v2001, 0.0
    %v2066 = vmax.f32 %v2002, 0.0
    %v2067 = vmax.f32 %v2003, 0.0
    %v2068 = vmax.f32 %v2004, 0.0
    %v2069 = vmax.f32 %v2005, 0.0
    %v2070 = vmax.f32 %v2006, 0.0
    %v2071 = vmax.f32 %v2007, 0.0
    %v2072 = vmax.f32 %v2008, 0.0
    %v2073 = vmax.f32 %v2009, 0.0
    %v2074 = vmax.f32 %v2010, 0.0
    %v2075 = vmax.f32 %v2011, 0.0
    %v2076 = vmax.f32 %v2012, 0.0
    %v2077 = vmax.f32 %v2013, 0.0
    %v2078 = vmax.f32 %v2014, 0.0
    %v2079 = vmax.f32 %v2015, 0.0
    %v2080 = vmax.f32 %v2016, 0.0
    %v2081 = vmax.f32 %v2017, 0.0
    %v2082 = vmax.f32 %v2018, 0.0
    %v2083 = vmax.f32 %v2019, 0.0
    %v2084 = vmax.f32 %v2020, 0.0
    %v2085 = vmax.f32 %v2021, 0.0
    %v2086 = vmax.f32 %v2022, 0.0
    %v2087 = vmax.f32 %v2023, 0.0
    %v2088 = vmax.f32 %v2024, 0.0
    %v2089 = vmax.f32 %v2025, 0.0
    %v2090 = vmax.f32 %v2026, 0.0
    %v2091 = vmax.f32 %v2027, 0.0
    %v2092 = vmax.f32 %v2028, 0.0
    %v2093 = vmax.f32 %v2029, 0.0
    %v2094 = vmax.f32 %v2030, 0.0
    %v2095 = vmax.f32 %v2031, 0.0
    %v2096 = vmax.f32 %v2032, 0.0
    %v2097 = vmax.f32 %v2033, 0.0
    %v2098 = vmax.f32 %v2034, 0.0
    %v2099 = vmax.f32 %v2035, 0.0
    %v2100 = vmax.f32 %v2036, 0.0
    %v2101 = vmax.f32 %v2037, 0.0
    %v2102 = vmax.f32 %v2038, 0.0
    %v2103 = vmax.f32 %v2039, 0.0
    %v2104 = vmax.f32 %v2040, 0.0
    %v2105 = vmax.f32 %v2041, 0.0
    %v2106 = vmax.f32 %v2042, 0.0
    %v2107 = vmax.f32 %v2043, 0.0
    %v2108 = vmax.f32 %v2044, 0.0
    %v2109 = vmax.f32 %v2045, 0.0
    %v2110 = vmax.f32 %v2046, 0.0
    %v2111 = vmax.f32 %v2047, 0.0
    %v2112 = vmax.f32 %v2048, 0.0
    %v2113 = vmax.f32 %v2049, 0.0
    %v2114 = vmax.f32 %v2050, 0.0
    %v2115 = vmax.f32 %v2051, 0.0
    %2116 = vst.msk [vmem:[#allocation2] sm:$0xff] %vm1446, %v2052
    %2117 = vst.msk [vmem:[#allocation2 + $0x8] sm:$0xff] %vm1446, %v2053
    %2118 = vst.msk [vmem:[#allocation2 + $0x10] sm:$0xff] %vm1446, %v2054
    %2119 = vst.msk [vmem:[#allocation2 + $0x18] sm:$0xff] %vm1446, %v2055
    %2120 = vst.msk [vmem:[#allocation2 + $0x20] sm:$0xff] %vm1446, %v2056
    %2121 = vst.msk [vmem:[#allocation2 + $0x28] sm:$0xff] %vm1446, %v2057
    %2122 = vst.msk [vmem:[#allocation2 + $0x30] sm:$0xff] %vm1446, %v2058
    %2123 = vst.msk [vmem:[#allocation2 + $0x38] sm:$0xff] %vm1446, %v2059
    %2124 = vst.msk [vmem:[#allocation2 + $0x40] sm:$0xff] %vm1446, %v2060
    %2125 = vst.msk [vmem:[#allocation2 + $0x48] sm:$0xff] %vm1446, %v2061
    %2126 = vst.msk [vmem:[#allocation2 + $0x50] sm:$0xff] %vm1446, %v2062
    %2127 = vst.msk [vmem:[#allocation2 + $0x58] sm:$0xff] %vm1446, %v2063
    %2128 = vst.msk [vmem:[#allocation2 + $0x60] sm:$0xff] %vm1446, %v2064
    %2129 = vst.msk [vmem:[#allocation2 + $0x68] sm:$0xff] %vm1446, %v2065
    %2130 = vst.msk [vmem:[#allocation2 + $0x70] sm:$0xff] %vm1446, %v2066
    %2131 = vst.msk [vmem:[#allocation2 + $0x78] sm:$0xff] %vm1446, %v2067
    %2132 = vst.msk [vmem:[#allocation2 + $0x80] sm:$0xff] %vm1446, %v2068
    %2133 = vst.msk [vmem:[#allocation2 + $0x88] sm:$0xff] %vm1446, %v2069
    %2134 = vst.msk [vmem:[#allocation2 + $0x90] sm:$0xff] %vm1446, %v2070
    %2135 = vst.msk [vmem:[#allocation2 + $0x98] sm:$0xff] %vm1446, %v2071
    %2136 = vst.msk [vmem:[#allocation2 + $0xa0] sm:$0xff] %vm1446, %v2072
    %2137 = vst.msk [vmem:[#allocation2 + $0xa8] sm:$0xff] %vm1446, %v2073
    %2138 = vst.msk [vmem:[#allocation2 + $0xb0] sm:$0xff] %vm1446, %v2074
    %2139 = vst.msk [vmem:[#allocation2 + $0xb8] sm:$0xff] %vm1446, %v2075
    %2140 = vst.msk [vmem:[#allocation2 + $0xc0] sm:$0xff] %vm1446, %v2076
    %2141 = vst.msk [vmem:[#allocation2 + $0xc8] sm:$0xff] %vm1446, %v2077
    %2142 = vst.msk [vmem:[#allocation2 + $0xd0] sm:$0xff] %vm1446, %v2078
    %2143 = vst.msk [vmem:[#allocation2 + $0xd8] sm:$0xff] %vm1446, %v2079
    %2144 = vst.msk [vmem:[#allocation2 + $0xe0] sm:$0xff] %vm1446, %v2080
    %2145 = vst.msk [vmem:[#allocation2 + $0xe8] sm:$0xff] %vm1446, %v2081
    %2146 = vst.msk [vmem:[#allocation2 + $0xf0] sm:$0xff] %vm1446, %v2082
    %2147 = vst.msk [vmem:[#allocation2 + $0xf8] sm:$0xff] %vm1446, %v2083
    %2148 = vst.msk [vmem:[#allocation2 + $0x100] sm:$0xff] %vm1446, %v2084
    %2149 = vst.msk [vmem:[#allocation2 + $0x108] sm:$0xff] %vm1446, %v2085
    %2150 = vst.msk [vmem:[#allocation2 + $0x110] sm:$0xff] %vm1446, %v2086
    %2151 = vst.msk [vmem:[#allocation2 + $0x118] sm:$0xff] %vm1446, %v2087
    %2152 = vst.msk [vmem:[#allocation2 + $0x120] sm:$0xff] %vm1446, %v2088
    %2153 = vst.msk [vmem:[#allocation2 + $0x128] sm:$0xff] %vm1446, %v2089
    %2154 = vst.msk [vmem:[#allocation2 + $0x130] sm:$0xff] %vm1446, %v2090
    %2155 = vst.msk [vmem:[#allocation2 + $0x138] sm:$0xff] %vm1446, %v2091
    %2156 = vst.msk [vmem:[#allocation2 + $0x140] sm:$0xff] %vm1446, %v2092
    %2157 = vst.msk [vmem:[#allocation2 + $0x148] sm:$0xff] %vm1446, %v2093
    %2158 = vst.msk [vmem:[#allocation2 + $0x150] sm:$0xff] %vm1446, %v2094
    %2159 = vst.msk [vmem:[#allocation2 + $0x158] sm:$0xff] %vm1446, %v2095
    %2160 = vst.msk [vmem:[#allocation2 + $0x160] sm:$0xff] %vm1446, %v2096
    %2161 = vst.msk [vmem:[#allocation2 + $0x168] sm:$0xff] %vm1446, %v2097
    %2162 = vst.msk [vmem:[#allocation2 + $0x170] sm:$0xff] %vm1446, %v2098
    %2163 = vst.msk [vmem:[#allocation2 + $0x178] sm:$0xff] %vm1446, %v2099
    %2164 = vst.msk [vmem:[#allocation2 + $0x180] sm:$0xff] %vm1446, %v2100
    %2165 = vst.msk [vmem:[#allocation2 + $0x188] sm:$0xff] %vm1446, %v2101
    %2166 = vst.msk [vmem:[#allocation2 + $0x190] sm:$0xff] %vm1446, %v2102
    %2167 = vst.msk [vmem:[#allocation2 + $0x198] sm:$0xff] %vm1446, %v2103
    %2168 = vst.msk [vmem:[#allocation2 + $0x1a0] sm:$0xff] %vm1446, %v2104
    %2169 = vst.msk [vmem:[#allocation2 + $0x1a8] sm:$0xff] %vm1446, %v2105
    %2170 = vst.msk [vmem:[#allocation2 + $0x1b0] sm:$0xff] %vm1446, %v2106
    %2171 = vst.msk [vmem:[#allocation2 + $0x1b8] sm:$0xff] %vm1446, %v2107
    %2172 = vst.msk [vmem:[#allocation2 + $0x1c0] sm:$0xff] %vm1446, %v2108
    %2173 = vst.msk [vmem:[#allocation2 + $0x1c8] sm:$0xff] %vm1446, %v2109
    %2174 = vst.msk [vmem:[#allocation2 + $0x1d0] sm:$0xff] %vm1446, %v2110
    %2175 = vst.msk [vmem:[#allocation2 + $0x1d8] sm:$0xff] %vm1446, %v2111
    %2176 = vst.msk [vmem:[#allocation2 + $0x1e0] sm:$0xff] %vm1446, %v2112
    %2177 = vst.msk [vmem:[#allocation2 + $0x1e8] sm:$0xff] %vm1446, %v2113
    %2178 = vst.msk [vmem:[#allocation2 + $0x1f0] sm:$0xff] %vm1446, %v2114
    %2179 = vst.msk [vmem:[#allocation2 + $0x1f8] sm:$0xff] %vm1446, %v2115
    // Predicated region
    $region18: #{double_conv_forward.3} parent=1 // pred_check
      _
    $region19: #{double_conv_forward.3} parent=1 // pred_check_branch
      %2181 = sbr.rel (0) target = $region21
    $region20: #{double_conv_forward.3} parent=1 // pred_region
      %s2183 = ssub.s32 8192, 8192
      %2184 = vsyncadd [#allocation3], %s2183
      %s2185 = sshll.u32 [#allocation2], 4
      %s2186 = int_to_ptr.vmem [resolvable:$true] %s2185
      %2191 = dma.vmem_to_hbm [thread:$0]  %s2186, 8192, %s4, [#allocation3], 128, 128, 8
    $region21: #{double_conv_forward.3} parent=1 // pred_fallthru
      _
    // Predicated region
    $region22: #{double_conv_forward.3} parent=1 // pred_check
      _
    $region23: #{double_conv_forward.3} parent=1 // pred_check_branch
      %2193 = sbr.rel (0) target = $region25
    $region24: #{double_conv_forward.3} parent=1 // pred_region
      %2194 = dma.done [#allocation3], 8192
    $region25: #{double_conv_forward.3} parent=1 // pred_fallthru
      _
    %2195 = vsyncpa [#allocation3], 1

</llo_original>
